<compile_context>
chip_gen: v7x
topology: tpu7x:2x2x1
jax: 0.10.0
libtpu: 0.0.40
codegen_flags: <defaults>
</compile_context>

<pallas_src>
import jax
import jax.numpy as jnp
from jax.experimental import pallas as pl
from jax.experimental.pallas import tpu as pltpu


# Channel widths fixed by the module definition.
_C_1X1 = 64   # branch1x1
_C_3X3 = 64   # branch3x3 residual tower
_C_DBL = 48   # each half of branch3x3dbl
_BN_EPS = 1e-3
_N_STEM = _C_1X1 + _C_3X3 + _C_DBL   # 176 = bias/ReLU'd part of the fused stem


# ----------------------------------------------------------------------------
# Fused Pallas kernel (one batch element per grid step)
# ----------------------------------------------------------------------------
def _make_inception_aplus_kernel(H, W, Cp):
    HW = H * W
    n_stem = _N_STEM

    def taps_w(y):
        """(H,W,C) -> (H,W,3C): [y[:,w-1], y[:,w], y[:,w+1]], zero borders."""
        c = y.shape[-1]
        zc = jnp.zeros((H, 1, c), y.dtype)
        left = jnp.concatenate([zc, y[:, :W - 1, :]], axis=1)
        right = jnp.concatenate([y[:, 1:, :], zc], axis=1)
        return jnp.concatenate([left, y, right], axis=-1)

    def taps_h(y):
        """(H,W,C) -> (H,W,3C): [y[h-1], y[h], y[h+1]], zero borders."""
        c = y.shape[-1]
        zr = jnp.zeros((1, W, c), y.dtype)
        up = jnp.concatenate([zr, y[:H - 1]], axis=0)
        down = jnp.concatenate([y[1:], zr], axis=0)
        return jnp.concatenate([up, y, down], axis=-1)

    def conv_spatial(y, w, b, taps_fn):
        """'same' (1x3)/(3x1) conv with BN folded into w, + bias + ReLU.

        The 3 taps are stacked along the contraction so the whole conv is one
        MXU dot: (HW, 3C) x (3C, Cout), f32 accumulation.
        """
        cout = w.shape[-1]
        k = taps_fn(y).reshape(HW, -1).astype(jnp.bfloat16)
        out = jnp.dot(k, w, preferred_element_type=jnp.float32)
        return jnp.maximum(out + b, 0.0).reshape(H, W, cout)

    def pool3x3_sum(y):
        """3x3/s1/zero-pad-1 SUM pool (separable); the 1/9 of the avg pool is
        folded into the preceding 1x1 conv weight (count_include_pad=True)."""
        c = y.shape[-1]
        zc = jnp.zeros((H, 1, c), y.dtype)
        row = (jnp.concatenate([zc, y[:, :W - 1, :]], axis=1) + y
               + jnp.concatenate([y[:, 1:, :], zc], axis=1))
        zr = jnp.zeros((1, W, c), y.dtype)
        return (jnp.concatenate([zr, row[:H - 1]], axis=0) + row
                + jnp.concatenate([row[1:], zr], axis=0))

    def kernel(x_ref, w_stem, b_stem, w_b3, b_b3,
               w_d13, b_d13, w_d31, b_d31, out_ref):
        x = x_ref[0]                                    # (H, W, Cin) f32
        xb = x.reshape(HW, -1).astype(jnp.bfloat16)     # cast once

        # Fused 1x1 stems: [branch1x1 | branch3x3_1 | branch3x3dbl_1 | pool/9]
        stem = jnp.dot(xb, w_stem[...], preferred_element_type=jnp.float32)
        bias = b_stem[...]                              # (1, 176 + Cp)
        act = jnp.maximum(stem[:, :n_stem] + bias[:, :n_stem], 0.0)
        br1 = act[:, 0:_C_1X1].reshape(H, W, _C_1X1)
        b3 = act[:, _C_1X1:_C_1X1 + _C_3X3].reshape(H, W, _C_3X3)
        dstem = act[:, _C_1X1 + _C_3X3:n_stem].reshape(H, W, _C_DBL)
        # pool branch: 1x1 conv (linear, /9 folded) BEFORE pooling; no bias yet
        pconv = stem[:, n_stem:].reshape(H, W, Cp)

        # --- branch3x3: two residual stages of (1x3 -> 3x1) -----------------
        res = b3
        b3 = conv_spatial(b3, w_b3[0], b_b3[0], taps_w)
        b3 = conv_spatial(b3, w_b3[1], b_b3[1], taps_h)
        b3 = jnp.maximum(b3 + res, 0.0)
        res = b3
        b3 = conv_spatial(b3, w_b3[2], b_b3[2], taps_w)
        b3 = conv_spatial(b3, w_b3[3], b_b3[3], taps_h)
        b3 = jnp.maximum(b3 + res, 0.0)

        # --- branch3x3dbl: the two 48-ch towers merged to one 96-wide pass --
        dmid = conv_spatial(dstem, w_d13[...], b_d13[...], taps_w)  # (H,W,96)
        dbl = conv_spatial(dmid, w_d31[...], b_d31[...], taps_h)    # (H,W,96)

        # --- branch_pool: pool the Cp already-1x1-convolved channels --------
        bpool = jnp.maximum(
            pool3x3_sum(pconv) + bias[:, n_stem:].reshape(1, 1, Cp), 0.0)

        # Single lane-dense store of the channel-concatenated result.
        out = jnp.concatenate([br1, b3, dbl, bpool], axis=-1)
        out_ref[...] = out.reshape(1, H, W, out.shape[-1])

    return kernel


# ----------------------------------------------------------------------------
# Wrapper
# ----------------------------------------------------------------------------
@jax.jit
def inception_aplus_forward(packed, x_nchw):
    x = jnp.transpose(x_nchw, (0, 2, 3, 1)).astype(jnp.float32)  # NCHW -> NHWC
    N, H, W, Cin = x.shape
    Cp = packed["w_stem"].shape[-1] - _N_STEM
    c_out = _C_1X1 + _C_3X3 + 2 * _C_DBL + Cp

    order = ["w_stem", "b_stem", "w_b3", "b_b3",
             "w_d13", "b_d13", "w_d31", "b_d31"]
    args = [x] + [packed[k] for k in order]

    in_specs = [pl.BlockSpec((1, H, W, Cin), lambda n: (n, 0, 0, 0))]
    for k in order:
        a = packed[k]
        in_specs.append(pl.BlockSpec(a.shape, lambda n, nd=a.ndim: (0,) * nd))

    out = pl.pallas_call(
        _make_inception_aplus_kernel(H, W, Cp),
        out_shape=jax.ShapeDtypeStruct((N, H, W, c_out), jnp.float32),
        grid=(N,),
        in_specs=in_specs,
        out_specs=pl.BlockSpec((1, H, W, c_out), lambda n: (n, 0, 0, 0)),
        compiler_params=pltpu.CompilerParams(
            dimension_semantics=("parallel",)),
    )(*args)

    # NHWC -> NCHW only to match the PyTorch module's output layout.
    return jnp.transpose(out, (0, 3, 1, 2))


# ----------------------------------------------------------------------------
# Parameter construction (deterministic, synthetic) + packing with BN folding
# ----------------------------------------------------------------------------
def _rand_bn_conv(key, in_ch, out_ch, kernel_size):
    if isinstance(kernel_size, int):
        kh = kw = kernel_size
    else:
        kh, kw = kernel_size
    k_w, k_g, k_b, k_m, k_v = jax.random.split(key, 5)
    return {
        "w_oihw": 0.05 * jax.random.normal(k_w, (out_ch, in_ch, kh, kw),
                                           jnp.float32),
        "gamma": jax.random.uniform(k_g, (out_ch,), jnp.float32, 0.5, 1.5),
        "beta": 0.1 * jax.random.normal(k_b, (out_ch,), jnp.float32),
        "mean": 0.1 * jax.random.normal(k_m, (out_ch,), jnp.float32),
        "var": jax.random.uniform(k_v, (out_ch,), jnp.float32, 0.5, 1.5),
    }


def make_raw_params(key, in_channels, pool_features):
    specs = [
        ("branch1x1", in_channels, _C_1X1, 1),
        ("branch3x3_1", in_channels, _C_3X3, 1),
        ("branch1x3_1", _C_3X3, _C_3X3, (1, 3)),
        ("branch3x1_1", _C_3X3, _C_3X3, (3, 1)),
        ("branch1x3_2", _C_3X3, _C_3X3, (1, 3)),
        ("branch3x1_2", _C_3X3, _C_3X3, (3, 1)),
        ("branch3x3dbl_1", in_channels, _C_DBL, 1),
        ("branch3x3_2a", _C_DBL, _C_DBL, (1, 3)),
        ("branch3x3_2b", _C_DBL, _C_DBL, (3, 1)),
        ("branch3x3_3a", _C_DBL, _C_DBL, (1, 3)),
        ("branch3x3_3b", _C_DBL, _C_DBL, (3, 1)),
        ("branch_pool", in_channels, pool_features, 1),
    ]
    # branch3x3dbl_3 (96->96, 3x3) is defined in the module but unused in its
    # forward(), so no parameters are created for it.
    keys = jax.random.split(key, len(specs))
    return {name: _rand_bn_conv(k, ci, co, ks)
            for k, (name, ci, co, ks) in zip(keys, specs)}


def _folded_taps(raw, extra_scale=1.0):
    """OIHW -> (KH*KW, Cin, Cout) with BN scale (and extra_scale) folded into
    the weight; returns (taps, bias) where bias = beta - mean*scale."""
    scale = raw["gamma"] / jnp.sqrt(raw["var"] + _BN_EPS)
    bias = raw["beta"] - raw["mean"] * scale
    w = jnp.transpose(raw["w_oihw"], (2, 3, 1, 0)) * (scale * extra_scale)
    kh, kw, ci, co = w.shape
    return w.reshape(kh * kw, ci, co), bias


def pack_params(raw):
    # Fused 1x1 stems: [branch1x1 | branch3x3_1 | branch3x3dbl_1 | pool1x1/9].
    w1, b1 = _folded_taps(raw["branch1x1"])
    w2, b2 = _folded_taps(raw["branch3x3_1"])
    w3, b3 = _folded_taps(raw["branch3x3dbl_1"])
    wp, bp = _folded_taps(raw["branch_pool"], extra_scale=1.0 / 9.0)
    w_stem = jnp.concatenate([w1[0], w2[0], w3[0], wp[0]], axis=-1)
    b_stem = jnp.concatenate([b1, b2, b3, bp]).reshape(1, -1)

    # branch3x3 residual tower: 4 spatial convs, taps stacked along K.
    ws, bs = [], []
    for name in ("branch1x3_1", "branch3x1_1", "branch1x3_2", "branch3x1_2"):
        t, b = _folded_taps(raw[name])               # (3, 64, 64)
        ws.append(t.reshape(3 * _C_3X3, _C_3X3))
        bs.append(b.reshape(1, _C_3X3))
    w_b3 = jnp.stack(ws)                             # (4, 192, 64)
    b_b3 = jnp.stack(bs)                             # (4, 1, 64)

    # Merged dbl towers: 1x3 stage concatenated along Cout -> (144, 96);
    # 3x1 stage block-diagonal so the two halves stay independent -> (288, 96).
    t2a, b2a = _folded_taps(raw["branch3x3_2a"])
    t3a, b3a = _folded_taps(raw["branch3x3_3a"])
    w_d13 = jnp.concatenate([t2a, t3a], axis=-1).reshape(3 * _C_DBL, 2 * _C_DBL)
    b_d13 = jnp.concatenate([b2a, b3a]).reshape(1, 2 * _C_DBL)

    t2b, b2b = _folded_taps(raw["branch3x3_2b"])
    t3b, b3b = _folded_taps(raw["branch3x3_3b"])
    big = jnp.zeros((3, 2 * _C_DBL, 2 * _C_DBL), jnp.float32)
    big = big.at[:, :_C_DBL, :_C_DBL].set(t2b)
    big = big.at[:, _C_DBL:, _C_DBL:].set(t3b)
    w_d31 = big.reshape(3 * 2 * _C_DBL, 2 * _C_DBL)
    b_d31 = jnp.concatenate([b2b, b3b]).reshape(1, 2 * _C_DBL)

    bf = lambda a: a.astype(jnp.bfloat16)
    f32 = lambda a: a.astype(jnp.float32)
    return {"w_stem": bf(w_stem), "b_stem": f32(b_stem),
            "w_b3": bf(w_b3), "b_b3": f32(b_b3),
            "w_d13": bf(w_d13), "b_d13": f32(b_d13),
            "w_d31": bf(w_d31), "b_d31": f32(b_d31)}


# ----------------------------------------------------------------------------
# Plain-XLA reference of the PyTorch forward (for self-check)
# ----------------------------------------------------------------------------
def _ref_basic_conv(x_nhwc, raw, padding):
    w_hwio = jnp.transpose(raw["w_oihw"], (2, 3, 1, 0))
    y = jax.lax.conv_general_dilated(
        x_nhwc, w_hwio, window_strides=(1, 1),
        padding=((padding[0], padding[0]), (padding[1], padding[1])),
        dimension_numbers=("NHWC", "HWIO", "NHWC"))
    scale = raw["gamma"] / jnp.sqrt(raw["var"] + _BN_EPS)
    y = (y - raw["mean"]) * scale + raw["beta"]
    return jnp.maximum(y, 0.0)


@jax.jit
def inception_aplus_reference(raw, x_nchw):
    x = jnp.transpose(x_nchw, (0, 2, 3, 1)).astype(jnp.float32)
    br1 = _ref_basic_conv(x, raw["branch1x1"], (0, 0))

    b3 = _ref_basic_conv(x, raw["branch3x3_1"], (0, 0))
    r1 = b3
    b3 = _ref_basic_conv(b3, raw["branch1x3_1"], (0, 1))
    b3 = _ref_basic_conv(b3, raw["branch3x1_1"], (1, 0))
    b3 = jnp.maximum(b3 + r1, 0.0)
    r2 = b3
    b3 = _ref_basic_conv(b3, raw["branch1x3_2"], (0, 1))
    b3 = _ref_basic_conv(b3, raw["branch3x1_2"], (1, 0))
    b3 = jnp.maximum(b3 + r2, 0.0)

    d = _ref_basic_conv(x, raw["branch3x3dbl_1"], (0, 0))
    d1 = _ref_basic_conv(_ref_basic_conv(d, raw["branch3x3_2a"], (0, 1)),
                         raw["branch3x3_2b"], (1, 0))
    d2 = _ref_basic_conv(_ref_basic_conv(d, raw["branch3x3_3a"], (0, 1)),
                         raw["branch3x3_3b"], (1, 0))

    pooled = jax.lax.reduce_window(
        x, 0.0, jax.lax.add, (1, 3, 3, 1), (1, 1, 1, 1),
        ((0, 0), (1, 1), (1, 1), (0, 0))) / 9.0
    bp = _ref_basic_conv(pooled, raw["branch_pool"], (0, 0))

    out = jnp.concatenate([br1, b3, d1, d2, bp], axis=-1)
    return jnp.transpose(out, (0, 3, 1, 2))


# ----------------------------------------------------------------------------
if __name__ == "__main__":
    key = jax.random.PRNGKey(0)
    k_x, k_p = jax.random.split(key)

    N, C_in, H, W = 2, 4, 16, 16
    pool_features = 32

    x = jax.random.normal(k_x, (N, C_in, H, W), jnp.float32)  # NCHW input
    raw_params = make_raw_params(k_p, C_in, pool_features)
    packed_params = pack_params(raw_params)

    out = jax.block_until_ready(inception_aplus_forward(packed_params, x))

    expected_shape = (N, _C_1X1 + _C_3X3 + 2 * _C_DBL + pool_features, H, W)
    assert out.shape == expected_shape, (out.shape, expected_shape)
    assert bool(jnp.all(jnp.isfinite(out)))
    assert bool(jnp.all(out >= 0.0))  # every concatenated branch ends in ReLU

    # Numerical cross-check against the plain-XLA reference of the PyTorch
    # forward (tolerance covers the bf16 matmul operands used in the kernel).
    ref = inception_aplus_reference(raw_params, x)
    ok = jnp.all(jnp.abs(out - ref) <= 2e-2 + 5e-2 * jnp.abs(ref))
    assert bool(ok), float(jnp.max(jnp.abs(out - ref)))

    print("KERNEL_OK")
</pallas_src>

<mosaic_0001>
module attributes {stable_mosaic.version = 11 : i64} {
  func.func @kernel(%arg0: i32, %arg1: memref<1x16x16x4xf32, #tpu.memory_space<vmem>>, %arg2: memref<4x208xbf16, #tpu.memory_space<vmem>>, %arg3: memref<1x208xf32, #tpu.memory_space<vmem>>, %arg4: memref<4x192x64xbf16, #tpu.memory_space<vmem>>, %arg5: memref<4x1x64xf32, #tpu.memory_space<vmem>>, %arg6: memref<144x96xbf16, #tpu.memory_space<vmem>>, %arg7: memref<1x96xf32, #tpu.memory_space<vmem>>, %arg8: memref<288x96xbf16, #tpu.memory_space<vmem>>, %arg9: memref<1x96xf32, #tpu.memory_space<vmem>>, %arg10: memref<1x16x16x256xf32, #tpu.memory_space<vmem>>) attributes {dimension_semantics = [#tpu.dimension_semantics<parallel>], iteration_bounds = array<i64: 2>, scalar_prefetch = 0 : i64, scratch_operands = 0 : i64, tpu.core_type = #tpu.core_type<tc>, window_params = [{transform_indices = @transform_0, window_bounds = array<i64: 1, 16, 16, 4>}, {pipeline_mode = #tpu.pipeline_mode<synchronous>, transform_indices = @transform_1, window_bounds = array<i64: 4, 208>}, {pipeline_mode = #tpu.pipeline_mode<synchronous>, transform_indices = @transform_2, window_bounds = array<i64: 1, 208>}, {pipeline_mode = #tpu.pipeline_mode<synchronous>, transform_indices = @transform_3, window_bounds = array<i64: 4, 192, 64>}, {pipeline_mode = #tpu.pipeline_mode<synchronous>, transform_indices = @transform_4, window_bounds = array<i64: 4, 1, 64>}, {pipeline_mode = #tpu.pipeline_mode<synchronous>, transform_indices = @transform_5, window_bounds = array<i64: 144, 96>}, {pipeline_mode = #tpu.pipeline_mode<synchronous>, transform_indices = @transform_6, window_bounds = array<i64: 1, 96>}, {pipeline_mode = #tpu.pipeline_mode<synchronous>, transform_indices = @transform_7, window_bounds = array<i64: 288, 96>}, {pipeline_mode = #tpu.pipeline_mode<synchronous>, transform_indices = @transform_8, window_bounds = array<i64: 1, 96>}, {transform_indices = @transform_9, window_bounds = array<i64: 1, 16, 16, 256>}]} {
    %c0 = arith.constant 0 : index
    %c0_0 = arith.constant 0 : index
    %c0_1 = arith.constant 0 : index
    %c0_2 = arith.constant 0 : index
    %0 = vector.load %arg1[%c0, %c0_0, %c0_1, %c0_2] : memref<1x16x16x4xf32, #tpu.memory_space<vmem>>, vector<1x16x16x4xf32>
    %1 = vector.shape_cast %0 : vector<1x16x16x4xf32> to vector<16x16x4xf32>
    %2 = vector.shape_cast %1 : vector<16x16x4xf32> to vector<256x4xf32>
    %3 = arith.truncf %2 : vector<256x4xf32> to vector<256x4xbf16>
    %c0_3 = arith.constant 0 : index
    %c0_4 = arith.constant 0 : index
    %4 = vector.load %arg2[%c0_3, %c0_4] : memref<4x208xbf16, #tpu.memory_space<vmem>>, vector<4x208xbf16>
    %cst = arith.constant dense<0.000000e+00> : vector<256x208xf32>
    %5 = tpu.matmul %3, %4, %cst {dimension_numbers = #tpu.dot_dimension_numbers<[1], [0], [0], [1], [0, 0, 1, 1], [], []>} : vector<256x4xbf16>, vector<4x208xbf16>, vector<256x208xf32> -> vector<256x208xf32>
    %c0_5 = arith.constant 0 : index
    %c0_6 = arith.constant 0 : index
    %6 = vector.load %arg3[%c0_5, %c0_6] : memref<1x208xf32, #tpu.memory_space<vmem>>, vector<1x208xf32>
    %7 = vector.extract_strided_slice %5 {offsets = [0, 0], sizes = [256, 176], strides = [1, 1]} : vector<256x208xf32> to vector<256x176xf32>
    %8 = vector.extract_strided_slice %6 {offsets = [0, 0], sizes = [1, 176], strides = [1, 1]} : vector<1x208xf32> to vector<1x176xf32>
    %9 = vector.broadcast %8 : vector<1x176xf32> to vector<256x176xf32>
    %10 = arith.addf %7, %9 : vector<256x176xf32>
    %cst_7 = arith.constant 0.000000e+00 : f32
    %11 = vector.broadcast %cst_7 : f32 to vector<256x176xf32>
    %12 = arith.maximumf %10, %11 : vector<256x176xf32>
    %13 = vector.extract_strided_slice %12 {offsets = [0, 0], sizes = [256, 64], strides = [1, 1]} : vector<256x176xf32> to vector<256x64xf32>
    %14 = vector.shape_cast %13 : vector<256x64xf32> to vector<16x16x64xf32>
    %15 = vector.extract_strided_slice %12 {offsets = [0, 64], sizes = [256, 64], strides = [1, 1]} : vector<256x176xf32> to vector<256x64xf32>
    %16 = vector.shape_cast %15 : vector<256x64xf32> to vector<16x16x64xf32>
    %17 = vector.extract_strided_slice %12 {offsets = [0, 128], sizes = [256, 48], strides = [1, 1]} : vector<256x176xf32> to vector<256x48xf32>
    %18 = vector.shape_cast %17 : vector<256x48xf32> to vector<16x16x48xf32>
    %19 = vector.extract_strided_slice %5 {offsets = [0, 176], sizes = [256, 32], strides = [1, 1]} : vector<256x208xf32> to vector<256x32xf32>
    %20 = vector.shape_cast %19 : vector<256x32xf32> to vector<16x16x32xf32>
    %c0_8 = arith.constant 0 : index
    %c0_9 = arith.constant 0 : index
    %c0_10 = arith.constant 0 : index
    %21 = vector.load %arg4[%c0_8, %c0_9, %c0_10] : memref<4x192x64xbf16, #tpu.memory_space<vmem>>, vector<1x192x64xbf16>
    %22 = vector.shape_cast %21 : vector<1x192x64xbf16> to vector<192x64xbf16>
    %c0_11 = arith.constant 0 : index
    %c0_12 = arith.constant 0 : index
    %c0_13 = arith.constant 0 : index
    %23 = vector.load %arg5[%c0_11, %c0_12, %c0_13] : memref<4x1x64xf32, #tpu.memory_space<vmem>>, vector<1x1x64xf32>
    %24 = vector.shape_cast %23 : vector<1x1x64xf32> to vector<1x64xf32>
    %cst_14 = arith.constant 0.000000e+00 : f32
    %25 = vector.broadcast %cst_14 : f32 to vector<16x1x64xf32>
    %26 = vector.extract_strided_slice %16 {offsets = [0, 0, 0], sizes = [16, 15, 64], strides = [1, 1, 1]} : vector<16x16x64xf32> to vector<16x15x64xf32>
    %27 = tpu.concatenate %25, %26 in 1 : vector<16x1x64xf32>, vector<16x15x64xf32> -> vector<16x16x64xf32>
    %28 = vector.extract_strided_slice %16 {offsets = [0, 1, 0], sizes = [16, 15, 64], strides = [1, 1, 1]} : vector<16x16x64xf32> to vector<16x15x64xf32>
    %29 = tpu.concatenate %28, %25 in 1 : vector<16x15x64xf32>, vector<16x1x64xf32> -> vector<16x16x64xf32>
    %30 = tpu.concatenate %27, %16, %29 in 2 : vector<16x16x64xf32>, vector<16x16x64xf32>, vector<16x16x64xf32> -> vector<16x16x192xf32>
    %31 = vector.shape_cast %30 : vector<16x16x192xf32> to vector<256x192xf32>
    %32 = arith.truncf %31 : vector<256x192xf32> to vector<256x192xbf16>
    %cst_15 = arith.constant dense<0.000000e+00> : vector<256x64xf32>
    %33 = tpu.matmul %32, %22, %cst_15 {dimension_numbers = #tpu.dot_dimension_numbers<[1], [0], [0], [1], [0, 0, 1, 1], [], []>} : vector<256x192xbf16>, vector<192x64xbf16>, vector<256x64xf32> -> vector<256x64xf32>
    %34 = vector.broadcast %24 : vector<1x64xf32> to vector<256x64xf32>
    %35 = arith.addf %33, %34 : vector<256x64xf32>
    %cst_16 = arith.constant 0.000000e+00 : f32
    %36 = vector.broadcast %cst_16 : f32 to vector<256x64xf32>
    %37 = arith.maximumf %35, %36 : vector<256x64xf32>
    %38 = vector.shape_cast %37 : vector<256x64xf32> to vector<16x16x64xf32>
    %c1 = arith.constant 1 : index
    %c0_17 = arith.constant 0 : index
    %c0_18 = arith.constant 0 : index
    %39 = vector.load %arg4[%c1, %c0_17, %c0_18] : memref<4x192x64xbf16, #tpu.memory_space<vmem>>, vector<1x192x64xbf16>
    %40 = vector.shape_cast %39 : vector<1x192x64xbf16> to vector<192x64xbf16>
    %c1_19 = arith.constant 1 : index
    %c0_20 = arith.constant 0 : index
    %c0_21 = arith.constant 0 : index
    %41 = vector.load %arg5[%c1_19, %c0_20, %c0_21] : memref<4x1x64xf32, #tpu.memory_space<vmem>>, vector<1x1x64xf32>
    %42 = vector.shape_cast %41 : vector<1x1x64xf32> to vector<1x64xf32>
    %cst_22 = arith.constant 0.000000e+00 : f32
    %43 = vector.broadcast %cst_22 : f32 to vector<1x16x64xf32>
    %44 = vector.extract_strided_slice %38 {offsets = [0, 0, 0], sizes = [15, 16, 64], strides = [1, 1, 1]} : vector<16x16x64xf32> to vector<15x16x64xf32>
    %45 = tpu.concatenate %43, %44 in 0 : vector<1x16x64xf32>, vector<15x16x64xf32> -> vector<16x16x64xf32>
    %46 = vector.extract_strided_slice %38 {offsets = [1, 0, 0], sizes = [15, 16, 64], strides = [1, 1, 1]} : vector<16x16x64xf32> to vector<15x16x64xf32>
    %47 = tpu.concatenate %46, %43 in 0 : vector<15x16x64xf32>, vector<1x16x64xf32> -> vector<16x16x64xf32>
    %48 = tpu.concatenate %45, %38, %47 in 2 : vector<16x16x64xf32>, vector<16x16x64xf32>, vector<16x16x64xf32> -> vector<16x16x192xf32>
    %49 = vector.shape_cast %48 : vector<16x16x192xf32> to vector<256x192xf32>
    %50 = arith.truncf %49 : vector<256x192xf32> to vector<256x192xbf16>
    %cst_23 = arith.constant dense<0.000000e+00> : vector<256x64xf32>
    %51 = tpu.matmul %50, %40, %cst_23 {dimension_numbers = #tpu.dot_dimension_numbers<[1], [0], [0], [1], [0, 0, 1, 1], [], []>} : vector<256x192xbf16>, vector<192x64xbf16>, vector<256x64xf32> -> vector<256x64xf32>
    %52 = vector.broadcast %42 : vector<1x64xf32> to vector<256x64xf32>
    %53 = arith.addf %51, %52 : vector<256x64xf32>
    %cst_24 = arith.constant 0.000000e+00 : f32
    %54 = vector.broadcast %cst_24 : f32 to vector<256x64xf32>
    %55 = arith.maximumf %53, %54 : vector<256x64xf32>
    %56 = vector.shape_cast %55 : vector<256x64xf32> to vector<16x16x64xf32>
    %57 = arith.addf %56, %16 : vector<16x16x64xf32>
    %cst_25 = arith.constant 0.000000e+00 : f32
    %58 = vector.broadcast %cst_25 : f32 to vector<16x16x64xf32>
    %59 = arith.maximumf %57, %58 : vector<16x16x64xf32>
    %c2 = arith.constant 2 : index
    %c0_26 = arith.constant 0 : index
    %c0_27 = arith.constant 0 : index
    %60 = vector.load %arg4[%c2, %c0_26, %c0_27] : memref<4x192x64xbf16, #tpu.memory_space<vmem>>, vector<1x192x64xbf16>
    %61 = vector.shape_cast %60 : vector<1x192x64xbf16> to vector<192x64xbf16>
    %c2_28 = arith.constant 2 : index
    %c0_29 = arith.constant 0 : index
    %c0_30 = arith.constant 0 : index
    %62 = vector.load %arg5[%c2_28, %c0_29, %c0_30] : memref<4x1x64xf32, #tpu.memory_space<vmem>>, vector<1x1x64xf32>
    %63 = vector.shape_cast %62 : vector<1x1x64xf32> to vector<1x64xf32>
    %cst_31 = arith.constant 0.000000e+00 : f32
    %64 = vector.broadcast %cst_31 : f32 to vector<16x1x64xf32>
    %65 = vector.extract_strided_slice %59 {offsets = [0, 0, 0], sizes = [16, 15, 64], strides = [1, 1, 1]} : vector<16x16x64xf32> to vector<16x15x64xf32>
    %66 = tpu.concatenate %64, %65 in 1 : vector<16x1x64xf32>, vector<16x15x64xf32> -> vector<16x16x64xf32>
    %67 = vector.extract_strided_slice %59 {offsets = [0, 1, 0], sizes = [16, 15, 64], strides = [1, 1, 1]} : vector<16x16x64xf32> to vector<16x15x64xf32>
    %68 = tpu.concatenate %67, %64 in 1 : vector<16x15x64xf32>, vector<16x1x64xf32> -> vector<16x16x64xf32>
    %69 = tpu.concatenate %66, %59, %68 in 2 : vector<16x16x64xf32>, vector<16x16x64xf32>, vector<16x16x64xf32> -> vector<16x16x192xf32>
    %70 = vector.shape_cast %69 : vector<16x16x192xf32> to vector<256x192xf32>
    %71 = arith.truncf %70 : vector<256x192xf32> to vector<256x192xbf16>
    %cst_32 = arith.constant dense<0.000000e+00> : vector<256x64xf32>
    %72 = tpu.matmul %71, %61, %cst_32 {dimension_numbers = #tpu.dot_dimension_numbers<[1], [0], [0], [1], [0, 0, 1, 1], [], []>} : vector<256x192xbf16>, vector<192x64xbf16>, vector<256x64xf32> -> vector<256x64xf32>
    %73 = vector.broadcast %63 : vector<1x64xf32> to vector<256x64xf32>
    %74 = arith.addf %72, %73 : vector<256x64xf32>
    %cst_33 = arith.constant 0.000000e+00 : f32
    %75 = vector.broadcast %cst_33 : f32 to vector<256x64xf32>
    %76 = arith.maximumf %74, %75 : vector<256x64xf32>
    %77 = vector.shape_cast %76 : vector<256x64xf32> to vector<16x16x64xf32>
    %c3 = arith.constant 3 : index
    %c0_34 = arith.constant 0 : index
    %c0_35 = arith.constant 0 : index
    %78 = vector.load %arg4[%c3, %c0_34, %c0_35] : memref<4x192x64xbf16, #tpu.memory_space<vmem>>, vector<1x192x64xbf16>
    %79 = vector.shape_cast %78 : vector<1x192x64xbf16> to vector<192x64xbf16>
    %c3_36 = arith.constant 3 : index
    %c0_37 = arith.constant 0 : index
    %c0_38 = arith.constant 0 : index
    %80 = vector.load %arg5[%c3_36, %c0_37, %c0_38] : memref<4x1x64xf32, #tpu.memory_space<vmem>>, vector<1x1x64xf32>
    %81 = vector.shape_cast %80 : vector<1x1x64xf32> to vector<1x64xf32>
    %cst_39 = arith.constant 0.000000e+00 : f32
    %82 = vector.broadcast %cst_39 : f32 to vector<1x16x64xf32>
    %83 = vector.extract_strided_slice %77 {offsets = [0, 0, 0], sizes = [15, 16, 64], strides = [1, 1, 1]} : vector<16x16x64xf32> to vector<15x16x64xf32>
    %84 = tpu.concatenate %82, %83 in 0 : vector<1x16x64xf32>, vector<15x16x64xf32> -> vector<16x16x64xf32>
    %85 = vector.extract_strided_slice %77 {offsets = [1, 0, 0], sizes = [15, 16, 64], strides = [1, 1, 1]} : vector<16x16x64xf32> to vector<15x16x64xf32>
    %86 = tpu.concatenate %85, %82 in 0 : vector<15x16x64xf32>, vector<1x16x64xf32> -> vector<16x16x64xf32>
    %87 = tpu.concatenate %84, %77, %86 in 2 : vector<16x16x64xf32>, vector<16x16x64xf32>, vector<16x16x64xf32> -> vector<16x16x192xf32>
    %88 = vector.shape_cast %87 : vector<16x16x192xf32> to vector<256x192xf32>
    %89 = arith.truncf %88 : vector<256x192xf32> to vector<256x192xbf16>
    %cst_40 = arith.constant dense<0.000000e+00> : vector<256x64xf32>
    %90 = tpu.matmul %89, %79, %cst_40 {dimension_numbers = #tpu.dot_dimension_numbers<[1], [0], [0], [1], [0, 0, 1, 1], [], []>} : vector<256x192xbf16>, vector<192x64xbf16>, vector<256x64xf32> -> vector<256x64xf32>
    %91 = vector.broadcast %81 : vector<1x64xf32> to vector<256x64xf32>
    %92 = arith.addf %90, %91 : vector<256x64xf32>
    %cst_41 = arith.constant 0.000000e+00 : f32
    %93 = vector.broadcast %cst_41 : f32 to vector<256x64xf32>
    %94 = arith.maximumf %92, %93 : vector<256x64xf32>
    %95 = vector.shape_cast %94 : vector<256x64xf32> to vector<16x16x64xf32>
    %96 = arith.addf %95, %59 : vector<16x16x64xf32>
    %cst_42 = arith.constant 0.000000e+00 : f32
    %97 = vector.broadcast %cst_42 : f32 to vector<16x16x64xf32>
    %98 = arith.maximumf %96, %97 : vector<16x16x64xf32>
    %c0_43 = arith.constant 0 : index
    %c0_44 = arith.constant 0 : index
    %99 = vector.load %arg6[%c0_43, %c0_44] : memref<144x96xbf16, #tpu.memory_space<vmem>>, vector<144x96xbf16>
    %c0_45 = arith.constant 0 : index
    %c0_46 = arith.constant 0 : index
    %100 = vector.load %arg7[%c0_45, %c0_46] : memref<1x96xf32, #tpu.memory_space<vmem>>, vector<1x96xf32>
    %cst_47 = arith.constant 0.000000e+00 : f32
    %101 = vector.broadcast %cst_47 : f32 to vector<16x1x48xf32>
    %102 = vector.extract_strided_slice %18 {offsets = [0, 0, 0], sizes = [16, 15, 48], strides = [1, 1, 1]} : vector<16x16x48xf32> to vector<16x15x48xf32>
    %103 = tpu.concatenate %101, %102 in 1 : vector<16x1x48xf32>, vector<16x15x48xf32> -> vector<16x16x48xf32>
    %104 = vector.extract_strided_slice %18 {offsets = [0, 1, 0], sizes = [16, 15, 48], strides = [1, 1, 1]} : vector<16x16x48xf32> to vector<16x15x48xf32>
    %105 = tpu.concatenate %104, %101 in 1 : vector<16x15x48xf32>, vector<16x1x48xf32> -> vector<16x16x48xf32>
    %106 = tpu.concatenate %103, %18, %105 in 2 : vector<16x16x48xf32>, vector<16x16x48xf32>, vector<16x16x48xf32> -> vector<16x16x144xf32>
    %107 = vector.shape_cast %106 : vector<16x16x144xf32> to vector<256x144xf32>
    %108 = arith.truncf %107 : vector<256x144xf32> to vector<256x144xbf16>
    %cst_48 = arith.constant dense<0.000000e+00> : vector<256x96xf32>
    %109 = tpu.matmul %108, %99, %cst_48 {dimension_numbers = #tpu.dot_dimension_numbers<[1], [0], [0], [1], [0, 0, 1, 1], [], []>} : vector<256x144xbf16>, vector<144x96xbf16>, vector<256x96xf32> -> vector<256x96xf32>
    %110 = vector.broadcast %100 : vector<1x96xf32> to vector<256x96xf32>
    %111 = arith.addf %109, %110 : vector<256x96xf32>
    %cst_49 = arith.constant 0.000000e+00 : f32
    %112 = vector.broadcast %cst_49 : f32 to vector<256x96xf32>
    %113 = arith.maximumf %111, %112 : vector<256x96xf32>
    %114 = vector.shape_cast %113 : vector<256x96xf32> to vector<16x16x96xf32>
    %c0_50 = arith.constant 0 : index
    %c0_51 = arith.constant 0 : index
    %115 = vector.load %arg8[%c0_50, %c0_51] : memref<288x96xbf16, #tpu.memory_space<vmem>>, vector<288x96xbf16>
    %c0_52 = arith.constant 0 : index
    %c0_53 = arith.constant 0 : index
    %116 = vector.load %arg9[%c0_52, %c0_53] : memref<1x96xf32, #tpu.memory_space<vmem>>, vector<1x96xf32>
    %cst_54 = arith.constant 0.000000e+00 : f32
    %117 = vector.broadcast %cst_54 : f32 to vector<1x16x96xf32>
    %118 = vector.extract_strided_slice %114 {offsets = [0, 0, 0], sizes = [15, 16, 96], strides = [1, 1, 1]} : vector<16x16x96xf32> to vector<15x16x96xf32>
    %119 = tpu.concatenate %117, %118 in 0 : vector<1x16x96xf32>, vector<15x16x96xf32> -> vector<16x16x96xf32>
    %120 = vector.extract_strided_slice %114 {offsets = [1, 0, 0], sizes = [15, 16, 96], strides = [1, 1, 1]} : vector<16x16x96xf32> to vector<15x16x96xf32>
    %121 = tpu.concatenate %120, %117 in 0 : vector<15x16x96xf32>, vector<1x16x96xf32> -> vector<16x16x96xf32>
    %122 = tpu.concatenate %119, %114, %121 in 2 : vector<16x16x96xf32>, vector<16x16x96xf32>, vector<16x16x96xf32> -> vector<16x16x288xf32>
    %123 = vector.shape_cast %122 : vector<16x16x288xf32> to vector<256x288xf32>
    %124 = arith.truncf %123 : vector<256x288xf32> to vector<256x288xbf16>
    %cst_55 = arith.constant dense<0.000000e+00> : vector<256x96xf32>
    %125 = tpu.matmul %124, %115, %cst_55 {dimension_numbers = #tpu.dot_dimension_numbers<[1], [0], [0], [1], [0, 0, 1, 1], [], []>} : vector<256x288xbf16>, vector<288x96xbf16>, vector<256x96xf32> -> vector<256x96xf32>
    %126 = vector.broadcast %116 : vector<1x96xf32> to vector<256x96xf32>
    %127 = arith.addf %125, %126 : vector<256x96xf32>
    %cst_56 = arith.constant 0.000000e+00 : f32
    %128 = vector.broadcast %cst_56 : f32 to vector<256x96xf32>
    %129 = arith.maximumf %127, %128 : vector<256x96xf32>
    %130 = vector.shape_cast %129 : vector<256x96xf32> to vector<16x16x96xf32>
    %cst_57 = arith.constant 0.000000e+00 : f32
    %131 = vector.broadcast %cst_57 : f32 to vector<16x1x32xf32>
    %132 = vector.extract_strided_slice %20 {offsets = [0, 0, 0], sizes = [16, 15, 32], strides = [1, 1, 1]} : vector<16x16x32xf32> to vector<16x15x32xf32>
    %133 = tpu.concatenate %131, %132 in 1 : vector<16x1x32xf32>, vector<16x15x32xf32> -> vector<16x16x32xf32>
    %134 = arith.addf %133, %20 : vector<16x16x32xf32>
    %135 = vector.extract_strided_slice %20 {offsets = [0, 1, 0], sizes = [16, 15, 32], strides = [1, 1, 1]} : vector<16x16x32xf32> to vector<16x15x32xf32>
    %136 = tpu.concatenate %135, %131 in 1 : vector<16x15x32xf32>, vector<16x1x32xf32> -> vector<16x16x32xf32>
    %137 = arith.addf %134, %136 : vector<16x16x32xf32>
    %cst_58 = arith.constant 0.000000e+00 : f32
    %138 = vector.broadcast %cst_58 : f32 to vector<1x16x32xf32>
    %139 = vector.extract_strided_slice %137 {offsets = [0, 0, 0], sizes = [15, 16, 32], strides = [1, 1, 1]} : vector<16x16x32xf32> to vector<15x16x32xf32>
    %140 = tpu.concatenate %138, %139 in 0 : vector<1x16x32xf32>, vector<15x16x32xf32> -> vector<16x16x32xf32>
    %141 = arith.addf %140, %137 : vector<16x16x32xf32>
    %142 = vector.extract_strided_slice %137 {offsets = [1, 0, 0], sizes = [15, 16, 32], strides = [1, 1, 1]} : vector<16x16x32xf32> to vector<15x16x32xf32>
    %143 = tpu.concatenate %142, %138 in 0 : vector<15x16x32xf32>, vector<1x16x32xf32> -> vector<16x16x32xf32>
    %144 = arith.addf %141, %143 : vector<16x16x32xf32>
    %145 = vector.extract_strided_slice %6 {offsets = [0, 176], sizes = [1, 32], strides = [1, 1]} : vector<1x208xf32> to vector<1x32xf32>
    %146 = vector.shape_cast %145 : vector<1x32xf32> to vector<1x1x32xf32>
    %147 = vector.broadcast %146 : vector<1x1x32xf32> to vector<16x16x32xf32>
    %148 = arith.addf %144, %147 : vector<16x16x32xf32>
    %cst_59 = arith.constant 0.000000e+00 : f32
    %149 = vector.broadcast %cst_59 : f32 to vector<16x16x32xf32>
    %150 = arith.maximumf %148, %149 : vector<16x16x32xf32>
    %151 = tpu.concatenate %14, %98, %130, %150 in 2 : vector<16x16x64xf32>, vector<16x16x64xf32>, vector<16x16x96xf32>, vector<16x16x32xf32> -> vector<16x16x256xf32>
    %152 = vector.shape_cast %151 : vector<16x16x256xf32> to vector<1x16x16x256xf32>
    %c0_60 = arith.constant 0 : index
    %c0_61 = arith.constant 0 : index
    %c0_62 = arith.constant 0 : index
    %c0_63 = arith.constant 0 : index
    %153 = vector.load %arg10[%c0_60, %c0_61, %c0_62, %c0_63] : memref<1x16x16x256xf32, #tpu.memory_space<vmem>>, vector<1x16x16x256xf32>
    tpu.vector_store %arg10[%c0_60, %c0_61, %c0_62, %c0_63], %152 {strides = array<i32>} : memref<1x16x16x256xf32, #tpu.memory_space<vmem>>, vector<1x16x16x256xf32>,
    return
  }
  func.func @transform_0(%arg0: i32) -> (i32, i32, i32, i32) {
    %c0_i32 = arith.constant 0 : i32
    %c0_i32_0 = arith.constant 0 : i32
    %c0_i32_1 = arith.constant 0 : i32
    %c0_i32_2 = arith.constant 0 : i32
    return %arg0, %c0_i32, %c0_i32_0, %c0_i32_1 : i32, i32, i32, i32
  }
  func.func @transform_1(%arg0: i32) -> (i32, i32) {
    %c0_i32 = arith.constant 0 : i32
    %c0_i32_0 = arith.constant 0 : i32
    %c0_i32_1 = arith.constant 0 : i32
    return %c0_i32, %c0_i32_0 : i32, i32
  }
  func.func @transform_2(%arg0: i32) -> (i32, i32) {
    %c0_i32 = arith.constant 0 : i32
    %c0_i32_0 = arith.constant 0 : i32
    %c0_i32_1 = arith.constant 0 : i32
    return %c0_i32, %c0_i32_0 : i32, i32
  }
  func.func @transform_3(%arg0: i32) -> (i32, i32, i32) {
    %c0_i32 = arith.constant 0 : i32
    %c0_i32_0 = arith.constant 0 : i32
    %c0_i32_1 = arith.constant 0 : i32
    %c0_i32_2 = arith.constant 0 : i32
    return %c0_i32, %c0_i32_0, %c0_i32_1 : i32, i32, i32
  }
  func.func @transform_4(%arg0: i32) -> (i32, i32, i32) {
    %c0_i32 = arith.constant 0 : i32
    %c0_i32_0 = arith.constant 0 : i32
    %c0_i32_1 = arith.constant 0 : i32
    %c0_i32_2 = arith.constant 0 : i32
    return %c0_i32, %c0_i32_0, %c0_i32_1 : i32, i32, i32
  }
  func.func @transform_5(%arg0: i32) -> (i32, i32) {
    %c0_i32 = arith.constant 0 : i32
    %c0_i32_0 = arith.constant 0 : i32
    %c0_i32_1 = arith.constant 0 : i32
    return %c0_i32, %c0_i32_0 : i32, i32
  }
  func.func @transform_6(%arg0: i32) -> (i32, i32) {
    %c0_i32 = arith.constant 0 : i32
    %c0_i32_0 = arith.constant 0 : i32
    %c0_i32_1 = arith.constant 0 : i32
    return %c0_i32, %c0_i32_0 : i32, i32
  }
  func.func @transform_7(%arg0: i32) -> (i32, i32) {
    %c0_i32 = arith.constant 0 : i32
    %c0_i32_0 = arith.constant 0 : i32
    %c0_i32_1 = arith.constant 0 : i32
    return %c0_i32, %c0_i32_0 : i32, i32
  }
  func.func @transform_8(%arg0: i32) -> (i32, i32) {
    %c0_i32 = arith.constant 0 : i32
    %c0_i32_0 = arith.constant 0 : i32
    %c0_i32_1 = arith.constant 0 : i32
    return %c0_i32, %c0_i32_0 : i32, i32
  }
  func.func @transform_9(%arg0: i32) -> (i32, i32, i32, i32) {
    %c0_i32 = arith.constant 0 : i32
    %c0_i32_0 = arith.constant 0 : i32
    %c0_i32_1 = arith.constant 0 : i32
    %c0_i32_2 = arith.constant 0 : i32
    return %arg0, %c0_i32, %c0_i32_0, %c0_i32_1 : i32, i32, i32, i32
  }
}

</mosaic_0001>

<llo_original>
// kernel: inception_aplus_forward.1
$region0: #{inception_aplus_forward.1}
  #allocation0 [shape = 'u32[]', space=smem, size = 0x4, offset = 0x4, fixed_abs, tag = 'smem constant byte address 0x4 - core index']
  #allocation1 [shape = 'u32[144,128]{1,0:T(1,128)}', space=vmem, size = 0x12000, scoped, tag = 'internal scratch']
  %s0 = inlined_call_operand.vmem [shape: f32[2,16,16,4], index: 0, kind: input, shape index: {}]
  %s1 = inlined_call_operand.vmem [shape: bf16[4,208], index: 1, kind: input, shape index: {}]
  %s2 = inlined_call_operand.vmem [shape: f32[1,208], index: 2, kind: input, shape index: {}]
  %s3 = inlined_call_operand.vmem [shape: bf16[4,192,64], index: 3, kind: input, shape index: {}]
  %s4 = inlined_call_operand.vmem [shape: f32[4,1,64], index: 4, kind: input, shape index: {}]
  %s5 = inlined_call_operand.vmem [shape: bf16[144,96], index: 5, kind: input, shape index: {}]
  %s6 = inlined_call_operand.vmem [shape: f32[1,96], index: 6, kind: input, shape index: {}]
  %s7 = inlined_call_operand.vmem [shape: bf16[288,96], index: 7, kind: input, shape index: {}]
  %s8 = inlined_call_operand.vmem [shape: f32[1,96], index: 8, kind: input, shape index: {}]
  %s9 = inlined_call_operand.hbm [shape: f32[2,16,16,256], index: 9, kind: output, shape index: {}]
  %s10 = sld [smem:[#allocation0]]
  $region69: #{inception_aplus_forward.1} parent=0
    _
  %s12 = ssub.s32 1, %s10
  %s13 = scalar_select 0, %s12, %s10
  $region1: #{inception_aplus_forward.1} parent=0
    #allocation2 [shape = 'u8[524288]{0}', space=vmem, size = 0x80000, scoped, tag = 'output window, operand 0']
    #allocation3 [shape = 's32[2]{0}', space=sflag, size = 0x8, scoped, tag = 'scoped memory for inception_aplus_forward.1']
    %14 = vsyncpa [#allocation3], 0
    %s15 = scalar_lea.sflag [#allocation3], 1
    %16 = vsyncpa %s15, 0
    loop: start=0, step=1, limit=4
    $region2: #{inception_aplus_forward.1} parent=1 // loop_pre_header
      _
    $region3: #{inception_aplus_forward.1} parent=1 // loop_header
      %s18 = sphi 0, %s22
      %p19 = scmp.ge.s32.totalorder %s18, 4
      %s28 = sphi 0, %s30
      %s31 = sphi 0, %s28
      %s32 = sphi 0, %s31
      %s48 = sphi 0, %s32
      %s52 = sphi 0, %s52
      %s54 = sphi 0, %s52
      %s55 = sphi 0, %s54
      %s69 = sphi 0, %s55
      %s73 = sphi 0, %s73
      %s75 = sphi 0, %s73
      %s76 = sphi 0, %s75
      %s90 = sphi 0, %s76
      %s94 = sphi 0, %s94
      %s96 = sphi 0, %s94
      %s97 = sphi 0, %s96
      %s111 = sphi 0, %s97
      %s115 = sphi 0, %s115
      %s117 = sphi 0, %s115
      %s118 = sphi 0, %s117
      %s132 = sphi 0, %s118
      %s136 = sphi 0, %s136
      %s138 = sphi 0, %s136
      %s139 = sphi 0, %s138
      %s153 = sphi 0, %s139
      %s157 = sphi 0, %s157
      %s159 = sphi 0, %s157
      %s160 = sphi 0, %s159
      %s174 = sphi 0, %s160
      %s178 = sphi 0, %s178
      %s180 = sphi 0, %s178
      %s181 = sphi 0, %s180
      %s195 = sphi 0, %s181
      %s199 = sphi 0, %s199
      %s201 = sphi 0, %s199
      %s202 = sphi 0, %s201
      %s216 = sphi 0, %s202
      %s222 = sphi 0, %s224
      %s225 = sphi 0, %s222
      %s226 = sphi 0, %s225
      %s242 = sphi 0, %s226
    $region4: #{inception_aplus_forward.1} parent=1 // loop_header_branch
      %21 = sbr.rel (%p19) target = $region8
    $region5: #{inception_aplus_forward.1} parent=1 // loop_body
      %s23 = ssub.s32 %s18, 1
      %s24 = ssub.s32 %s18, 2
      %s25 = sadd.s32 %s18, 1
      %s26 = ssub.s32 %s18, %s25
      %p27 = scmp.eq.s32.totalorder %s26, 0
      %s29 = sadd.s32 %s28, 1
      %s30 = scalar_select %p27, %s28, %s29
      %p33 = pneg %p27
      %p34 = scmp.eq.s32.totalorder %s18, 1
      %p35 = por %p33, %p34
      %p36 = scmp.ne.s32.totalorder %s28, %s31
      %p37 = scmp.eq.s32.totalorder %s18, 0
      %p38 = por %p36, %p37
      %p39 = scmp.ne.s32.totalorder %s28, %s31
      %p40 = scmp.eq.s32.totalorder %s23, 1
      %p41 = por %p39, %p40
      %p42 = scmp.ne.s32.totalorder %s31, %s32
      %p43 = scmp.eq.s32.totalorder %s23, 0
      %p44 = por %p42, %p43
      %p45 = scmp.ne.s32.totalorder %s31, %s32
      %p46 = scmp.eq.s32.totalorder %s24, 1
      %p47 = por %p45, %p46
      %p49 = scmp.ne.s32.totalorder %s32, %s48
      %p50 = scmp.eq.s32.totalorder %s24, 0
      %p51 = por %p49, %p50
      %s53 = sadd.s32 %s52, 1
      %p56 = scmp.eq.s32.totalorder %s18, 1
      %p57 = scmp.ne.s32.totalorder %s52, %s54
      %p58 = scmp.eq.s32.totalorder %s18, 0
      %p59 = por %p57, %p58
      %p60 = scmp.ne.s32.totalorder %s52, %s54
      %p61 = scmp.eq.s32.totalorder %s23, 1
      %p62 = por %p60, %p61
      %p63 = scmp.ne.s32.totalorder %s54, %s55
      %p64 = scmp.eq.s32.totalorder %s23, 0
      %p65 = por %p63, %p64
      %p66 = scmp.ne.s32.totalorder %s54, %s55
      %p67 = scmp.eq.s32.totalorder %s24, 1
      %p68 = por %p66, %p67
      %p70 = scmp.ne.s32.totalorder %s55, %s69
      %p71 = scmp.eq.s32.totalorder %s24, 0
      %p72 = por %p70, %p71
      %s74 = sadd.s32 %s73, 1
      %p77 = scmp.eq.s32.totalorder %s18, 1
      %p78 = scmp.ne.s32.totalorder %s73, %s75
      %p79 = scmp.eq.s32.totalorder %s18, 0
      %p80 = por %p78, %p79
      %p81 = scmp.ne.s32.totalorder %s73, %s75
      %p82 = scmp.eq.s32.totalorder %s23, 1
      %p83 = por %p81, %p82
      %p84 = scmp.ne.s32.totalorder %s75, %s76
      %p85 = scmp.eq.s32.totalorder %s23, 0
      %p86 = por %p84, %p85
      %p87 = scmp.ne.s32.totalorder %s75, %s76
      %p88 = scmp.eq.s32.totalorder %s24, 1
      %p89 = por %p87, %p88
      %p91 = scmp.ne.s32.totalorder %s76, %s90
      %p92 = scmp.eq.s32.totalorder %s24, 0
      %p93 = por %p91, %p92
      %s95 = sadd.s32 %s94, 1
      %p98 = scmp.eq.s32.totalorder %s18, 1
      %p99 = scmp.ne.s32.totalorder %s94, %s96
      %p100 = scmp.eq.s32.totalorder %s18, 0
      %p101 = por %p99, %p100
      %p102 = scmp.ne.s32.totalorder %s94, %s96
      %p103 = scmp.eq.s32.totalorder %s23, 1
      %p104 = por %p102, %p103
      %p105 = scmp.ne.s32.totalorder %s96, %s97
      %p106 = scmp.eq.s32.totalorder %s23, 0
      %p107 = por %p105, %p106
      %p108 = scmp.ne.s32.totalorder %s96, %s97
      %p109 = scmp.eq.s32.totalorder %s24, 1
      %p110 = por %p108, %p109
      %p112 = scmp.ne.s32.totalorder %s97, %s111
      %p113 = scmp.eq.s32.totalorder %s24, 0
      %p114 = por %p112, %p113
      %s116 = sadd.s32 %s115, 1
      %p119 = scmp.eq.s32.totalorder %s18, 1
      %p120 = scmp.ne.s32.totalorder %s115, %s117
      %p121 = scmp.eq.s32.totalorder %s18, 0
      %p122 = por %p120, %p121
      %p123 = scmp.ne.s32.totalorder %s115, %s117
      %p124 = scmp.eq.s32.totalorder %s23, 1
      %p125 = por %p123, %p124
      %p126 = scmp.ne.s32.totalorder %s117, %s118
      %p127 = scmp.eq.s32.totalorder %s23, 0
      %p128 = por %p126, %p127
      %p129 = scmp.ne.s32.totalorder %s117, %s118
      %p130 = scmp.eq.s32.totalorder %s24, 1
      %p131 = por %p129, %p130
      %p133 = scmp.ne.s32.totalorder %s118, %s132
      %p134 = scmp.eq.s32.totalorder %s24, 0
      %p135 = por %p133, %p134
      %s137 = sadd.s32 %s136, 1
      %p140 = scmp.eq.s32.totalorder %s18, 1
      %p141 = scmp.ne.s32.totalorder %s136, %s138
      %p142 = scmp.eq.s32.totalorder %s18, 0
      %p143 = por %p141, %p142
      %p144 = scmp.ne.s32.totalorder %s136, %s138
      %p145 = scmp.eq.s32.totalorder %s23, 1
      %p146 = por %p144, %p145
      %p147 = scmp.ne.s32.totalorder %s138, %s139
      %p148 = scmp.eq.s32.totalorder %s23, 0
      %p149 = por %p147, %p148
      %p150 = scmp.ne.s32.totalorder %s138, %s139
      %p151 = scmp.eq.s32.totalorder %s24, 1
      %p152 = por %p150, %p151
      %p154 = scmp.ne.s32.totalorder %s139, %s153
      %p155 = scmp.eq.s32.totalorder %s24, 0
      %p156 = por %p154, %p155
      %s158 = sadd.s32 %s157, 1
      %p161 = scmp.eq.s32.totalorder %s18, 1
      %p162 = scmp.ne.s32.totalorder %s157, %s159
      %p163 = scmp.eq.s32.totalorder %s18, 0
      %p164 = por %p162, %p163
      %p165 = scmp.ne.s32.totalorder %s157, %s159
      %p166 = scmp.eq.s32.totalorder %s23, 1
      %p167 = por %p165, %p166
      %p168 = scmp.ne.s32.totalorder %s159, %s160
      %p169 = scmp.eq.s32.totalorder %s23, 0
      %p170 = por %p168, %p169
      %p171 = scmp.ne.s32.totalorder %s159, %s160
      %p172 = scmp.eq.s32.totalorder %s24, 1
      %p173 = por %p171, %p172
      %p175 = scmp.ne.s32.totalorder %s160, %s174
      %p176 = scmp.eq.s32.totalorder %s24, 0
      %p177 = por %p175, %p176
      %s179 = sadd.s32 %s178, 1
      %p182 = scmp.eq.s32.totalorder %s18, 1
      %p183 = scmp.ne.s32.totalorder %s178, %s180
      %p184 = scmp.eq.s32.totalorder %s18, 0
      %p185 = por %p183, %p184
      %p186 = scmp.ne.s32.totalorder %s178, %s180
      %p187 = scmp.eq.s32.totalorder %s23, 1
      %p188 = por %p186, %p187
      %p189 = scmp.ne.s32.totalorder %s180, %s181
      %p190 = scmp.eq.s32.totalorder %s23, 0
      %p191 = por %p189, %p190
      %p192 = scmp.ne.s32.totalorder %s180, %s181
      %p193 = scmp.eq.s32.totalorder %s24, 1
      %p194 = por %p192, %p193
      %p196 = scmp.ne.s32.totalorder %s181, %s195
      %p197 = scmp.eq.s32.totalorder %s24, 0
      %p198 = por %p196, %p197
      %s200 = sadd.s32 %s199, 1
      %p203 = scmp.eq.s32.totalorder %s18, 1
      %p204 = scmp.ne.s32.totalorder %s199, %s201
      %p205 = scmp.eq.s32.totalorder %s18, 0
      %p206 = por %p204, %p205
      %p207 = scmp.ne.s32.totalorder %s199, %s201
      %p208 = scmp.eq.s32.totalorder %s23, 1
      %p209 = por %p207, %p208
      %p210 = scmp.ne.s32.totalorder %s201, %s202
      %p211 = scmp.eq.s32.totalorder %s23, 0
      %p212 = por %p210, %p211
      %p213 = scmp.ne.s32.totalorder %s201, %s202
      %p214 = scmp.eq.s32.totalorder %s24, 1
      %p215 = por %p213, %p214
      %p217 = scmp.ne.s32.totalorder %s202, %s216
      %p218 = scmp.eq.s32.totalorder %s24, 0
      %p219 = por %p217, %p218
      %s220 = ssub.s32 %s18, %s25
      %p221 = scmp.eq.s32.totalorder %s220, 0
      %s223 = sadd.s32 %s222, 1
      %s224 = scalar_select %p221, %s222, %s223
      %p227 = pneg %p221
      %p228 = scmp.eq.s32.totalorder %s18, 1
      %p229 = por %p227, %p228
      %p230 = scmp.ne.s32.totalorder %s222, %s225
      %p231 = scmp.eq.s32.totalorder %s18, 0
      %p232 = por %p230, %p231
      %p233 = scmp.ne.s32.totalorder %s222, %s225
      %p234 = scmp.eq.s32.totalorder %s23, 1
      %p235 = por %p233, %p234
      %p236 = scmp.ne.s32.totalorder %s225, %s226
      %p237 = scmp.eq.s32.totalorder %s23, 0
      %p238 = por %p236, %p237
      %p239 = scmp.ne.s32.totalorder %s225, %s226
      %p240 = scmp.eq.s32.totalorder %s24, 1
      %p241 = por %p239, %p240
      %p243 = scmp.ne.s32.totalorder %s226, %s242
      %p244 = scmp.eq.s32.totalorder %s24, 0
      %p245 = por %p243, %p244
      %p246 = scmp.le.s32.totalorder 1, %s18
      %p247 = scmp.lt.s32.totalorder %s18, 3
      %p248 = pnand %p246, %p247
      %p249 = pneg %p248
      // Predicated region
      $region9: #{inception_aplus_forward.1} parent=5 // pred_check
        _
      $region10: #{inception_aplus_forward.1} parent=5 // pred_check_branch
        %251 = sbr.rel (%p248) target = $region12
      $region11: #{inception_aplus_forward.1} parent=5 // pred_region
        %s252 = ssub.s32 %s18, 1
        // Predicated region
        $region13: #{inception_aplus_forward.1} parent=11 // pred_check
          %p253 = pneg %p65
        $region14: #{inception_aplus_forward.1} parent=11 // pred_check_branch
          %255 = sbr.rel (%p253) target = $region16
        $region15: #{inception_aplus_forward.1} parent=11 // pred_region
          _
        $region16: #{inception_aplus_forward.1} parent=11 // pred_fallthru
          _
        // Predicated region
        $region17: #{inception_aplus_forward.1} parent=11 // pred_check
          %p256 = pneg %p86
        $region18: #{inception_aplus_forward.1} parent=11 // pred_check_branch
          %258 = sbr.rel (%p256) target = $region20
        $region19: #{inception_aplus_forward.1} parent=11 // pred_region
          _
        $region20: #{inception_aplus_forward.1} parent=11 // pred_fallthru
          _
        // Predicated region
        $region21: #{inception_aplus_forward.1} parent=11 // pred_check
          %p259 = pneg %p107
        $region22: #{inception_aplus_forward.1} parent=11 // pred_check_branch
          %261 = sbr.rel (%p259) target = $region24
        $region23: #{inception_aplus_forward.1} parent=11 // pred_region
          _
        $region24: #{inception_aplus_forward.1} parent=11 // pred_fallthru
          _
        // Predicated region
        $region25: #{inception_aplus_forward.1} parent=11 // pred_check
          %p262 = pneg %p128
        $region26: #{inception_aplus_forward.1} parent=11 // pred_check_branch
          %264 = sbr.rel (%p262) target = $region28
        $region27: #{inception_aplus_forward.1} parent=11 // pred_region
          _
        $region28: #{inception_aplus_forward.1} parent=11 // pred_fallthru
          _
        // Predicated region
        $region29: #{inception_aplus_forward.1} parent=11 // pred_check
          %p265 = pneg %p149
        $region30: #{inception_aplus_forward.1} parent=11 // pred_check_branch
          %267 = sbr.rel (%p265) target = $region32
        $region31: #{inception_aplus_forward.1} parent=11 // pred_region
          _
        $region32: #{inception_aplus_forward.1} parent=11 // pred_fallthru
          _
        // Predicated region
        $region33: #{inception_aplus_forward.1} parent=11 // pred_check
          %p268 = pneg %p170
        $region34: #{inception_aplus_forward.1} parent=11 // pred_check_branch
          %270 = sbr.rel (%p268) target = $region36
        $region35: #{inception_aplus_forward.1} parent=11 // pred_region
          _
        $region36: #{inception_aplus_forward.1} parent=11 // pred_fallthru
          _
        // Predicated region
        $region37: #{inception_aplus_forward.1} parent=11 // pred_check
          %p271 = pneg %p191
        $region38: #{inception_aplus_forward.1} parent=11 // pred_check_branch
          %273 = sbr.rel (%p271) target = $region40
        $region39: #{inception_aplus_forward.1} parent=11 // pred_region
          _
        $region40: #{inception_aplus_forward.1} parent=11 // pred_fallthru
          _
        // Predicated region
        $region41: #{inception_aplus_forward.1} parent=11 // pred_check
          %p274 = pneg %p212
        $region42: #{inception_aplus_forward.1} parent=11 // pred_check_branch
          %276 = sbr.rel (%p274) target = $region44
        $region43: #{inception_aplus_forward.1} parent=11 // pred_region
          _
        $region44: #{inception_aplus_forward.1} parent=11 // pred_fallthru
          _
      $region12: #{inception_aplus_forward.1} parent=5 // pred_fallthru
        _
      %p277 = scmp.lt.s32.totalorder %s18, 2
      // Predicated region
      $region45: #{inception_aplus_forward.1} parent=5 // pred_check
        %p278 = pneg %p277
      $region46: #{inception_aplus_forward.1} parent=5 // pred_check_branch
        %280 = sbr.rel (%p278) target = $region48
      $region47: #{inception_aplus_forward.1} parent=5 // pred_region
        // Predicated region
        $region49: #{inception_aplus_forward.1} parent=47 // pred_check
          %p281 = pneg %p38
        $region50: #{inception_aplus_forward.1} parent=47 // pred_check_branch
          %283 = sbr.rel (%p281) target = $region52
        $region51: #{inception_aplus_forward.1} parent=47 // pred_region
          %p284 = scmp.lt.s32.totalorder %s18, 1
          %s285 = scalar_select %p284, %s18, 1
          %s286 = smul.addr %s285, 32
          %s287 = smul.addr %s286, 8
          %s288 = scalar_lea.vmem %s0, %s287
        $region52: #{inception_aplus_forward.1} parent=47 // pred_fallthru
          _
      $region48: #{inception_aplus_forward.1} parent=5 // pred_fallthru
        _
      %p289 = scmp.le.s32.totalorder 1, %s18
      %p290 = scmp.lt.s32.totalorder %s18, 3
      %p291 = pnand %p289, %p290
      %p292 = pneg %p291
      // Predicated region
      $region53: #{inception_aplus_forward.1} parent=5 // pred_check
        _
      $region54: #{inception_aplus_forward.1} parent=5 // pred_check_branch
        %294 = sbr.rel (%p291) target = $region56
      $region55: #{inception_aplus_forward.1} parent=5 // pred_region
        %s295 = ssub.s32 %s18, 1
        %p296 = scmp.lt.s32.totalorder %s23, 1
        %s297 = scalar_select %p296, %s23, 1
        %s298 = smul.addr %s297, 32
        %s299 = smul.addr %s298, 8
        %s300 = scalar_lea.vmem %s0, %s299
        %p301 = pneg %p44
        %p302 = pneg %p41
        %p303 = pneg %p65
        %p304 = pneg %p62
        %p305 = pneg %p86
        %p306 = pneg %p83
        %p307 = pneg %p107
        %p308 = pneg %p104
        %p309 = pneg %p128
        %p310 = pneg %p125
        %p311 = pneg %p149
        %p312 = pneg %p146
        %p313 = pneg %p170
        %p314 = pneg %p167
        %p315 = pneg %p191
        %p316 = pneg %p188
        %p317 = pneg %p212
        %p318 = pneg %p209
        %p319 = pneg %p238
        %p320 = pneg %p235
        %s321 = sand.u32 %s225, 1
        %s322 = scalar_lea.sflag [#allocation3], %s321
        %s323 = sand.u32 %s225, 1
        %s324 = smul.addr %s323, 512
        %s325 = scalar_lea.vmem [#allocation2], %s324
        %p326 = scmp.lt.s32.totalorder %s23, 1
        %s327 = scalar_select %p326, %s23, 1
        %s328 = smul.addr %s327, 32
        %s329 = smul.addr %s328, 8
        %s330 = scalar_lea.vmem %s0, %s329
        %v332 = vld [vmem:[%s330] sm:$0xff]
        %v333 = vld [vmem:[%s330 + $0x8] sm:$0xff]
        %v334 = vld [vmem:[%s330 + $0x10] sm:$0xff]
        %v335 = vld [vmem:[%s330 + $0x18] sm:$0xff]
        %v336 = vld [vmem:[%s330 + $0x20] sm:$0xff]
        %v337 = vld [vmem:[%s330 + $0x28] sm:$0xff]
        %v338 = vld [vmem:[%s330 + $0x30] sm:$0xff]
        %v339 = vld [vmem:[%s330 + $0x38] sm:$0xff]
        %v340 = vld [vmem:[%s330 + $0x40] sm:$0xff]
        %v341 = vld [vmem:[%s330 + $0x48] sm:$0xff]
        %v342 = vld [vmem:[%s330 + $0x50] sm:$0xff]
        %v343 = vld [vmem:[%s330 + $0x58] sm:$0xff]
        %v344 = vld [vmem:[%s330 + $0x60] sm:$0xff]
        %v345 = vld [vmem:[%s330 + $0x68] sm:$0xff]
        %v346 = vld [vmem:[%s330 + $0x70] sm:$0xff]
        %v347 = vld [vmem:[%s330 + $0x78] sm:$0xff]
        %v348 = vld [vmem:[%s330 + $0x80] sm:$0xff]
        %v349 = vld [vmem:[%s330 + $0x88] sm:$0xff]
        %v350 = vld [vmem:[%s330 + $0x90] sm:$0xff]
        %v351 = vld [vmem:[%s330 + $0x98] sm:$0xff]
        %v352 = vld [vmem:[%s330 + $0xa0] sm:$0xff]
        %v353 = vld [vmem:[%s330 + $0xa8] sm:$0xff]
        %v354 = vld [vmem:[%s330 + $0xb0] sm:$0xff]
        %v355 = vld [vmem:[%s330 + $0xb8] sm:$0xff]
        %v356 = vld [vmem:[%s330 + $0xc0] sm:$0xff]
        %v357 = vld [vmem:[%s330 + $0xc8] sm:$0xff]
        %v358 = vld [vmem:[%s330 + $0xd0] sm:$0xff]
        %v359 = vld [vmem:[%s330 + $0xd8] sm:$0xff]
        %v360 = vld [vmem:[%s330 + $0xe0] sm:$0xff]
        %v361 = vld [vmem:[%s330 + $0xe8] sm:$0xff]
        %v362 = vld [vmem:[%s330 + $0xf0] sm:$0xff]
        %v363 = vld [vmem:[%s330 + $0xf8] sm:$0xff]
        %v364 = vpack.c.bf16 %v333, %v332
        %v365 = vpack.c.bf16 %v335, %v334
        %v366 = vpack.c.bf16 %v337, %v336
        %v367 = vpack.c.bf16 %v339, %v338
        %v368 = vpack.c.bf16 %v341, %v340
        %v369 = vpack.c.bf16 %v343, %v342
        %v370 = vpack.c.bf16 %v345, %v344
        %v371 = vpack.c.bf16 %v347, %v346
        %v372 = vpack.c.bf16 %v349, %v348
        %v373 = vpack.c.bf16 %v351, %v350
        %v374 = vpack.c.bf16 %v353, %v352
        %v375 = vpack.c.bf16 %v355, %v354
        %v376 = vpack.c.bf16 %v357, %v356
        %v377 = vpack.c.bf16 %v359, %v358
        %v378 = vpack.c.bf16 %v361, %v360
        %v379 = vpack.c.bf16 %v363, %v362
        %v380 = vld [vmem:[%s1] sm:$0xf]
        %v383 = vunpack.c.l.s4 1983009808
        %v384 = vunpack.c.0.s8 %v383
        %v385 = vlaneseq
        %v386 = vshrl.u32 %v385, 7
        %v387 = vsub.s32 %v384, %v386
        %v388 = vrot.slane %v380, %v387
        %v389 = vcombine.high %v388, %v388
        %vm390 = vcmask 31744
        %v392 = vsel %vm390, %v364, 0
        %v395 = vsel %vm390, %v365, 0
        %v398 = vsel %vm390, %v366, 0
        %v401 = vsel %vm390, %v367, 0
        %v404 = vsel %vm390, %v368, 0
        %v407 = vsel %vm390, %v369, 0
        %v410 = vsel %vm390, %v370, 0
        %v413 = vsel %vm390, %v371, 0
        %v416 = vsel %vm390, %v372, 0
        %v419 = vsel %vm390, %v373, 0
        %v422 = vsel %vm390, %v374, 0
        %v425 = vsel %vm390, %v375, 0
        %v428 = vsel %vm390, %v376, 0
        %v431 = vsel %vm390, %v377, 0
        %v434 = vsel %vm390, %v378, 0
        %v437 = vsel %vm390, %v379, 0
        %vm439 = vcmask 1041408
        %v441 = vsel %vm439, %v388, 0
        %v444 = vsel %vm439, %v389, 0
        %446 = vmatprep.subr.bf16.mxu0 %v444
        %447 = vmatpush1.bf16.msra.mxu0 %v441
        %448 = vmatprep.subr.bf16.mxu0 0
        %449 = vmatpush1.bf16.msra.mxu0 0
        %450 = vmatprep.subr.bf16.mxu0 0
        %451 = vmatpush1.bf16.msra.mxu0 0
        %452 = vmatprep.subr.bf16.mxu0 0
        %453 = vmatpush1.bf16.msra.mxu0 0
        %454 = vmatprep.subr.bf16.mxu0 0
        %455 = vmatpush1.bf16.msra.mxu0 0
        %456 = vmatprep.subr.bf16.mxu0 0
        %457 = vmatpush1.bf16.msra.mxu0 0
        %458 = vmatprep.subr.bf16.mxu0 0
        %459 = vmatpush1.bf16.msra.mxu0 0
        %460 = vmatprep.subr.bf16.mxu0 0
        %461 = vmatpush1.bf16.msra.mxu0 0
        %462 = vmatprep.subr.bf16.mxu0 0
        %463 = vmatpush1.bf16.msra.mxu0 0
        %464 = vmatprep.subr.bf16.mxu0 0
        %465 = vmatpush1.bf16.msra.mxu0 0
        %466 = vmatprep.subr.bf16.mxu0 0
        %467 = vmatpush1.bf16.msra.mxu0 0
        %468 = vmatprep.subr.bf16.mxu0 0
        %469 = vmatpush1.bf16.msra.mxu0 0
        %470 = vmatprep.subr.bf16.mxu0 0
        %471 = vmatpush1.bf16.msra.mxu0 0
        %472 = vmatprep.subr.bf16.mxu0 0
        %473 = vmatpush1.bf16.msra.mxu0 0
        %474 = vmatprep.subr.bf16.mxu0 0
        %475 = vmatpush1.bf16.msra.mxu0 0
        %476 = vmatprep.subr.bf16.mxu0 0
        %477 = vmatpush1.bf16.msra.mxu0 0
        %478 = vmatprep.mubr.bf16.mxu0 0
        %479 = vmatmul.mubr.bf16.gmra.mrb[0].mxu0 %v392
        %v480 = vpop.f32.mrb[0].mxu0
        %v481 = vadd.f32 0.0, %v480
        %v482 = vpop.f32.mrb[0].mxu0
        %v483 = vadd.f32 0.0, %v482
        %v484 = vpop.f32.mrb[0].mxu0
        %v485 = vadd.f32 0.0, %v484
        %v486 = vpop.f32.mrb[0].mxu0
        %v487 = vadd.f32 0.0, %v486
        %488 = vmatprep.mubr.bf16.mxu0 0
        %489 = vmatmul.mubr.bf16.gmra.mrb[0].mxu0 %v395
        %v490 = vpop.f32.mrb[0].mxu0
        %v491 = vadd.f32 0.0, %v490
        %v492 = vpop.f32.mrb[0].mxu0
        %v493 = vadd.f32 0.0, %v492
        %v494 = vpop.f32.mrb[0].mxu0
        %v495 = vadd.f32 0.0, %v494
        %v496 = vpop.f32.mrb[0].mxu0
        %v497 = vadd.f32 0.0, %v496
        %498 = vmatprep.mubr.bf16.mxu0 0
        %499 = vmatmul.mubr.bf16.gmra.mrb[0].mxu0 %v398
        %v500 = vpop.f32.mrb[0].mxu0
        %v501 = vadd.f32 0.0, %v500
        %v502 = vpop.f32.mrb[0].mxu0
        %v503 = vadd.f32 0.0, %v502
        %v504 = vpop.f32.mrb[0].mxu0
        %v505 = vadd.f32 0.0, %v504
        %v506 = vpop.f32.mrb[0].mxu0
        %v507 = vadd.f32 0.0, %v506
        %508 = vmatprep.mubr.bf16.mxu0 0
        %509 = vmatmul.mubr.bf16.gmra.mrb[0].mxu0 %v401
        %v510 = vpop.f32.mrb[0].mxu0
        %v511 = vadd.f32 0.0, %v510
        %v512 = vpop.f32.mrb[0].mxu0
        %v513 = vadd.f32 0.0, %v512
        %v514 = vpop.f32.mrb[0].mxu0
        %v515 = vadd.f32 0.0, %v514
        %v516 = vpop.f32.mrb[0].mxu0
        %v517 = vadd.f32 0.0, %v516
        %518 = vmatprep.mubr.bf16.mxu0 0
        %519 = vmatmul.mubr.bf16.gmra.mrb[0].mxu0 %v404
        %v520 = vpop.f32.mrb[0].mxu0
        %v521 = vadd.f32 0.0, %v520
        %v522 = vpop.f32.mrb[0].mxu0
        %v523 = vadd.f32 0.0, %v522
        %v524 = vpop.f32.mrb[0].mxu0
        %v525 = vadd.f32 0.0, %v524
        %v526 = vpop.f32.mrb[0].mxu0
        %v527 = vadd.f32 0.0, %v526
        %528 = vmatprep.mubr.bf16.mxu0 0
        %529 = vmatmul.mubr.bf16.gmra.mrb[0].mxu0 %v407
        %v530 = vpop.f32.mrb[0].mxu0
        %v531 = vadd.f32 0.0, %v530
        %v532 = vpop.f32.mrb[0].mxu0
        %v533 = vadd.f32 0.0, %v532
        %v534 = vpop.f32.mrb[0].mxu0
        %v535 = vadd.f32 0.0, %v534
        %v536 = vpop.f32.mrb[0].mxu0
        %v537 = vadd.f32 0.0, %v536
        %538 = vmatprep.mubr.bf16.mxu0 0
        %539 = vmatmul.mubr.bf16.gmra.mrb[0].mxu0 %v410
        %v540 = vpop.f32.mrb[0].mxu0
        %v541 = vadd.f32 0.0, %v540
        %v542 = vpop.f32.mrb[0].mxu0
        %v543 = vadd.f32 0.0, %v542
        %v544 = vpop.f32.mrb[0].mxu0
        %v545 = vadd.f32 0.0, %v544
        %v546 = vpop.f32.mrb[0].mxu0
        %v547 = vadd.f32 0.0, %v546
        %548 = vmatprep.mubr.bf16.mxu0 0
        %549 = vmatmul.mubr.bf16.gmra.mrb[0].mxu0 %v413
        %v550 = vpop.f32.mrb[0].mxu0
        %v551 = vadd.f32 0.0, %v550
        %v552 = vpop.f32.mrb[0].mxu0
        %v553 = vadd.f32 0.0, %v552
        %v554 = vpop.f32.mrb[0].mxu0
        %v555 = vadd.f32 0.0, %v554
        %v556 = vpop.f32.mrb[0].mxu0
        %v557 = vadd.f32 0.0, %v556
        %558 = vmatprep.mubr.bf16.mxu0 0
        %559 = vmatmul.mubr.bf16.gmra.mrb[0].mxu0 %v416
        %v560 = vpop.f32.mrb[0].mxu0
        %v561 = vadd.f32 0.0, %v560
        %v562 = vpop.f32.mrb[0].mxu0
        %v563 = vadd.f32 0.0, %v562
        %v564 = vpop.f32.mrb[0].mxu0
        %v565 = vadd.f32 0.0, %v564
        %v566 = vpop.f32.mrb[0].mxu0
        %v567 = vadd.f32 0.0, %v566
        %568 = vmatprep.mubr.bf16.mxu0 0
        %569 = vmatmul.mubr.bf16.gmra.mrb[0].mxu0 %v419
        %v570 = vpop.f32.mrb[0].mxu0
        %v571 = vadd.f32 0.0, %v570
        %v572 = vpop.f32.mrb[0].mxu0
        %v573 = vadd.f32 0.0, %v572
        %v574 = vpop.f32.mrb[0].mxu0
        %v575 = vadd.f32 0.0, %v574
        %v576 = vpop.f32.mrb[0].mxu0
        %v577 = vadd.f32 0.0, %v576
        %578 = vmatprep.mubr.bf16.mxu0 0
        %579 = vmatmul.mubr.bf16.gmra.mrb[0].mxu0 %v422
        %v580 = vpop.f32.mrb[0].mxu0
        %v581 = vadd.f32 0.0, %v580
        %v582 = vpop.f32.mrb[0].mxu0
        %v583 = vadd.f32 0.0, %v582
        %v584 = vpop.f32.mrb[0].mxu0
        %v585 = vadd.f32 0.0, %v584
        %v586 = vpop.f32.mrb[0].mxu0
        %v587 = vadd.f32 0.0, %v586
        %588 = vmatprep.mubr.bf16.mxu0 0
        %589 = vmatmul.mubr.bf16.gmra.mrb[0].mxu0 %v425
        %v590 = vpop.f32.mrb[0].mxu0
        %v591 = vadd.f32 0.0, %v590
        %v592 = vpop.f32.mrb[0].mxu0
        %v593 = vadd.f32 0.0, %v592
        %v594 = vpop.f32.mrb[0].mxu0
        %v595 = vadd.f32 0.0, %v594
        %v596 = vpop.f32.mrb[0].mxu0
        %v597 = vadd.f32 0.0, %v596
        %598 = vmatprep.mubr.bf16.mxu0 0
        %599 = vmatmul.mubr.bf16.gmra.mrb[0].mxu0 %v428
        %v600 = vpop.f32.mrb[0].mxu0
        %v601 = vadd.f32 0.0, %v600
        %v602 = vpop.f32.mrb[0].mxu0
        %v603 = vadd.f32 0.0, %v602
        %v604 = vpop.f32.mrb[0].mxu0
        %v605 = vadd.f32 0.0, %v604
        %v606 = vpop.f32.mrb[0].mxu0
        %v607 = vadd.f32 0.0, %v606
        %608 = vmatprep.mubr.bf16.mxu0 0
        %609 = vmatmul.mubr.bf16.gmra.mrb[0].mxu0 %v431
        %v610 = vpop.f32.mrb[0].mxu0
        %v611 = vadd.f32 0.0, %v610
        %v612 = vpop.f32.mrb[0].mxu0
        %v613 = vadd.f32 0.0, %v612
        %v614 = vpop.f32.mrb[0].mxu0
        %v615 = vadd.f32 0.0, %v614
        %v616 = vpop.f32.mrb[0].mxu0
        %v617 = vadd.f32 0.0, %v616
        %618 = vmatprep.mubr.bf16.mxu0 0
        %619 = vmatmul.mubr.bf16.gmra.mrb[0].mxu0 %v434
        %v620 = vpop.f32.mrb[0].mxu0
        %v621 = vadd.f32 0.0, %v620
        %v622 = vpop.f32.mrb[0].mxu0
        %v623 = vadd.f32 0.0, %v622
        %v624 = vpop.f32.mrb[0].mxu0
        %v625 = vadd.f32 0.0, %v624
        %v626 = vpop.f32.mrb[0].mxu0
        %v627 = vadd.f32 0.0, %v626
        %628 = vmatprep.mubr.bf16.mxu0 0
        %629 = vmatmul.mubr.bf16.gmra.mrb[0].mxu0 %v437
        %v630 = vpop.f32.mrb[0].mxu0
        %v631 = vadd.f32 0.0, %v630
        %v632 = vpop.f32.mrb[0].mxu0
        %v633 = vadd.f32 0.0, %v632
        %v634 = vpop.f32.mrb[0].mxu0
        %v635 = vadd.f32 0.0, %v634
        %v636 = vpop.f32.mrb[0].mxu0
        %v637 = vadd.f32 0.0, %v636
        %638 = vdwg.mxu0
        %v639 = vld [vmem:[%s2] sm:$0x3]
        %v641 = vlaneseq
        %v642 = vshrl.u32 %v641, 7
        %v643 = vsub.s32 0, %v642
        %v644 = vrot.slane %v639, %v643
        %v645 = vlaneseq
        %v646 = vshrl.u32 %v645, 7
        %v647 = vsub.s32 1, %v646
        %v648 = vrot.slane %v639, %v647
        %v651 = vadd.f32 %v481, %v644
        %v652 = vadd.f32 %v483, %v648
        %v653 = vadd.f32 %v485, %v644
        %v654 = vadd.f32 %v487, %v648
        %v655 = vadd.f32 %v491, %v644
        %v656 = vadd.f32 %v493, %v648
        %v657 = vadd.f32 %v495, %v644
        %v658 = vadd.f32 %v497, %v648
        %v659 = vadd.f32 %v501, %v644
        %v660 = vadd.f32 %v503, %v648
        %v661 = vadd.f32 %v505, %v644
        %v662 = vadd.f32 %v507, %v648
        %v663 = vadd.f32 %v511, %v644
        %v664 = vadd.f32 %v513, %v648
        %v665 = vadd.f32 %v515, %v644
        %v666 = vadd.f32 %v517, %v648
        %v667 = vadd.f32 %v521, %v644
        %v668 = vadd.f32 %v523, %v648
        %v669 = vadd.f32 %v525, %v644
        %v670 = vadd.f32 %v527, %v648
        %v671 = vadd.f32 %v531, %v644
        %v672 = vadd.f32 %v533, %v648
        %v673 = vadd.f32 %v535, %v644
        %v674 = vadd.f32 %v537, %v648
        %v675 = vadd.f32 %v541, %v644
        %v676 = vadd.f32 %v543, %v648
        %v677 = vadd.f32 %v545, %v644
        %v678 = vadd.f32 %v547, %v648
        %v679 = vadd.f32 %v551, %v644
        %v680 = vadd.f32 %v553, %v648
        %v681 = vadd.f32 %v555, %v644
        %v682 = vadd.f32 %v557, %v648
        %v683 = vadd.f32 %v561, %v644
        %v684 = vadd.f32 %v563, %v648
        %v685 = vadd.f32 %v565, %v644
        %v686 = vadd.f32 %v567, %v648
        %v687 = vadd.f32 %v571, %v644
        %v688 = vadd.f32 %v573, %v648
        %v689 = vadd.f32 %v575, %v644
        %v690 = vadd.f32 %v577, %v648
        %v691 = vadd.f32 %v581, %v644
        %v692 = vadd.f32 %v583, %v648
        %v693 = vadd.f32 %v585, %v644
        %v694 = vadd.f32 %v587, %v648
        %v695 = vadd.f32 %v591, %v644
        %v696 = vadd.f32 %v593, %v648
        %v697 = vadd.f32 %v595, %v644
        %v698 = vadd.f32 %v597, %v648
        %v699 = vadd.f32 %v601, %v644
        %v700 = vadd.f32 %v603, %v648
        %v701 = vadd.f32 %v605, %v644
        %v702 = vadd.f32 %v607, %v648
        %v703 = vadd.f32 %v611, %v644
        %v704 = vadd.f32 %v613, %v648
        %v705 = vadd.f32 %v615, %v644
        %v706 = vadd.f32 %v617, %v648
        %v707 = vadd.f32 %v621, %v644
        %v708 = vadd.f32 %v623, %v648
        %v709 = vadd.f32 %v625, %v644
        %v710 = vadd.f32 %v627, %v648
        %v711 = vadd.f32 %v631, %v644
        %v712 = vadd.f32 %v633, %v648
        %v713 = vadd.f32 %v635, %v644
        %v714 = vadd.f32 %v637, %v648
        %v715 = vmax.f32 %v651, 0.0
        %v716 = vmax.f32 %v652, 0.0
        %v717 = vmax.f32 %v653, 0.0
        %v718 = vmax.f32 %v654, 0.0
        %v719 = vmax.f32 %v655, 0.0
        %v720 = vmax.f32 %v656, 0.0
        %v721 = vmax.f32 %v657, 0.0
        %v722 = vmax.f32 %v658, 0.0
        %v723 = vmax.f32 %v659, 0.0
        %v724 = vmax.f32 %v660, 0.0
        %v725 = vmax.f32 %v661, 0.0
        %v726 = vmax.f32 %v662, 0.0
        %v727 = vmax.f32 %v663, 0.0
        %v728 = vmax.f32 %v664, 0.0
        %v729 = vmax.f32 %v665, 0.0
        %v730 = vmax.f32 %v666, 0.0
        %v731 = vmax.f32 %v667, 0.0
        %v732 = vmax.f32 %v668, 0.0
        %v733 = vmax.f32 %v669, 0.0
        %v734 = vmax.f32 %v670, 0.0
        %v735 = vmax.f32 %v671, 0.0
        %v736 = vmax.f32 %v672, 0.0
        %v737 = vmax.f32 %v673, 0.0
        %v738 = vmax.f32 %v674, 0.0
        %v739 = vmax.f32 %v675, 0.0
        %v740 = vmax.f32 %v676, 0.0
        %v741 = vmax.f32 %v677, 0.0
        %v742 = vmax.f32 %v678, 0.0
        %v743 = vmax.f32 %v679, 0.0
        %v744 = vmax.f32 %v680, 0.0
        %v745 = vmax.f32 %v681, 0.0
        %v746 = vmax.f32 %v682, 0.0
        %v747 = vmax.f32 %v683, 0.0
        %v748 = vmax.f32 %v684, 0.0
        %v749 = vmax.f32 %v685, 0.0
        %v750 = vmax.f32 %v686, 0.0
        %v751 = vmax.f32 %v687, 0.0
        %v752 = vmax.f32 %v688, 0.0
        %v753 = vmax.f32 %v689, 0.0
        %v754 = vmax.f32 %v690, 0.0
        %v755 = vmax.f32 %v691, 0.0
        %v756 = vmax.f32 %v692, 0.0
        %v757 = vmax.f32 %v693, 0.0
        %v758 = vmax.f32 %v694, 0.0
        %v759 = vmax.f32 %v695, 0.0
        %v760 = vmax.f32 %v696, 0.0
        %v761 = vmax.f32 %v697, 0.0
        %v762 = vmax.f32 %v698, 0.0
        %v763 = vmax.f32 %v699, 0.0
        %v764 = vmax.f32 %v700, 0.0
        %v765 = vmax.f32 %v701, 0.0
        %v766 = vmax.f32 %v702, 0.0
        %v767 = vmax.f32 %v703, 0.0
        %v768 = vmax.f32 %v704, 0.0
        %v769 = vmax.f32 %v705, 0.0
        %v770 = vmax.f32 %v706, 0.0
        %v771 = vmax.f32 %v707, 0.0
        %v772 = vmax.f32 %v708, 0.0
        %v773 = vmax.f32 %v709, 0.0
        %v774 = vmax.f32 %v710, 0.0
        %v775 = vmax.f32 %v711, 0.0
        %v776 = vmax.f32 %v712, 0.0
        %v777 = vmax.f32 %v713, 0.0
        %v778 = vmax.f32 %v714, 0.0
        %v779 = vld [vmem:[%s3] sm:$0xf]
        %v780 = vld [vmem:[%s3 + $0x4] sm:$0xf]
        %v781 = vld [vmem:[%s3 + $0x8] sm:$0xf]
        %v782 = vld [vmem:[%s3 + $0xc] sm:$0xf]
        %v783 = vld [vmem:[%s3 + $0x10] sm:$0xf]
        %v784 = vld [vmem:[%s3 + $0x14] sm:$0xf]
        %v785 = vld [vmem:[%s3 + $0x18] sm:$0xf]
        %v786 = vld [vmem:[%s3 + $0x1c] sm:$0xf]
        %v787 = vld [vmem:[%s3 + $0x20] sm:$0xf]
        %v788 = vld [vmem:[%s3 + $0x24] sm:$0xf]
        %v789 = vld [vmem:[%s3 + $0x28] sm:$0xf]
        %v790 = vld [vmem:[%s3 + $0x2c] sm:$0xf]
        %v791 = vld [vmem:[%s3 + $0x30] sm:$0xf]
        %v792 = vld [vmem:[%s3 + $0x34] sm:$0xf]
        %v793 = vld [vmem:[%s3 + $0x38] sm:$0xf]
        %v794 = vld [vmem:[%s3 + $0x3c] sm:$0xf]
        %v795 = vld [vmem:[%s3 + $0x40] sm:$0xf]
        %v796 = vld [vmem:[%s3 + $0x44] sm:$0xf]
        %v797 = vld [vmem:[%s3 + $0x48] sm:$0xf]
        %v798 = vld [vmem:[%s3 + $0x4c] sm:$0xf]
        %v799 = vld [vmem:[%s3 + $0x50] sm:$0xf]
        %v800 = vld [vmem:[%s3 + $0x54] sm:$0xf]
        %v801 = vld [vmem:[%s3 + $0x58] sm:$0xf]
        %v802 = vld [vmem:[%s3 + $0x5c] sm:$0xf]
        %v803 = vld [vmem:[%s4] sm:$0x1]
        %vm836 = vcmask 1040384
        %v837 = vrot.slane %v715, 7
        %v838 = vrot.slane %v717, 7
        %v839 = vsel %vm836, %v837, %v838
        %v840 = vrot.slane %v719, 7
        %v841 = vrot.slane %v721, 7
        %v842 = vsel %vm836, %v840, %v841
        %v843 = vrot.slane %v723, 7
        %v844 = vrot.slane %v725, 7
        %v845 = vsel %vm836, %v843, %v844
        %v846 = vrot.slane %v727, 7
        %v847 = vrot.slane %v729, 7
        %v848 = vsel %vm836, %v846, %v847
        %v849 = vrot.slane %v731, 7
        %v850 = vrot.slane %v733, 7
        %v851 = vsel %vm836, %v849, %v850
        %v852 = vrot.slane %v735, 7
        %v853 = vrot.slane %v737, 7
        %v854 = vsel %vm836, %v852, %v853
        %v855 = vrot.slane %v739, 7
        %v856 = vrot.slane %v741, 7
        %v857 = vsel %vm836, %v855, %v856
        %v858 = vrot.slane %v743, 7
        %v859 = vrot.slane %v745, 7
        %v860 = vsel %vm836, %v858, %v859
        %v861 = vrot.slane %v747, 7
        %v862 = vrot.slane %v749, 7
        %v863 = vsel %vm836, %v861, %v862
        %v864 = vrot.slane %v751, 7
        %v865 = vrot.slane %v753, 7
        %v866 = vsel %vm836, %v864, %v865
        %v867 = vrot.slane %v755, 7
        %v868 = vrot.slane %v757, 7
        %v869 = vsel %vm836, %v867, %v868
        %v870 = vrot.slane %v759, 7
        %v871 = vrot.slane %v761, 7
        %v872 = vsel %vm836, %v870, %v871
        %v873 = vrot.slane %v763, 7
        %v874 = vrot.slane %v765, 7
        %v875 = vsel %vm836, %v873, %v874
        %v876 = vrot.slane %v767, 7
        %v877 = vrot.slane %v769, 7
        %v878 = vsel %vm836, %v876, %v877
        %v879 = vrot.slane %v771, 7
        %v880 = vrot.slane %v773, 7
        %v881 = vsel %vm836, %v879, %v880
        %v882 = vrot.slane %v775, 7
        %v883 = vrot.slane %v777, 7
        %v884 = vsel %vm836, %v882, %v883
        %885 = vrot.lane.b32.xlu0 %v837, 64
        %v886 = vpop.permute.xlu0 %885
        %887 = vrot.lane.b32.xlu0 %v839, 64
        %v888 = vpop.permute.xlu0 %887
        %889 = vrot.lane.b32.xlu0 %v840, 64
        %v890 = vpop.permute.xlu0 %889
        %891 = vrot.lane.b32.xlu0 %v842, 64
        %v892 = vpop.permute.xlu0 %891
        %893 = vrot.lane.b32.xlu0 %v843, 64
        %v894 = vpop.permute.xlu0 %893
        %895 = vrot.lane.b32.xlu0 %v845, 64
        %v896 = vpop.permute.xlu0 %895
        %897 = vrot.lane.b32.xlu0 %v846, 64
        %v898 = vpop.permute.xlu0 %897
        %899 = vrot.lane.b32.xlu0 %v848, 64
        %v900 = vpop.permute.xlu0 %899
        %901 = vrot.lane.b32.xlu0 %v849, 64
        %v902 = vpop.permute.xlu0 %901
        %903 = vrot.lane.b32.xlu0 %v851, 64
        %v904 = vpop.permute.xlu0 %903
        %905 = vrot.lane.b32.xlu0 %v852, 64
        %v906 = vpop.permute.xlu0 %905
        %907 = vrot.lane.b32.xlu0 %v854, 64
        %v908 = vpop.permute.xlu0 %907
        %909 = vrot.lane.b32.xlu0 %v855, 64
        %v910 = vpop.permute.xlu0 %909
        %911 = vrot.lane.b32.xlu0 %v857, 64
        %v912 = vpop.permute.xlu0 %911
        %913 = vrot.lane.b32.xlu0 %v858, 64
        %v914 = vpop.permute.xlu0 %913
        %915 = vrot.lane.b32.xlu0 %v860, 64
        %v916 = vpop.permute.xlu0 %915
        %917 = vrot.lane.b32.xlu0 %v861, 64
        %v918 = vpop.permute.xlu0 %917
        %919 = vrot.lane.b32.xlu0 %v863, 64
        %v920 = vpop.permute.xlu0 %919
        %921 = vrot.lane.b32.xlu0 %v864, 64
        %v922 = vpop.permute.xlu0 %921
        %923 = vrot.lane.b32.xlu0 %v866, 64
        %v924 = vpop.permute.xlu0 %923
        %925 = vrot.lane.b32.xlu0 %v867, 64
        %v926 = vpop.permute.xlu0 %925
        %927 = vrot.lane.b32.xlu0 %v869, 64
        %v928 = vpop.permute.xlu0 %927
        %929 = vrot.lane.b32.xlu0 %v870, 64
        %v930 = vpop.permute.xlu0 %929
        %931 = vrot.lane.b32.xlu0 %v872, 64
        %v932 = vpop.permute.xlu0 %931
        %933 = vrot.lane.b32.xlu0 %v873, 64
        %v934 = vpop.permute.xlu0 %933
        %935 = vrot.lane.b32.xlu0 %v875, 64
        %v936 = vpop.permute.xlu0 %935
        %937 = vrot.lane.b32.xlu0 %v876, 64
        %v938 = vpop.permute.xlu0 %937
        %939 = vrot.lane.b32.xlu0 %v878, 64
        %v940 = vpop.permute.xlu0 %939
        %941 = vrot.lane.b32.xlu0 %v879, 64
        %v942 = vpop.permute.xlu0 %941
        %943 = vrot.lane.b32.xlu0 %v881, 64
        %v944 = vpop.permute.xlu0 %943
        %945 = vrot.lane.b32.xlu0 %v882, 64
        %v946 = vpop.permute.xlu0 %945
        %947 = vrot.lane.b32.xlu0 %v884, 64
        %v948 = vpop.permute.xlu0 %947
        %v981 = vsel %vm836, 0.0, %v886
        %v982 = vsel %vm836, 0.0, %v890
        %v983 = vsel %vm836, 0.0, %v894
        %v984 = vsel %vm836, 0.0, %v898
        %v985 = vsel %vm836, 0.0, %v902
        %v986 = vsel %vm836, 0.0, %v906
        %v987 = vsel %vm836, 0.0, %v910
        %v988 = vsel %vm836, 0.0, %v914
        %v989 = vsel %vm836, 0.0, %v918
        %v990 = vsel %vm836, 0.0, %v922
        %v991 = vsel %vm836, 0.0, %v926
        %v992 = vsel %vm836, 0.0, %v930
        %v993 = vsel %vm836, 0.0, %v934
        %v994 = vsel %vm836, 0.0, %v938
        %v995 = vsel %vm836, 0.0, %v942
        %v996 = vsel %vm836, 0.0, %v946
        %vm997 = vcmask 1046528
        %v998 = vrot.slane %v715, 1
        %v999 = vrot.slane %v717, 1
        %v1000 = vsel %vm997, %v998, %v999
        %v1001 = vrot.slane %v719, 1
        %v1002 = vrot.slane %v721, 1
        %v1003 = vsel %vm997, %v1001, %v1002
        %v1004 = vrot.slane %v723, 1
        %v1005 = vrot.slane %v725, 1
        %v1006 = vsel %vm997, %v1004, %v1005
        %v1007 = vrot.slane %v727, 1
        %v1008 = vrot.slane %v729, 1
        %v1009 = vsel %vm997, %v1007, %v1008
        %v1010 = vrot.slane %v731, 1
        %v1011 = vrot.slane %v733, 1
        %v1012 = vsel %vm997, %v1010, %v1011
        %v1013 = vrot.slane %v735, 1
        %v1014 = vrot.slane %v737, 1
        %v1015 = vsel %vm997, %v1013, %v1014
        %v1016 = vrot.slane %v739, 1
        %v1017 = vrot.slane %v741, 1
        %v1018 = vsel %vm997, %v1016, %v1017
        %v1019 = vrot.slane %v743, 1
        %v1020 = vrot.slane %v745, 1
        %v1021 = vsel %vm997, %v1019, %v1020
        %v1022 = vrot.slane %v747, 1
        %v1023 = vrot.slane %v749, 1
        %v1024 = vsel %vm997, %v1022, %v1023
        %v1025 = vrot.slane %v751, 1
        %v1026 = vrot.slane %v753, 1
        %v1027 = vsel %vm997, %v1025, %v1026
        %v1028 = vrot.slane %v755, 1
        %v1029 = vrot.slane %v757, 1
        %v1030 = vsel %vm997, %v1028, %v1029
        %v1031 = vrot.slane %v759, 1
        %v1032 = vrot.slane %v761, 1
        %v1033 = vsel %vm997, %v1031, %v1032
        %v1034 = vrot.slane %v763, 1
        %v1035 = vrot.slane %v765, 1
        %v1036 = vsel %vm997, %v1034, %v1035
        %v1037 = vrot.slane %v767, 1
        %v1038 = vrot.slane %v769, 1
        %v1039 = vsel %vm997, %v1037, %v1038
        %v1040 = vrot.slane %v771, 1
        %v1041 = vrot.slane %v773, 1
        %v1042 = vsel %vm997, %v1040, %v1041
        %v1043 = vrot.slane %v775, 1
        %v1044 = vrot.slane %v777, 1
        %v1045 = vsel %vm997, %v1043, %v1044
        %v1062 = vsel %vm997, %v999, 0.0
        %v1063 = vsel %vm997, %v1002, 0.0
        %v1064 = vsel %vm997, %v1005, 0.0
        %v1065 = vsel %vm997, %v1008, 0.0
        %v1066 = vsel %vm997, %v1011, 0.0
        %v1067 = vsel %vm997, %v1014, 0.0
        %v1068 = vsel %vm997, %v1017, 0.0
        %v1069 = vsel %vm997, %v1020, 0.0
        %v1070 = vsel %vm997, %v1023, 0.0
        %v1071 = vsel %vm997, %v1026, 0.0
        %v1072 = vsel %vm997, %v1029, 0.0
        %v1073 = vsel %vm997, %v1032, 0.0
        %v1074 = vsel %vm997, %v1035, 0.0
        %v1075 = vsel %vm997, %v1038, 0.0
        %v1076 = vsel %vm997, %v1041, 0.0
        %v1077 = vsel %vm997, %v1044, 0.0
        %1094 = vrot.lane.b32.xlu0 %v1000, 64
        %v1095 = vpop.permute.xlu0 %1094
        %1096 = vrot.lane.b32.xlu0 %v1062, 64
        %v1097 = vpop.permute.xlu0 %1096
        %1098 = vrot.lane.b32.xlu0 %v1003, 64
        %v1099 = vpop.permute.xlu0 %1098
        %1100 = vrot.lane.b32.xlu0 %v1063, 64
        %v1101 = vpop.permute.xlu0 %1100
        %1102 = vrot.lane.b32.xlu0 %v1006, 64
        %v1103 = vpop.permute.xlu0 %1102
        %1104 = vrot.lane.b32.xlu0 %v1064, 64
        %v1105 = vpop.permute.xlu0 %1104
        %1106 = vrot.lane.b32.xlu0 %v1009, 64
        %v1107 = vpop.permute.xlu0 %1106
        %1108 = vrot.lane.b32.xlu0 %v1065, 64
        %v1109 = vpop.permute.xlu0 %1108
        %1110 = vrot.lane.b32.xlu0 %v1012, 64
        %v1111 = vpop.permute.xlu0 %1110
        %1112 = vrot.lane.b32.xlu0 %v1066, 64
        %v1113 = vpop.permute.xlu0 %1112
        %1114 = vrot.lane.b32.xlu0 %v1015, 64
        %v1115 = vpop.permute.xlu0 %1114
        %1116 = vrot.lane.b32.xlu0 %v1067, 64
        %v1117 = vpop.permute.xlu0 %1116
        %1118 = vrot.lane.b32.xlu0 %v1018, 64
        %v1119 = vpop.permute.xlu0 %1118
        %1120 = vrot.lane.b32.xlu0 %v1068, 64
        %v1121 = vpop.permute.xlu0 %1120
        %1122 = vrot.lane.b32.xlu0 %v1021, 64
        %v1123 = vpop.permute.xlu0 %1122
        %1124 = vrot.lane.b32.xlu0 %v1069, 64
        %v1125 = vpop.permute.xlu0 %1124
        %1126 = vrot.lane.b32.xlu0 %v1024, 64
        %v1127 = vpop.permute.xlu0 %1126
        %1128 = vrot.lane.b32.xlu0 %v1070, 64
        %v1129 = vpop.permute.xlu0 %1128
        %1130 = vrot.lane.b32.xlu0 %v1027, 64
        %v1131 = vpop.permute.xlu0 %1130
        %1132 = vrot.lane.b32.xlu0 %v1071, 64
        %v1133 = vpop.permute.xlu0 %1132
        %1134 = vrot.lane.b32.xlu0 %v1030, 64
        %v1135 = vpop.permute.xlu0 %1134
        %1136 = vrot.lane.b32.xlu0 %v1072, 64
        %v1137 = vpop.permute.xlu0 %1136
        %1138 = vrot.lane.b32.xlu0 %v1033, 64
        %v1139 = vpop.permute.xlu0 %1138
        %1140 = vrot.lane.b32.xlu0 %v1073, 64
        %v1141 = vpop.permute.xlu0 %1140
        %1142 = vrot.lane.b32.xlu0 %v1036, 64
        %v1143 = vpop.permute.xlu0 %1142
        %1144 = vrot.lane.b32.xlu0 %v1074, 64
        %v1145 = vpop.permute.xlu0 %1144
        %1146 = vrot.lane.b32.xlu0 %v1039, 64
        %v1147 = vpop.permute.xlu0 %1146
        %1148 = vrot.lane.b32.xlu0 %v1075, 64
        %v1149 = vpop.permute.xlu0 %1148
        %1150 = vrot.lane.b32.xlu0 %v1042, 64
        %v1151 = vpop.permute.xlu0 %1150
        %1152 = vrot.lane.b32.xlu0 %v1076, 64
        %v1153 = vpop.permute.xlu0 %1152
        %1154 = vrot.lane.b32.xlu0 %v1045, 64
        %v1155 = vpop.permute.xlu0 %1154
        %1156 = vrot.lane.b32.xlu0 %v1077, 64
        %v1157 = vpop.permute.xlu0 %1156
        %vm1190 = vcmask 523264
        %v1191 = vsel %vm1190, %v981, %v715
        %v1192 = vsel %vm1190, %v888, %v717
        %v1193 = vsel %vm1190, %v982, %v719
        %v1194 = vsel %vm1190, %v892, %v721
        %v1195 = vsel %vm1190, %v983, %v723
        %v1196 = vsel %vm1190, %v896, %v725
        %v1197 = vsel %vm1190, %v984, %v727
        %v1198 = vsel %vm1190, %v900, %v729
        %v1199 = vsel %vm1190, %v985, %v731
        %v1200 = vsel %vm1190, %v904, %v733
        %v1201 = vsel %vm1190, %v986, %v735
        %v1202 = vsel %vm1190, %v908, %v737
        %v1203 = vsel %vm1190, %v987, %v739
        %v1204 = vsel %vm1190, %v912, %v741
        %v1205 = vsel %vm1190, %v988, %v743
        %v1206 = vsel %vm1190, %v916, %v745
        %v1207 = vsel %vm1190, %v989, %v747
        %v1208 = vsel %vm1190, %v920, %v749
        %v1209 = vsel %vm1190, %v990, %v751
        %v1210 = vsel %vm1190, %v924, %v753
        %v1211 = vsel %vm1190, %v991, %v755
        %v1212 = vsel %vm1190, %v928, %v757
        %v1213 = vsel %vm1190, %v992, %v759
        %v1214 = vsel %vm1190, %v932, %v761
        %v1215 = vsel %vm1190, %v993, %v763
        %v1216 = vsel %vm1190, %v936, %v765
        %v1217 = vsel %vm1190, %v994, %v767
        %v1218 = vsel %vm1190, %v940, %v769
        %v1219 = vsel %vm1190, %v995, %v771
        %v1220 = vsel %vm1190, %v944, %v773
        %v1221 = vsel %vm1190, %v996, %v775
        %v1222 = vsel %vm1190, %v948, %v777
        %v1223 = vpack.c.bf16 %v1192, %v1191
        %v1224 = vpack.c.bf16 %v1097, %v1095
        %v1225 = vpack.c.bf16 %v1194, %v1193
        %v1226 = vpack.c.bf16 %v1101, %v1099
        %v1227 = vpack.c.bf16 %v1196, %v1195
        %v1228 = vpack.c.bf16 %v1105, %v1103
        %v1229 = vpack.c.bf16 %v1198, %v1197
        %v1230 = vpack.c.bf16 %v1109, %v1107
        %v1231 = vpack.c.bf16 %v1200, %v1199
        %v1232 = vpack.c.bf16 %v1113, %v1111
        %v1233 = vpack.c.bf16 %v1202, %v1201
        %v1234 = vpack.c.bf16 %v1117, %v1115
        %v1235 = vpack.c.bf16 %v1204, %v1203
        %v1236 = vpack.c.bf16 %v1121, %v1119
        %v1237 = vpack.c.bf16 %v1206, %v1205
        %v1238 = vpack.c.bf16 %v1125, %v1123
        %v1239 = vpack.c.bf16 %v1208, %v1207
        %v1240 = vpack.c.bf16 %v1129, %v1127
        %v1241 = vpack.c.bf16 %v1210, %v1209
        %v1242 = vpack.c.bf16 %v1133, %v1131
        %v1243 = vpack.c.bf16 %v1212, %v1211
        %v1244 = vpack.c.bf16 %v1137, %v1135
        %v1245 = vpack.c.bf16 %v1214, %v1213
        %v1246 = vpack.c.bf16 %v1141, %v1139
        %v1247 = vpack.c.bf16 %v1216, %v1215
        %v1248 = vpack.c.bf16 %v1145, %v1143
        %v1249 = vpack.c.bf16 %v1218, %v1217
        %v1250 = vpack.c.bf16 %v1149, %v1147
        %v1251 = vpack.c.bf16 %v1220, %v1219
        %v1252 = vpack.c.bf16 %v1153, %v1151
        %v1253 = vpack.c.bf16 %v1222, %v1221
        %v1254 = vpack.c.bf16 %v1157, %v1155
        %v1256 = vlaneseq
        %v1257 = vshrl.u32 %v1256, 7
        %v1258 = vsub.s32 0, %v1257
        %v1259 = vrot.slane %v803, %v1258
        %v1285 = vunpack.c.l.b16 %v779
        %v1286 = vunpack.c.l.b16 %v780
        %v1287 = vunpack.c.l.b16 %v781
        %v1288 = vunpack.c.l.b16 %v782
        %v1289 = vunpack.c.l.b16 %v783
        %v1290 = vunpack.c.l.b16 %v784
        %v1291 = vunpack.c.l.b16 %v785
        %v1292 = vunpack.c.l.b16 %v786
        %v1293 = vunpack.c.l.b16 %v787
        %v1294 = vunpack.c.l.b16 %v788
        %v1295 = vunpack.c.l.b16 %v789
        %v1296 = vunpack.c.l.b16 %v790
        %v1297 = vunpack.c.l.b16 %v791
        %v1298 = vunpack.c.l.b16 %v792
        %v1299 = vunpack.c.l.b16 %v793
        %v1300 = vunpack.c.l.b16 %v794
        %v1301 = vunpack.c.l.b16 %v795
        %v1302 = vunpack.c.l.b16 %v796
        %v1303 = vunpack.c.l.b16 %v797
        %v1304 = vunpack.c.l.b16 %v798
        %v1305 = vunpack.c.l.b16 %v799
        %v1306 = vunpack.c.l.b16 %v800
        %v1307 = vunpack.c.l.b16 %v801
        %v1308 = vunpack.c.l.b16 %v802
        %v1309 = vpack.c.b16 %v1286, %v1285
        %v1310 = vpack.c.b16 %v1288, %v1287
        %v1311 = vpack.c.b16 %v1290, %v1289
        %v1312 = vpack.c.b16 %v1292, %v1291
        %v1313 = vpack.c.b16 %v1294, %v1293
        %v1314 = vpack.c.b16 %v1296, %v1295
        %v1315 = vpack.c.b16 %v1298, %v1297
        %v1316 = vpack.c.b16 %v1300, %v1299
        %v1317 = vpack.c.b16 %v1302, %v1301
        %v1318 = vpack.c.b16 %v1304, %v1303
        %v1319 = vpack.c.b16 %v1306, %v1305
        %v1320 = vpack.c.b16 %v1308, %v1307
        %v1334 = vsel %vm1190, %v1224, 0
        %v1337 = vsel %vm1190, %v1226, 0
        %v1340 = vsel %vm1190, %v1228, 0
        %v1343 = vsel %vm1190, %v1230, 0
        %v1346 = vsel %vm1190, %v1232, 0
        %v1349 = vsel %vm1190, %v1234, 0
        %v1352 = vsel %vm1190, %v1236, 0
        %v1355 = vsel %vm1190, %v1238, 0
        %v1358 = vsel %vm1190, %v1240, 0
        %v1361 = vsel %vm1190, %v1242, 0
        %v1364 = vsel %vm1190, %v1244, 0
        %v1367 = vsel %vm1190, %v1246, 0
        %v1370 = vsel %vm1190, %v1248, 0
        %v1373 = vsel %vm1190, %v1250, 0
        %v1376 = vsel %vm1190, %v1252, 0
        %v1379 = vsel %vm1190, %v1254, 0
        %1381 = vmatprep.subr.bf16.mxu0 0
        %1382 = vmatpush1.bf16.msra.mxu0 %v1309
        %1383 = vmatprep.subr.bf16.mxu0 0
        %1384 = vmatpush1.bf16.msra.mxu0 %v1310
        %1385 = vmatprep.subr.bf16.mxu0 0
        %1386 = vmatpush1.bf16.msra.mxu0 %v1311
        %1387 = vmatprep.subr.bf16.mxu0 0
        %1388 = vmatpush1.bf16.msra.mxu0 %v1312
        %1389 = vmatprep.subr.bf16.mxu0 0
        %1390 = vmatpush1.bf16.msra.mxu0 %v1313
        %1391 = vmatprep.subr.bf16.mxu0 0
        %1392 = vmatpush1.bf16.msra.mxu0 %v1314
        %1393 = vmatprep.subr.bf16.mxu0 0
        %1394 = vmatpush1.bf16.msra.mxu0 %v1315
        %1395 = vmatprep.subr.bf16.mxu0 0
        %1396 = vmatpush1.bf16.msra.mxu0 %v1316
        %1397 = vmatprep.subr.bf16.mxu0 0
        %1398 = vmatpush1.bf16.msra.mxu0 %v1317
        %1399 = vmatprep.subr.bf16.mxu0 0
        %1400 = vmatpush1.bf16.msra.mxu0 %v1318
        %1401 = vmatprep.subr.bf16.mxu0 0
        %1402 = vmatpush1.bf16.msra.mxu0 %v1319
        %1403 = vmatprep.subr.bf16.mxu0 0
        %1404 = vmatpush1.bf16.msra.mxu0 %v1320
        %1405 = vmatprep.subr.bf16.mxu0 0
        %1406 = vmatpush1.bf16.msra.mxu0 0
        %1407 = vmatprep.subr.bf16.mxu0 0
        %1408 = vmatpush1.bf16.msra.mxu0 0
        %1409 = vmatprep.subr.bf16.mxu0 0
        %1410 = vmatpush1.bf16.msra.mxu0 0
        %1411 = vmatprep.subr.bf16.mxu0 0
        %1412 = vmatpush1.bf16.msra.mxu0 0
        %1413 = vmatprep.mubr.bf16.mxu0 %v1334
        %1414 = vmatmul.mubr.bf16.gmra.mrb[0].mxu0 %v1223
        %v1415 = vpop.f32.mrb[0].mxu0
        %v1416 = vadd.f32 %v1259, %v1415
        %v1417 = vpop.f32.mrb[0].mxu0
        %v1418 = vpop.f32.mrb[0].mxu0
        %v1419 = vadd.f32 %v1259, %v1418
        %v1420 = vpop.f32.mrb[0].mxu0
        %1421 = vmatprep.mubr.bf16.mxu0 %v1337
        %1422 = vmatmul.mubr.bf16.gmra.mrb[0].mxu0 %v1225
        %v1423 = vpop.f32.mrb[0].mxu0
        %v1424 = vadd.f32 %v1259, %v1423
        %v1425 = vpop.f32.mrb[0].mxu0
        %v1426 = vpop.f32.mrb[0].mxu0
        %v1427 = vadd.f32 %v1259, %v1426
        %v1428 = vpop.f32.mrb[0].mxu0
        %1429 = vmatprep.mubr.bf16.mxu0 %v1340
        %1430 = vmatmul.mubr.bf16.gmra.mrb[0].mxu0 %v1227
        %v1431 = vpop.f32.mrb[0].mxu0
        %v1432 = vadd.f32 %v1259, %v1431
        %v1433 = vpop.f32.mrb[0].mxu0
        %v1434 = vpop.f32.mrb[0].mxu0
        %v1435 = vadd.f32 %v1259, %v1434
        %v1436 = vpop.f32.mrb[0].mxu0
        %1437 = vmatprep.mubr.bf16.mxu0 %v1343
        %1438 = vmatmul.mubr.bf16.gmra.mrb[0].mxu0 %v1229
        %v1439 = vpop.f32.mrb[0].mxu0
        %v1440 = vadd.f32 %v1259, %v1439
        %v1441 = vpop.f32.mrb[0].mxu0
        %v1442 = vpop.f32.mrb[0].mxu0
        %v1443 = vadd.f32 %v1259, %v1442
        %v1444 = vpop.f32.mrb[0].mxu0
        %1445 = vmatprep.mubr.bf16.mxu0 %v1346
        %1446 = vmatmul.mubr.bf16.gmra.mrb[0].mxu0 %v1231
        %v1447 = vpop.f32.mrb[0].mxu0
        %v1448 = vadd.f32 %v1259, %v1447
        %v1449 = vpop.f32.mrb[0].mxu0
        %v1450 = vpop.f32.mrb[0].mxu0
        %v1451 = vadd.f32 %v1259, %v1450
        %v1452 = vpop.f32.mrb[0].mxu0
        %1453 = vmatprep.mubr.bf16.mxu0 %v1349
        %1454 = vmatmul.mubr.bf16.gmra.mrb[0].mxu0 %v1233
        %v1455 = vpop.f32.mrb[0].mxu0
        %v1456 = vadd.f32 %v1259, %v1455
        %v1457 = vpop.f32.mrb[0].mxu0
        %v1458 = vpop.f32.mrb[0].mxu0
        %v1459 = vadd.f32 %v1259, %v1458
        %v1460 = vpop.f32.mrb[0].mxu0
        %1461 = vmatprep.mubr.bf16.mxu0 %v1352
        %1462 = vmatmul.mubr.bf16.gmra.mrb[0].mxu0 %v1235
        %v1463 = vpop.f32.mrb[0].mxu0
        %v1464 = vadd.f32 %v1259, %v1463
        %v1465 = vpop.f32.mrb[0].mxu0
        %v1466 = vpop.f32.mrb[0].mxu0
        %v1467 = vadd.f32 %v1259, %v1466
        %v1468 = vpop.f32.mrb[0].mxu0
        %1469 = vmatprep.mubr.bf16.mxu0 %v1355
        %1470 = vmatmul.mubr.bf16.gmra.mrb[0].mxu0 %v1237
        %v1471 = vpop.f32.mrb[0].mxu0
        %v1472 = vadd.f32 %v1259, %v1471
        %v1473 = vpop.f32.mrb[0].mxu0
        %v1474 = vpop.f32.mrb[0].mxu0
        %v1475 = vadd.f32 %v1259, %v1474
        %v1476 = vpop.f32.mrb[0].mxu0
        %1477 = vmatprep.mubr.bf16.mxu0 %v1358
        %1478 = vmatmul.mubr.bf16.gmra.mrb[0].mxu0 %v1239
        %v1479 = vpop.f32.mrb[0].mxu0
        %v1480 = vadd.f32 %v1259, %v1479
        %v1481 = vpop.f32.mrb[0].mxu0
        %v1482 = vpop.f32.mrb[0].mxu0
        %v1483 = vadd.f32 %v1259, %v1482
        %v1484 = vpop.f32.mrb[0].mxu0
        %1485 = vmatprep.mubr.bf16.mxu0 %v1361
        %1486 = vmatmul.mubr.bf16.gmra.mrb[0].mxu0 %v1241
        %v1487 = vpop.f32.mrb[0].mxu0
        %v1488 = vadd.f32 %v1259, %v1487
        %v1489 = vpop.f32.mrb[0].mxu0
        %v1490 = vpop.f32.mrb[0].mxu0
        %v1491 = vadd.f32 %v1259, %v1490
        %v1492 = vpop.f32.mrb[0].mxu0
        %1493 = vmatprep.mubr.bf16.mxu0 %v1364
        %1494 = vmatmul.mubr.bf16.gmra.mrb[0].mxu0 %v1243
        %v1495 = vpop.f32.mrb[0].mxu0
        %v1496 = vadd.f32 %v1259, %v1495
        %v1497 = vpop.f32.mrb[0].mxu0
        %v1498 = vpop.f32.mrb[0].mxu0
        %v1499 = vadd.f32 %v1259, %v1498
        %v1500 = vpop.f32.mrb[0].mxu0
        %1501 = vmatprep.mubr.bf16.mxu0 %v1367
        %1502 = vmatmul.mubr.bf16.gmra.mrb[0].mxu0 %v1245
        %v1503 = vpop.f32.mrb[0].mxu0
        %v1504 = vadd.f32 %v1259, %v1503
        %v1505 = vpop.f32.mrb[0].mxu0
        %v1506 = vpop.f32.mrb[0].mxu0
        %v1507 = vadd.f32 %v1259, %v1506
        %v1508 = vpop.f32.mrb[0].mxu0
        %1509 = vmatprep.mubr.bf16.mxu0 %v1370
        %1510 = vmatmul.mubr.bf16.gmra.mrb[0].mxu0 %v1247
        %v1511 = vpop.f32.mrb[0].mxu0
        %v1512 = vadd.f32 %v1259, %v1511
        %v1513 = vpop.f32.mrb[0].mxu0
        %v1514 = vpop.f32.mrb[0].mxu0
        %v1515 = vadd.f32 %v1259, %v1514
        %v1516 = vpop.f32.mrb[0].mxu0
        %1517 = vmatprep.mubr.bf16.mxu0 %v1373
        %1518 = vmatmul.mubr.bf16.gmra.mrb[0].mxu0 %v1249
        %v1519 = vpop.f32.mrb[0].mxu0
        %v1520 = vadd.f32 %v1259, %v1519
        %v1521 = vpop.f32.mrb[0].mxu0
        %v1522 = vpop.f32.mrb[0].mxu0
        %v1523 = vadd.f32 %v1259, %v1522
        %v1524 = vpop.f32.mrb[0].mxu0
        %1525 = vmatprep.mubr.bf16.mxu0 %v1376
        %1526 = vmatmul.mubr.bf16.gmra.mrb[0].mxu0 %v1251
        %v1527 = vpop.f32.mrb[0].mxu0
        %v1528 = vadd.f32 %v1259, %v1527
        %v1529 = vpop.f32.mrb[0].mxu0
        %v1530 = vpop.f32.mrb[0].mxu0
        %v1531 = vadd.f32 %v1259, %v1530
        %v1532 = vpop.f32.mrb[0].mxu0
        %1533 = vmatprep.mubr.bf16.mxu0 %v1379
        %1534 = vmatmul.mubr.bf16.gmra.mrb[0].mxu0 %v1253
        %v1535 = vpop.f32.mrb[0].mxu0
        %v1536 = vadd.f32 %v1259, %v1535
        %v1537 = vpop.f32.mrb[0].mxu0
        %v1538 = vpop.f32.mrb[0].mxu0
        %v1539 = vadd.f32 %v1259, %v1538
        %v1540 = vpop.f32.mrb[0].mxu0
        %1541 = vdwg.mxu0
        %v1542 = vmax.f32 %v1416, 0.0
        %v1543 = vmax.f32 %v1419, 0.0
        %v1544 = vmax.f32 %v1424, 0.0
        %v1545 = vmax.f32 %v1427, 0.0
        %v1546 = vmax.f32 %v1432, 0.0
        %v1547 = vmax.f32 %v1435, 0.0
        %v1548 = vmax.f32 %v1440, 0.0
        %v1549 = vmax.f32 %v1443, 0.0
        %v1550 = vmax.f32 %v1448, 0.0
        %v1551 = vmax.f32 %v1451, 0.0
        %v1552 = vmax.f32 %v1456, 0.0
        %v1553 = vmax.f32 %v1459, 0.0
        %v1554 = vmax.f32 %v1464, 0.0
        %v1555 = vmax.f32 %v1467, 0.0
        %v1556 = vmax.f32 %v1472, 0.0
        %v1557 = vmax.f32 %v1475, 0.0
        %v1558 = vmax.f32 %v1480, 0.0
        %v1559 = vmax.f32 %v1483, 0.0
        %v1560 = vmax.f32 %v1488, 0.0
        %v1561 = vmax.f32 %v1491, 0.0
        %v1562 = vmax.f32 %v1496, 0.0
        %v1563 = vmax.f32 %v1499, 0.0
        %v1564 = vmax.f32 %v1504, 0.0
        %v1565 = vmax.f32 %v1507, 0.0
        %v1566 = vmax.f32 %v1512, 0.0
        %v1567 = vmax.f32 %v1515, 0.0
        %v1568 = vmax.f32 %v1520, 0.0
        %v1569 = vmax.f32 %v1523, 0.0
        %v1570 = vmax.f32 %v1528, 0.0
        %v1571 = vmax.f32 %v1531, 0.0
        %v1572 = vmax.f32 %v1536, 0.0
        %v1573 = vmax.f32 %v1539, 0.0
        %s1574 = scalar_lea.vmem %s3, 96
        %v1575 = vld [vmem:[%s1574] sm:$0xf]
        %v1576 = vld [vmem:[%s1574 + $0x4] sm:$0xf]
        %v1577 = vld [vmem:[%s1574 + $0x8] sm:$0xf]
        %v1578 = vld [vmem:[%s1574 + $0xc] sm:$0xf]
        %v1579 = vld [vmem:[%s1574 + $0x10] sm:$0xf]
        %v1580 = vld [vmem:[%s1574 + $0x14] sm:$0xf]
        %v1581 = vld [vmem:[%s1574 + $0x18] sm:$0xf]
        %v1582 = vld [vmem:[%s1574 + $0x1c] sm:$0xf]
        %v1583 = vld [vmem:[%s1574 + $0x20] sm:$0xf]
        %v1584 = vld [vmem:[%s1574 + $0x24] sm:$0xf]
        %v1585 = vld [vmem:[%s1574 + $0x28] sm:$0xf]
        %v1586 = vld [vmem:[%s1574 + $0x2c] sm:$0xf]
        %v1587 = vld [vmem:[%s1574 + $0x30] sm:$0xf]
        %v1588 = vld [vmem:[%s1574 + $0x34] sm:$0xf]
        %v1589 = vld [vmem:[%s1574 + $0x38] sm:$0xf]
        %v1590 = vld [vmem:[%s1574 + $0x3c] sm:$0xf]
        %v1591 = vld [vmem:[%s1574 + $0x40] sm:$0xf]
        %v1592 = vld [vmem:[%s1574 + $0x44] sm:$0xf]
        %v1593 = vld [vmem:[%s1574 + $0x48] sm:$0xf]
        %v1594 = vld [vmem:[%s1574 + $0x4c] sm:$0xf]
        %v1595 = vld [vmem:[%s1574 + $0x50] sm:$0xf]
        %v1596 = vld [vmem:[%s1574 + $0x54] sm:$0xf]
        %v1597 = vld [vmem:[%s1574 + $0x58] sm:$0xf]
        %v1598 = vld [vmem:[%s1574 + $0x5c] sm:$0xf]
        %s1599 = scalar_lea.vmem %s4, 1
        %v1600 = vld [vmem:[%s1599] sm:$0x1]
        %1633 = vrot.lane.b32.xlu0 %v1542, 64
        %v1634 = vpop.permute.xlu0 %1633
        %1635 = vrot.lane.b32.xlu0 %v1543, 64
        %v1636 = vpop.permute.xlu0 %1635
        %1637 = vrot.lane.b32.xlu0 %v1544, 64
        %v1638 = vpop.permute.xlu0 %1637
        %1639 = vrot.lane.b32.xlu0 %v1545, 64
        %v1640 = vpop.permute.xlu0 %1639
        %1641 = vrot.lane.b32.xlu0 %v1546, 64
        %v1642 = vpop.permute.xlu0 %1641
        %1643 = vrot.lane.b32.xlu0 %v1547, 64
        %v1644 = vpop.permute.xlu0 %1643
        %1645 = vrot.lane.b32.xlu0 %v1548, 64
        %v1646 = vpop.permute.xlu0 %1645
        %1647 = vrot.lane.b32.xlu0 %v1549, 64
        %v1648 = vpop.permute.xlu0 %1647
        %1649 = vrot.lane.b32.xlu0 %v1550, 64
        %v1650 = vpop.permute.xlu0 %1649
        %1651 = vrot.lane.b32.xlu0 %v1551, 64
        %v1652 = vpop.permute.xlu0 %1651
        %1653 = vrot.lane.b32.xlu0 %v1552, 64
        %v1654 = vpop.permute.xlu0 %1653
        %1655 = vrot.lane.b32.xlu0 %v1553, 64
        %v1656 = vpop.permute.xlu0 %1655
        %1657 = vrot.lane.b32.xlu0 %v1554, 64
        %v1658 = vpop.permute.xlu0 %1657
        %1659 = vrot.lane.b32.xlu0 %v1555, 64
        %v1660 = vpop.permute.xlu0 %1659
        %1661 = vrot.lane.b32.xlu0 %v1556, 64
        %v1662 = vpop.permute.xlu0 %1661
        %1663 = vrot.lane.b32.xlu0 %v1557, 64
        %v1664 = vpop.permute.xlu0 %1663
        %1665 = vrot.lane.b32.xlu0 %v1558, 64
        %v1666 = vpop.permute.xlu0 %1665
        %1667 = vrot.lane.b32.xlu0 %v1559, 64
        %v1668 = vpop.permute.xlu0 %1667
        %1669 = vrot.lane.b32.xlu0 %v1560, 64
        %v1670 = vpop.permute.xlu0 %1669
        %1671 = vrot.lane.b32.xlu0 %v1561, 64
        %v1672 = vpop.permute.xlu0 %1671
        %1673 = vrot.lane.b32.xlu0 %v1562, 64
        %v1674 = vpop.permute.xlu0 %1673
        %1675 = vrot.lane.b32.xlu0 %v1563, 64
        %v1676 = vpop.permute.xlu0 %1675
        %1677 = vrot.lane.b32.xlu0 %v1564, 64
        %v1678 = vpop.permute.xlu0 %1677
        %1679 = vrot.lane.b32.xlu0 %v1565, 64
        %v1680 = vpop.permute.xlu0 %1679
        %1681 = vrot.lane.b32.xlu0 %v1566, 64
        %v1682 = vpop.permute.xlu0 %1681
        %1683 = vrot.lane.b32.xlu0 %v1567, 64
        %v1684 = vpop.permute.xlu0 %1683
        %1685 = vrot.lane.b32.xlu0 %v1568, 64
        %v1686 = vpop.permute.xlu0 %1685
        %1687 = vrot.lane.b32.xlu0 %v1569, 64
        %v1688 = vpop.permute.xlu0 %1687
        %1689 = vrot.lane.b32.xlu0 %v1570, 64
        %v1690 = vpop.permute.xlu0 %1689
        %1691 = vrot.lane.b32.xlu0 %v1571, 64
        %v1692 = vpop.permute.xlu0 %1691
        %1693 = vrot.lane.b32.xlu0 %v1572, 64
        %v1694 = vpop.permute.xlu0 %1693
        %1695 = vrot.lane.b32.xlu0 %v1573, 64
        %v1696 = vpop.permute.xlu0 %1695
        %v1729 = vsel %vm1190, 0.0, %v1634
        %v1730 = vsel %vm1190, 0.0, %v1636
        %v1731 = vsel %vm1190, %v1542, %v1638
        %v1732 = vsel %vm1190, %v1543, %v1640
        %v1733 = vsel %vm1190, %v1544, %v1642
        %v1734 = vsel %vm1190, %v1545, %v1644
        %v1735 = vsel %vm1190, %v1546, %v1646
        %v1736 = vsel %vm1190, %v1547, %v1648
        %v1737 = vsel %vm1190, %v1548, %v1650
        %v1738 = vsel %vm1190, %v1549, %v1652
        %v1739 = vsel %vm1190, %v1550, %v1654
        %v1740 = vsel %vm1190, %v1551, %v1656
        %v1741 = vsel %vm1190, %v1552, %v1658
        %v1742 = vsel %vm1190, %v1553, %v1660
        %v1743 = vsel %vm1190, %v1554, %v1662
        %v1744 = vsel %vm1190, %v1555, %v1664
        %v1745 = vsel %vm1190, %v1556, %v1666
        %v1746 = vsel %vm1190, %v1557, %v1668
        %v1747 = vsel %vm1190, %v1558, %v1670
        %v1748 = vsel %vm1190, %v1559, %v1672
        %v1749 = vsel %vm1190, %v1560, %v1674
        %v1750 = vsel %vm1190, %v1561, %v1676
        %v1751 = vsel %vm1190, %v1562, %v1678
        %v1752 = vsel %vm1190, %v1563, %v1680
        %v1753 = vsel %vm1190, %v1564, %v1682
        %v1754 = vsel %vm1190, %v1565, %v1684
        %v1755 = vsel %vm1190, %v1566, %v1686
        %v1756 = vsel %vm1190, %v1567, %v1688
        %v1757 = vsel %vm1190, %v1568, %v1690
        %v1758 = vsel %vm1190, %v1569, %v1692
        %v1759 = vsel %vm1190, %v1570, %v1694
        %v1760 = vsel %vm1190, %v1571, %v1696
        %v1761 = vpack.c.bf16 %v1730, %v1729
        %v1762 = vpack.c.bf16 %v1545, %v1544
        %v1763 = vpack.c.bf16 %v1732, %v1731
        %v1764 = vpack.c.bf16 %v1547, %v1546
        %v1765 = vpack.c.bf16 %v1734, %v1733
        %v1766 = vpack.c.bf16 %v1549, %v1548
        %v1767 = vpack.c.bf16 %v1736, %v1735
        %v1768 = vpack.c.bf16 %v1551, %v1550
        %v1769 = vpack.c.bf16 %v1738, %v1737
        %v1770 = vpack.c.bf16 %v1553, %v1552
        %v1771 = vpack.c.bf16 %v1740, %v1739
        %v1772 = vpack.c.bf16 %v1555, %v1554
        %v1773 = vpack.c.bf16 %v1742, %v1741
        %v1774 = vpack.c.bf16 %v1557, %v1556
        %v1775 = vpack.c.bf16 %v1744, %v1743
        %v1776 = vpack.c.bf16 %v1559, %v1558
        %v1777 = vpack.c.bf16 %v1746, %v1745
        %v1778 = vpack.c.bf16 %v1561, %v1560
        %v1779 = vpack.c.bf16 %v1748, %v1747
        %v1780 = vpack.c.bf16 %v1563, %v1562
        %v1781 = vpack.c.bf16 %v1750, %v1749
        %v1782 = vpack.c.bf16 %v1565, %v1564
        %v1783 = vpack.c.bf16 %v1752, %v1751
        %v1784 = vpack.c.bf16 %v1567, %v1566
        %v1785 = vpack.c.bf16 %v1754, %v1753
        %v1786 = vpack.c.bf16 %v1569, %v1568
        %v1787 = vpack.c.bf16 %v1756, %v1755
        %v1788 = vpack.c.bf16 %v1571, %v1570
        %v1789 = vpack.c.bf16 %v1758, %v1757
        %v1790 = vpack.c.bf16 %v1573, %v1572
        %v1791 = vpack.c.bf16 %v1760, %v1759
        %v1792 = vpack.c.bf16 0.0, 0.0
        %v1794 = vlaneseq
        %v1795 = vshrl.u32 %v1794, 7
        %v1796 = vsub.s32 0, %v1795
        %v1797 = vrot.slane %v1600, %v1796
        %v1823 = vunpack.c.l.b16 %v1575
        %v1824 = vunpack.c.l.b16 %v1576
        %v1825 = vunpack.c.l.b16 %v1577
        %v1826 = vunpack.c.l.b16 %v1578
        %v1827 = vunpack.c.l.b16 %v1579
        %v1828 = vunpack.c.l.b16 %v1580
        %v1829 = vunpack.c.l.b16 %v1581
        %v1830 = vunpack.c.l.b16 %v1582
        %v1831 = vunpack.c.l.b16 %v1583
        %v1832 = vunpack.c.l.b16 %v1584
        %v1833 = vunpack.c.l.b16 %v1585
        %v1834 = vunpack.c.l.b16 %v1586
        %v1835 = vunpack.c.l.b16 %v1587
        %v1836 = vunpack.c.l.b16 %v1588
        %v1837 = vunpack.c.l.b16 %v1589
        %v1838 = vunpack.c.l.b16 %v1590
        %v1839 = vunpack.c.l.b16 %v1591
        %v1840 = vunpack.c.l.b16 %v1592
        %v1841 = vunpack.c.l.b16 %v1593
        %v1842 = vunpack.c.l.b16 %v1594
        %v1843 = vunpack.c.l.b16 %v1595
        %v1844 = vunpack.c.l.b16 %v1596
        %v1845 = vunpack.c.l.b16 %v1597
        %v1846 = vunpack.c.l.b16 %v1598
        %v1847 = vpack.c.b16 %v1824, %v1823
        %v1848 = vpack.c.b16 %v1826, %v1825
        %v1849 = vpack.c.b16 %v1828, %v1827
        %v1850 = vpack.c.b16 %v1830, %v1829
        %v1851 = vpack.c.b16 %v1832, %v1831
        %v1852 = vpack.c.b16 %v1834, %v1833
        %v1853 = vpack.c.b16 %v1836, %v1835
        %v1854 = vpack.c.b16 %v1838, %v1837
        %v1855 = vpack.c.b16 %v1840, %v1839
        %v1856 = vpack.c.b16 %v1842, %v1841
        %v1857 = vpack.c.b16 %v1844, %v1843
        %v1858 = vpack.c.b16 %v1846, %v1845
        %v1872 = vsel %vm1190, %v1762, 0
        %v1875 = vsel %vm1190, %v1764, 0
        %v1878 = vsel %vm1190, %v1766, 0
        %v1881 = vsel %vm1190, %v1768, 0
        %v1884 = vsel %vm1190, %v1770, 0
        %v1887 = vsel %vm1190, %v1772, 0
        %v1890 = vsel %vm1190, %v1774, 0
        %v1893 = vsel %vm1190, %v1776, 0
        %v1896 = vsel %vm1190, %v1778, 0
        %v1899 = vsel %vm1190, %v1780, 0
        %v1902 = vsel %vm1190, %v1782, 0
        %v1905 = vsel %vm1190, %v1784, 0
        %v1908 = vsel %vm1190, %v1786, 0
        %v1911 = vsel %vm1190, %v1788, 0
        %v1914 = vsel %vm1190, %v1790, 0
        %v1917 = vsel %vm1190, %v1792, 0
        %1919 = vmatprep.subr.bf16.mxu0 0
        %1920 = vmatpush1.bf16.msra.mxu0 %v1847
        %1921 = vmatprep.subr.bf16.mxu0 0
        %1922 = vmatpush1.bf16.msra.mxu0 %v1848
        %1923 = vmatprep.subr.bf16.mxu0 0
        %1924 = vmatpush1.bf16.msra.mxu0 %v1849
        %1925 = vmatprep.subr.bf16.mxu0 0
        %1926 = vmatpush1.bf16.msra.mxu0 %v1850
        %1927 = vmatprep.subr.bf16.mxu0 0
        %1928 = vmatpush1.bf16.msra.mxu0 %v1851
        %1929 = vmatprep.subr.bf16.mxu0 0
        %1930 = vmatpush1.bf16.msra.mxu0 %v1852
        %1931 = vmatprep.subr.bf16.mxu0 0
        %1932 = vmatpush1.bf16.msra.mxu0 %v1853
        %1933 = vmatprep.subr.bf16.mxu0 0
        %1934 = vmatpush1.bf16.msra.mxu0 %v1854
        %1935 = vmatprep.subr.bf16.mxu0 0
        %1936 = vmatpush1.bf16.msra.mxu0 %v1855
        %1937 = vmatprep.subr.bf16.mxu0 0
        %1938 = vmatpush1.bf16.msra.mxu0 %v1856
        %1939 = vmatprep.subr.bf16.mxu0 0
        %1940 = vmatpush1.bf16.msra.mxu0 %v1857
        %1941 = vmatprep.subr.bf16.mxu0 0
        %1942 = vmatpush1.bf16.msra.mxu0 %v1858
        %1943 = vmatprep.subr.bf16.mxu0 0
        %1944 = vmatpush1.bf16.msra.mxu0 0
        %1945 = vmatprep.subr.bf16.mxu0 0
        %1946 = vmatpush1.bf16.msra.mxu0 0
        %1947 = vmatprep.subr.bf16.mxu0 0
        %1948 = vmatpush1.bf16.msra.mxu0 0
        %1949 = vmatprep.subr.bf16.mxu0 0
        %1950 = vmatpush1.bf16.msra.mxu0 0
        %1951 = vmatprep.mubr.bf16.mxu0 %v1872
        %1952 = vmatmul.mubr.bf16.gmra.mrb[0].mxu0 %v1761
        %v1953 = vpop.f32.mrb[0].mxu0
        %v1954 = vadd.f32 %v1797, %v1953
        %v1955 = vpop.f32.mrb[0].mxu0
        %v1956 = vpop.f32.mrb[0].mxu0
        %v1957 = vadd.f32 %v1797, %v1956
        %v1958 = vpop.f32.mrb[0].mxu0
        %1959 = vmatprep.mubr.bf16.mxu0 %v1875
        %1960 = vmatmul.mubr.bf16.gmra.mrb[0].mxu0 %v1763
        %v1961 = vpop.f32.mrb[0].mxu0
        %v1962 = vadd.f32 %v1797, %v1961
        %v1963 = vpop.f32.mrb[0].mxu0
        %v1964 = vpop.f32.mrb[0].mxu0
        %v1965 = vadd.f32 %v1797, %v1964
        %v1966 = vpop.f32.mrb[0].mxu0
        %1967 = vmatprep.mubr.bf16.mxu0 %v1878
        %1968 = vmatmul.mubr.bf16.gmra.mrb[0].mxu0 %v1765
        %v1969 = vpop.f32.mrb[0].mxu0
        %v1970 = vadd.f32 %v1797, %v1969
        %v1971 = vpop.f32.mrb[0].mxu0
        %v1972 = vpop.f32.mrb[0].mxu0
        %v1973 = vadd.f32 %v1797, %v1972
        %v1974 = vpop.f32.mrb[0].mxu0
        %1975 = vmatprep.mubr.bf16.mxu0 %v1881
        %1976 = vmatmul.mubr.bf16.gmra.mrb[0].mxu0 %v1767
        %v1977 = vpop.f32.mrb[0].mxu0
        %v1978 = vadd.f32 %v1797, %v1977
        %v1979 = vpop.f32.mrb[0].mxu0
        %v1980 = vpop.f32.mrb[0].mxu0
        %v1981 = vadd.f32 %v1797, %v1980
        %v1982 = vpop.f32.mrb[0].mxu0
        %1983 = vmatprep.mubr.bf16.mxu0 %v1884
        %1984 = vmatmul.mubr.bf16.gmra.mrb[0].mxu0 %v1769
        %v1985 = vpop.f32.mrb[0].mxu0
        %v1986 = vadd.f32 %v1797, %v1985
        %v1987 = vpop.f32.mrb[0].mxu0
        %v1988 = vpop.f32.mrb[0].mxu0
        %v1989 = vadd.f32 %v1797, %v1988
        %v1990 = vpop.f32.mrb[0].mxu0
        %1991 = vmatprep.mubr.bf16.mxu0 %v1887
        %1992 = vmatmul.mubr.bf16.gmra.mrb[0].mxu0 %v1771
        %v1993 = vpop.f32.mrb[0].mxu0
        %v1994 = vadd.f32 %v1797, %v1993
        %v1995 = vpop.f32.mrb[0].mxu0
        %v1996 = vpop.f32.mrb[0].mxu0
        %v1997 = vadd.f32 %v1797, %v1996
        %v1998 = vpop.f32.mrb[0].mxu0
        %1999 = vmatprep.mubr.bf16.mxu0 %v1890
        %2000 = vmatmul.mubr.bf16.gmra.mrb[0].mxu0 %v1773
        %v2001 = vpop.f32.mrb[0].mxu0
        %v2002 = vadd.f32 %v1797, %v2001
        %v2003 = vpop.f32.mrb[0].mxu0
        %v2004 = vpop.f32.mrb[0].mxu0
        %v2005 = vadd.f32 %v1797, %v2004
        %v2006 = vpop.f32.mrb[0].mxu0
        %2007 = vmatprep.mubr.bf16.mxu0 %v1893
        %2008 = vmatmul.mubr.bf16.gmra.mrb[0].mxu0 %v1775
        %v2009 = vpop.f32.mrb[0].mxu0
        %v2010 = vadd.f32 %v1797, %v2009
        %v2011 = vpop.f32.mrb[0].mxu0
        %v2012 = vpop.f32.mrb[0].mxu0
        %v2013 = vadd.f32 %v1797, %v2012
        %v2014 = vpop.f32.mrb[0].mxu0
        %2015 = vmatprep.mubr.bf16.mxu0 %v1896
        %2016 = vmatmul.mubr.bf16.gmra.mrb[0].mxu0 %v1777
        %v2017 = vpop.f32.mrb[0].mxu0
        %v2018 = vadd.f32 %v1797, %v2017
        %v2019 = vpop.f32.mrb[0].mxu0
        %v2020 = vpop.f32.mrb[0].mxu0
        %v2021 = vadd.f32 %v1797, %v2020
        %v2022 = vpop.f32.mrb[0].mxu0
        %2023 = vmatprep.mubr.bf16.mxu0 %v1899
        %2024 = vmatmul.mubr.bf16.gmra.mrb[0].mxu0 %v1779
        %v2025 = vpop.f32.mrb[0].mxu0
        %v2026 = vadd.f32 %v1797, %v2025
        %v2027 = vpop.f32.mrb[0].mxu0
        %v2028 = vpop.f32.mrb[0].mxu0
        %v2029 = vadd.f32 %v1797, %v2028
        %v2030 = vpop.f32.mrb[0].mxu0
        %2031 = vmatprep.mubr.bf16.mxu0 %v1902
        %2032 = vmatmul.mubr.bf16.gmra.mrb[0].mxu0 %v1781
        %v2033 = vpop.f32.mrb[0].mxu0
        %v2034 = vadd.f32 %v1797, %v2033
        %v2035 = vpop.f32.mrb[0].mxu0
        %v2036 = vpop.f32.mrb[0].mxu0
        %v2037 = vadd.f32 %v1797, %v2036
        %v2038 = vpop.f32.mrb[0].mxu0
        %2039 = vmatprep.mubr.bf16.mxu0 %v1905
        %2040 = vmatmul.mubr.bf16.gmra.mrb[0].mxu0 %v1783
        %v2041 = vpop.f32.mrb[0].mxu0
        %v2042 = vadd.f32 %v1797, %v2041
        %v2043 = vpop.f32.mrb[0].mxu0
        %v2044 = vpop.f32.mrb[0].mxu0
        %v2045 = vadd.f32 %v1797, %v2044
        %v2046 = vpop.f32.mrb[0].mxu0
        %2047 = vmatprep.mubr.bf16.mxu0 %v1908
        %2048 = vmatmul.mubr.bf16.gmra.mrb[0].mxu0 %v1785
        %v2049 = vpop.f32.mrb[0].mxu0
        %v2050 = vadd.f32 %v1797, %v2049
        %v2051 = vpop.f32.mrb[0].mxu0
        %v2052 = vpop.f32.mrb[0].mxu0
        %v2053 = vadd.f32 %v1797, %v2052
        %v2054 = vpop.f32.mrb[0].mxu0
        %2055 = vmatprep.mubr.bf16.mxu0 %v1911
        %2056 = vmatmul.mubr.bf16.gmra.mrb[0].mxu0 %v1787
        %v2057 = vpop.f32.mrb[0].mxu0
        %v2058 = vadd.f32 %v1797, %v2057
        %v2059 = vpop.f32.mrb[0].mxu0
        %v2060 = vpop.f32.mrb[0].mxu0
        %v2061 = vadd.f32 %v1797, %v2060
        %v2062 = vpop.f32.mrb[0].mxu0
        %2063 = vmatprep.mubr.bf16.mxu0 %v1914
        %2064 = vmatmul.mubr.bf16.gmra.mrb[0].mxu0 %v1789
        %v2065 = vpop.f32.mrb[0].mxu0
        %v2066 = vadd.f32 %v1797, %v2065
        %v2067 = vpop.f32.mrb[0].mxu0
        %v2068 = vpop.f32.mrb[0].mxu0
        %v2069 = vadd.f32 %v1797, %v2068
        %v2070 = vpop.f32.mrb[0].mxu0
        %2071 = vmatprep.mubr.bf16.mxu0 %v1917
        %2072 = vmatmul.mubr.bf16.gmra.mrb[0].mxu0 %v1791
        %v2073 = vpop.f32.mrb[0].mxu0
        %v2074 = vadd.f32 %v1797, %v2073
        %v2075 = vpop.f32.mrb[0].mxu0
        %v2076 = vpop.f32.mrb[0].mxu0
        %v2077 = vadd.f32 %v1797, %v2076
        %v2078 = vpop.f32.mrb[0].mxu0
        %2079 = vdwg.mxu0
        %v2080 = vmax.f32 %v1954, 0.0
        %v2081 = vmax.f32 %v1957, 0.0
        %v2082 = vmax.f32 %v1962, 0.0
        %v2083 = vmax.f32 %v1965, 0.0
        %v2084 = vmax.f32 %v1970, 0.0
        %v2085 = vmax.f32 %v1973, 0.0
        %v2086 = vmax.f32 %v1978, 0.0
        %v2087 = vmax.f32 %v1981, 0.0
        %v2088 = vmax.f32 %v1986, 0.0
        %v2089 = vmax.f32 %v1989, 0.0
        %v2090 = vmax.f32 %v1994, 0.0
        %v2091 = vmax.f32 %v1997, 0.0
        %v2092 = vmax.f32 %v2002, 0.0
        %v2093 = vmax.f32 %v2005, 0.0
        %v2094 = vmax.f32 %v2010, 0.0
        %v2095 = vmax.f32 %v2013, 0.0
        %v2096 = vmax.f32 %v2018, 0.0
        %v2097 = vmax.f32 %v2021, 0.0
        %v2098 = vmax.f32 %v2026, 0.0
        %v2099 = vmax.f32 %v2029, 0.0
        %v2100 = vmax.f32 %v2034, 0.0
        %v2101 = vmax.f32 %v2037, 0.0
        %v2102 = vmax.f32 %v2042, 0.0
        %v2103 = vmax.f32 %v2045, 0.0
        %v2104 = vmax.f32 %v2050, 0.0
        %v2105 = vmax.f32 %v2053, 0.0
        %v2106 = vmax.f32 %v2058, 0.0
        %v2107 = vmax.f32 %v2061, 0.0
        %v2108 = vmax.f32 %v2066, 0.0
        %v2109 = vmax.f32 %v2069, 0.0
        %v2110 = vmax.f32 %v2074, 0.0
        %v2111 = vmax.f32 %v2077, 0.0
        %2112 = vrot.lane.b32.xlu0 %v715, 64
        %v2113 = vpop.permute.xlu0 %2112
        %2114 = vrot.lane.b32.xlu0 %v717, 64
        %v2115 = vpop.permute.xlu0 %2114
        %2116 = vrot.lane.b32.xlu0 %v719, 64
        %v2117 = vpop.permute.xlu0 %2116
        %2118 = vrot.lane.b32.xlu0 %v721, 64
        %v2119 = vpop.permute.xlu0 %2118
        %2120 = vrot.lane.b32.xlu0 %v723, 64
        %v2121 = vpop.permute.xlu0 %2120
        %2122 = vrot.lane.b32.xlu0 %v725, 64
        %v2123 = vpop.permute.xlu0 %2122
        %2124 = vrot.lane.b32.xlu0 %v727, 64
        %v2125 = vpop.permute.xlu0 %2124
        %2126 = vrot.lane.b32.xlu0 %v729, 64
        %v2127 = vpop.permute.xlu0 %2126
        %2128 = vrot.lane.b32.xlu0 %v731, 64
        %v2129 = vpop.permute.xlu0 %2128
        %2130 = vrot.lane.b32.xlu0 %v733, 64
        %v2131 = vpop.permute.xlu0 %2130
        %2132 = vrot.lane.b32.xlu0 %v735, 64
        %v2133 = vpop.permute.xlu0 %2132
        %2134 = vrot.lane.b32.xlu0 %v737, 64
        %v2135 = vpop.permute.xlu0 %2134
        %2136 = vrot.lane.b32.xlu0 %v739, 64
        %v2137 = vpop.permute.xlu0 %2136
        %2138 = vrot.lane.b32.xlu0 %v741, 64
        %v2139 = vpop.permute.xlu0 %2138
        %2140 = vrot.lane.b32.xlu0 %v743, 64
        %v2141 = vpop.permute.xlu0 %2140
        %2142 = vrot.lane.b32.xlu0 %v745, 64
        %v2143 = vpop.permute.xlu0 %2142
        %2144 = vrot.lane.b32.xlu0 %v747, 64
        %v2145 = vpop.permute.xlu0 %2144
        %2146 = vrot.lane.b32.xlu0 %v749, 64
        %v2147 = vpop.permute.xlu0 %2146
        %2148 = vrot.lane.b32.xlu0 %v751, 64
        %v2149 = vpop.permute.xlu0 %2148
        %2150 = vrot.lane.b32.xlu0 %v753, 64
        %v2151 = vpop.permute.xlu0 %2150
        %2152 = vrot.lane.b32.xlu0 %v755, 64
        %v2153 = vpop.permute.xlu0 %2152
        %2154 = vrot.lane.b32.xlu0 %v757, 64
        %v2155 = vpop.permute.xlu0 %2154
        %2156 = vrot.lane.b32.xlu0 %v759, 64
        %v2157 = vpop.permute.xlu0 %2156
        %2158 = vrot.lane.b32.xlu0 %v761, 64
        %v2159 = vpop.permute.xlu0 %2158
        %2160 = vrot.lane.b32.xlu0 %v763, 64
        %v2161 = vpop.permute.xlu0 %2160
        %2162 = vrot.lane.b32.xlu0 %v765, 64
        %v2163 = vpop.permute.xlu0 %2162
        %2164 = vrot.lane.b32.xlu0 %v767, 64
        %v2165 = vpop.permute.xlu0 %2164
        %2166 = vrot.lane.b32.xlu0 %v769, 64
        %v2167 = vpop.permute.xlu0 %2166
        %2168 = vrot.lane.b32.xlu0 %v771, 64
        %v2169 = vpop.permute.xlu0 %2168
        %2170 = vrot.lane.b32.xlu0 %v773, 64
        %v2171 = vpop.permute.xlu0 %2170
        %2172 = vrot.lane.b32.xlu0 %v775, 64
        %v2173 = vpop.permute.xlu0 %2172
        %2174 = vrot.lane.b32.xlu0 %v777, 64
        %v2175 = vpop.permute.xlu0 %2174
        %v2208 = vadd.f32 %v2080, %v2113
        %v2209 = vadd.f32 %v2081, %v2115
        %v2210 = vadd.f32 %v2082, %v2117
        %v2211 = vadd.f32 %v2083, %v2119
        %v2212 = vadd.f32 %v2084, %v2121
        %v2213 = vadd.f32 %v2085, %v2123
        %v2214 = vadd.f32 %v2086, %v2125
        %v2215 = vadd.f32 %v2087, %v2127
        %v2216 = vadd.f32 %v2088, %v2129
        %v2217 = vadd.f32 %v2089, %v2131
        %v2218 = vadd.f32 %v2090, %v2133
        %v2219 = vadd.f32 %v2091, %v2135
        %v2220 = vadd.f32 %v2092, %v2137
        %v2221 = vadd.f32 %v2093, %v2139
        %v2222 = vadd.f32 %v2094, %v2141
        %v2223 = vadd.f32 %v2095, %v2143
        %v2224 = vadd.f32 %v2096, %v2145
        %v2225 = vadd.f32 %v2097, %v2147
        %v2226 = vadd.f32 %v2098, %v2149
        %v2227 = vadd.f32 %v2099, %v2151
        %v2228 = vadd.f32 %v2100, %v2153
        %v2229 = vadd.f32 %v2101, %v2155
        %v2230 = vadd.f32 %v2102, %v2157
        %v2231 = vadd.f32 %v2103, %v2159
        %v2232 = vadd.f32 %v2104, %v2161
        %v2233 = vadd.f32 %v2105, %v2163
        %v2234 = vadd.f32 %v2106, %v2165
        %v2235 = vadd.f32 %v2107, %v2167
        %v2236 = vadd.f32 %v2108, %v2169
        %v2237 = vadd.f32 %v2109, %v2171
        %v2238 = vadd.f32 %v2110, %v2173
        %v2239 = vadd.f32 %v2111, %v2175
        %v2240 = vmax.f32 %v2208, 0.0
        %v2241 = vmax.f32 %v2209, 0.0
        %v2242 = vmax.f32 %v2210, 0.0
        %v2243 = vmax.f32 %v2211, 0.0
        %v2244 = vmax.f32 %v2212, 0.0
        %v2245 = vmax.f32 %v2213, 0.0
        %v2246 = vmax.f32 %v2214, 0.0
        %v2247 = vmax.f32 %v2215, 0.0
        %v2248 = vmax.f32 %v2216, 0.0
        %v2249 = vmax.f32 %v2217, 0.0
        %v2250 = vmax.f32 %v2218, 0.0
        %v2251 = vmax.f32 %v2219, 0.0
        %v2252 = vmax.f32 %v2220, 0.0
        %v2253 = vmax.f32 %v2221, 0.0
        %v2254 = vmax.f32 %v2222, 0.0
        %v2255 = vmax.f32 %v2223, 0.0
        %v2256 = vmax.f32 %v2224, 0.0
        %v2257 = vmax.f32 %v2225, 0.0
        %v2258 = vmax.f32 %v2226, 0.0
        %v2259 = vmax.f32 %v2227, 0.0
        %v2260 = vmax.f32 %v2228, 0.0
        %v2261 = vmax.f32 %v2229, 0.0
        %v2262 = vmax.f32 %v2230, 0.0
        %v2263 = vmax.f32 %v2231, 0.0
        %v2264 = vmax.f32 %v2232, 0.0
        %v2265 = vmax.f32 %v2233, 0.0
        %v2266 = vmax.f32 %v2234, 0.0
        %v2267 = vmax.f32 %v2235, 0.0
        %v2268 = vmax.f32 %v2236, 0.0
        %v2269 = vmax.f32 %v2237, 0.0
        %v2270 = vmax.f32 %v2238, 0.0
        %v2271 = vmax.f32 %v2239, 0.0
        %s2272 = scalar_lea.vmem %s3, 192
        %v2273 = vld [vmem:[%s2272] sm:$0xf]
        %v2274 = vld [vmem:[%s2272 + $0x4] sm:$0xf]
        %v2275 = vld [vmem:[%s2272 + $0x8] sm:$0xf]
        %v2276 = vld [vmem:[%s2272 + $0xc] sm:$0xf]
        %v2277 = vld [vmem:[%s2272 + $0x10] sm:$0xf]
        %v2278 = vld [vmem:[%s2272 + $0x14] sm:$0xf]
        %v2279 = vld [vmem:[%s2272 + $0x18] sm:$0xf]
        %v2280 = vld [vmem:[%s2272 + $0x1c] sm:$0xf]
        %v2281 = vld [vmem:[%s2272 + $0x20] sm:$0xf]
        %v2282 = vld [vmem:[%s2272 + $0x24] sm:$0xf]
        %v2283 = vld [vmem:[%s2272 + $0x28] sm:$0xf]
        %v2284 = vld [vmem:[%s2272 + $0x2c] sm:$0xf]
        %v2285 = vld [vmem:[%s2272 + $0x30] sm:$0xf]
        %v2286 = vld [vmem:[%s2272 + $0x34] sm:$0xf]
        %v2287 = vld [vmem:[%s2272 + $0x38] sm:$0xf]
        %v2288 = vld [vmem:[%s2272 + $0x3c] sm:$0xf]
        %v2289 = vld [vmem:[%s2272 + $0x40] sm:$0xf]
        %v2290 = vld [vmem:[%s2272 + $0x44] sm:$0xf]
        %v2291 = vld [vmem:[%s2272 + $0x48] sm:$0xf]
        %v2292 = vld [vmem:[%s2272 + $0x4c] sm:$0xf]
        %v2293 = vld [vmem:[%s2272 + $0x50] sm:$0xf]
        %v2294 = vld [vmem:[%s2272 + $0x54] sm:$0xf]
        %v2295 = vld [vmem:[%s2272 + $0x58] sm:$0xf]
        %v2296 = vld [vmem:[%s2272 + $0x5c] sm:$0xf]
        %s2297 = scalar_lea.vmem %s4, 2
        %v2298 = vld [vmem:[%s2297] sm:$0x1]
        %v2331 = vrot.slane %v2240, 7
        %v2332 = vrot.slane %v2241, 7
        %v2333 = vsel %vm836, %v2331, %v2332
        %v2334 = vrot.slane %v2242, 7
        %v2335 = vrot.slane %v2243, 7
        %v2336 = vsel %vm836, %v2334, %v2335
        %v2337 = vrot.slane %v2244, 7
        %v2338 = vrot.slane %v2245, 7
        %v2339 = vsel %vm836, %v2337, %v2338
        %v2340 = vrot.slane %v2246, 7
        %v2341 = vrot.slane %v2247, 7
        %v2342 = vsel %vm836, %v2340, %v2341
        %v2343 = vrot.slane %v2248, 7
        %v2344 = vrot.slane %v2249, 7
        %v2345 = vsel %vm836, %v2343, %v2344
        %v2346 = vrot.slane %v2250, 7
        %v2347 = vrot.slane %v2251, 7
        %v2348 = vsel %vm836, %v2346, %v2347
        %v2349 = vrot.slane %v2252, 7
        %v2350 = vrot.slane %v2253, 7
        %v2351 = vsel %vm836, %v2349, %v2350
        %v2352 = vrot.slane %v2254, 7
        %v2353 = vrot.slane %v2255, 7
        %v2354 = vsel %vm836, %v2352, %v2353
        %v2355 = vrot.slane %v2256, 7
        %v2356 = vrot.slane %v2257, 7
        %v2357 = vsel %vm836, %v2355, %v2356
        %v2358 = vrot.slane %v2258, 7
        %v2359 = vrot.slane %v2259, 7
        %v2360 = vsel %vm836, %v2358, %v2359
        %v2361 = vrot.slane %v2260, 7
        %v2362 = vrot.slane %v2261, 7
        %v2363 = vsel %vm836, %v2361, %v2362
        %v2364 = vrot.slane %v2262, 7
        %v2365 = vrot.slane %v2263, 7
        %v2366 = vsel %vm836, %v2364, %v2365
        %v2367 = vrot.slane %v2264, 7
        %v2368 = vrot.slane %v2265, 7
        %v2369 = vsel %vm836, %v2367, %v2368
        %v2370 = vrot.slane %v2266, 7
        %v2371 = vrot.slane %v2267, 7
        %v2372 = vsel %vm836, %v2370, %v2371
        %v2373 = vrot.slane %v2268, 7
        %v2374 = vrot.slane %v2269, 7
        %v2375 = vsel %vm836, %v2373, %v2374
        %v2376 = vrot.slane %v2270, 7
        %v2377 = vrot.slane %v2271, 7
        %v2378 = vsel %vm836, %v2376, %v2377
        %v2411 = vsel %vm836, 0.0, %v2331
        %v2412 = vsel %vm836, 0.0, %v2334
        %v2413 = vsel %vm836, 0.0, %v2337
        %v2414 = vsel %vm836, 0.0, %v2340
        %v2415 = vsel %vm836, 0.0, %v2343
        %v2416 = vsel %vm836, 0.0, %v2346
        %v2417 = vsel %vm836, 0.0, %v2349
        %v2418 = vsel %vm836, 0.0, %v2352
        %v2419 = vsel %vm836, 0.0, %v2355
        %v2420 = vsel %vm836, 0.0, %v2358
        %v2421 = vsel %vm836, 0.0, %v2361
        %v2422 = vsel %vm836, 0.0, %v2364
        %v2423 = vsel %vm836, 0.0, %v2367
        %v2424 = vsel %vm836, 0.0, %v2370
        %v2425 = vsel %vm836, 0.0, %v2373
        %v2426 = vsel %vm836, 0.0, %v2376
        %v2427 = vrot.slane %v2240, 1
        %v2428 = vrot.slane %v2241, 1
        %v2429 = vsel %vm997, %v2427, %v2428
        %v2430 = vrot.slane %v2242, 1
        %v2431 = vrot.slane %v2243, 1
        %v2432 = vsel %vm997, %v2430, %v2431
        %v2433 = vrot.slane %v2244, 1
        %v2434 = vrot.slane %v2245, 1
        %v2435 = vsel %vm997, %v2433, %v2434
        %v2436 = vrot.slane %v2246, 1
        %v2437 = vrot.slane %v2247, 1
        %v2438 = vsel %vm997, %v2436, %v2437
        %v2439 = vrot.slane %v2248, 1
        %v2440 = vrot.slane %v2249, 1
        %v2441 = vsel %vm997, %v2439, %v2440
        %v2442 = vrot.slane %v2250, 1
        %v2443 = vrot.slane %v2251, 1
        %v2444 = vsel %vm997, %v2442, %v2443
        %v2445 = vrot.slane %v2252, 1
        %v2446 = vrot.slane %v2253, 1
        %v2447 = vsel %vm997, %v2445, %v2446
        %v2448 = vrot.slane %v2254, 1
        %v2449 = vrot.slane %v2255, 1
        %v2450 = vsel %vm997, %v2448, %v2449
        %v2451 = vrot.slane %v2256, 1
        %v2452 = vrot.slane %v2257, 1
        %v2453 = vsel %vm997, %v2451, %v2452
        %v2454 = vrot.slane %v2258, 1
        %v2455 = vrot.slane %v2259, 1
        %v2456 = vsel %vm997, %v2454, %v2455
        %v2457 = vrot.slane %v2260, 1
        %v2458 = vrot.slane %v2261, 1
        %v2459 = vsel %vm997, %v2457, %v2458
        %v2460 = vrot.slane %v2262, 1
        %v2461 = vrot.slane %v2263, 1
        %v2462 = vsel %vm997, %v2460, %v2461
        %v2463 = vrot.slane %v2264, 1
        %v2464 = vrot.slane %v2265, 1
        %v2465 = vsel %vm997, %v2463, %v2464
        %v2466 = vrot.slane %v2266, 1
        %v2467 = vrot.slane %v2267, 1
        %v2468 = vsel %vm997, %v2466, %v2467
        %v2469 = vrot.slane %v2268, 1
        %v2470 = vrot.slane %v2269, 1
        %v2471 = vsel %vm997, %v2469, %v2470
        %v2472 = vrot.slane %v2270, 1
        %v2473 = vrot.slane %v2271, 1
        %v2474 = vsel %vm997, %v2472, %v2473
        %v2507 = vsel %vm997, %v2428, 0.0
        %v2508 = vsel %vm997, %v2431, 0.0
        %v2509 = vsel %vm997, %v2434, 0.0
        %v2510 = vsel %vm997, %v2437, 0.0
        %v2511 = vsel %vm997, %v2440, 0.0
        %v2512 = vsel %vm997, %v2443, 0.0
        %v2513 = vsel %vm997, %v2446, 0.0
        %v2514 = vsel %vm997, %v2449, 0.0
        %v2515 = vsel %vm997, %v2452, 0.0
        %v2516 = vsel %vm997, %v2455, 0.0
        %v2517 = vsel %vm997, %v2458, 0.0
        %v2518 = vsel %vm997, %v2461, 0.0
        %v2519 = vsel %vm997, %v2464, 0.0
        %v2520 = vsel %vm997, %v2467, 0.0
        %v2521 = vsel %vm997, %v2470, 0.0
        %v2522 = vsel %vm997, %v2473, 0.0
        %2523 = vrot.lane.b32.xlu0 %v2240, 64
        %v2524 = vpop.permute.xlu0 %2523
        %2525 = vrot.lane.b32.xlu0 %v2241, 64
        %v2526 = vpop.permute.xlu0 %2525
        %2527 = vrot.lane.b32.xlu0 %v2242, 64
        %v2528 = vpop.permute.xlu0 %2527
        %2529 = vrot.lane.b32.xlu0 %v2243, 64
        %v2530 = vpop.permute.xlu0 %2529
        %2531 = vrot.lane.b32.xlu0 %v2244, 64
        %v2532 = vpop.permute.xlu0 %2531
        %2533 = vrot.lane.b32.xlu0 %v2245, 64
        %v2534 = vpop.permute.xlu0 %2533
        %2535 = vrot.lane.b32.xlu0 %v2246, 64
        %v2536 = vpop.permute.xlu0 %2535
        %2537 = vrot.lane.b32.xlu0 %v2247, 64
        %v2538 = vpop.permute.xlu0 %2537
        %2539 = vrot.lane.b32.xlu0 %v2248, 64
        %v2540 = vpop.permute.xlu0 %2539
        %2541 = vrot.lane.b32.xlu0 %v2249, 64
        %v2542 = vpop.permute.xlu0 %2541
        %2543 = vrot.lane.b32.xlu0 %v2250, 64
        %v2544 = vpop.permute.xlu0 %2543
        %2545 = vrot.lane.b32.xlu0 %v2251, 64
        %v2546 = vpop.permute.xlu0 %2545
        %2547 = vrot.lane.b32.xlu0 %v2252, 64
        %v2548 = vpop.permute.xlu0 %2547
        %2549 = vrot.lane.b32.xlu0 %v2253, 64
        %v2550 = vpop.permute.xlu0 %2549
        %2551 = vrot.lane.b32.xlu0 %v2254, 64
        %v2552 = vpop.permute.xlu0 %2551
        %2553 = vrot.lane.b32.xlu0 %v2255, 64
        %v2554 = vpop.permute.xlu0 %2553
        %2555 = vrot.lane.b32.xlu0 %v2256, 64
        %v2556 = vpop.permute.xlu0 %2555
        %2557 = vrot.lane.b32.xlu0 %v2257, 64
        %v2558 = vpop.permute.xlu0 %2557
        %2559 = vrot.lane.b32.xlu0 %v2258, 64
        %v2560 = vpop.permute.xlu0 %2559
        %2561 = vrot.lane.b32.xlu0 %v2259, 64
        %v2562 = vpop.permute.xlu0 %2561
        %2563 = vrot.lane.b32.xlu0 %v2260, 64
        %v2564 = vpop.permute.xlu0 %2563
        %2565 = vrot.lane.b32.xlu0 %v2261, 64
        %v2566 = vpop.permute.xlu0 %2565
        %2567 = vrot.lane.b32.xlu0 %v2262, 64
        %v2568 = vpop.permute.xlu0 %2567
        %2569 = vrot.lane.b32.xlu0 %v2263, 64
        %v2570 = vpop.permute.xlu0 %2569
        %2571 = vrot.lane.b32.xlu0 %v2264, 64
        %v2572 = vpop.permute.xlu0 %2571
        %2573 = vrot.lane.b32.xlu0 %v2265, 64
        %v2574 = vpop.permute.xlu0 %2573
        %2575 = vrot.lane.b32.xlu0 %v2266, 64
        %v2576 = vpop.permute.xlu0 %2575
        %2577 = vrot.lane.b32.xlu0 %v2267, 64
        %v2578 = vpop.permute.xlu0 %2577
        %2579 = vrot.lane.b32.xlu0 %v2268, 64
        %v2580 = vpop.permute.xlu0 %2579
        %2581 = vrot.lane.b32.xlu0 %v2269, 64
        %v2582 = vpop.permute.xlu0 %2581
        %2583 = vrot.lane.b32.xlu0 %v2270, 64
        %v2584 = vpop.permute.xlu0 %2583
        %2585 = vrot.lane.b32.xlu0 %v2271, 64
        %v2586 = vpop.permute.xlu0 %2585
        %v2619 = vsel %vm1190, %v2411, %v2524
        %v2620 = vsel %vm1190, %v2333, %v2526
        %v2621 = vsel %vm1190, %v2412, %v2528
        %v2622 = vsel %vm1190, %v2336, %v2530
        %v2623 = vsel %vm1190, %v2413, %v2532
        %v2624 = vsel %vm1190, %v2339, %v2534
        %v2625 = vsel %vm1190, %v2414, %v2536
        %v2626 = vsel %vm1190, %v2342, %v2538
        %v2627 = vsel %vm1190, %v2415, %v2540
        %v2628 = vsel %vm1190, %v2345, %v2542
        %v2629 = vsel %vm1190, %v2416, %v2544
        %v2630 = vsel %vm1190, %v2348, %v2546
        %v2631 = vsel %vm1190, %v2417, %v2548
        %v2632 = vsel %vm1190, %v2351, %v2550
        %v2633 = vsel %vm1190, %v2418, %v2552
        %v2634 = vsel %vm1190, %v2354, %v2554
        %v2635 = vsel %vm1190, %v2419, %v2556
        %v2636 = vsel %vm1190, %v2357, %v2558
        %v2637 = vsel %vm1190, %v2420, %v2560
        %v2638 = vsel %vm1190, %v2360, %v2562
        %v2639 = vsel %vm1190, %v2421, %v2564
        %v2640 = vsel %vm1190, %v2363, %v2566
        %v2641 = vsel %vm1190, %v2422, %v2568
        %v2642 = vsel %vm1190, %v2366, %v2570
        %v2643 = vsel %vm1190, %v2423, %v2572
        %v2644 = vsel %vm1190, %v2369, %v2574
        %v2645 = vsel %vm1190, %v2424, %v2576
        %v2646 = vsel %vm1190, %v2372, %v2578
        %v2647 = vsel %vm1190, %v2425, %v2580
        %v2648 = vsel %vm1190, %v2375, %v2582
        %v2649 = vsel %vm1190, %v2426, %v2584
        %v2650 = vsel %vm1190, %v2378, %v2586
        %v2651 = vpack.c.bf16 %v2620, %v2619
        %v2652 = vpack.c.bf16 %v2507, %v2429
        %v2653 = vpack.c.bf16 %v2622, %v2621
        %v2654 = vpack.c.bf16 %v2508, %v2432
        %v2655 = vpack.c.bf16 %v2624, %v2623
        %v2656 = vpack.c.bf16 %v2509, %v2435
        %v2657 = vpack.c.bf16 %v2626, %v2625
        %v2658 = vpack.c.bf16 %v2510, %v2438
        %v2659 = vpack.c.bf16 %v2628, %v2627
        %v2660 = vpack.c.bf16 %v2511, %v2441
        %v2661 = vpack.c.bf16 %v2630, %v2629
        %v2662 = vpack.c.bf16 %v2512, %v2444
        %v2663 = vpack.c.bf16 %v2632, %v2631
        %v2664 = vpack.c.bf16 %v2513, %v2447
        %v2665 = vpack.c.bf16 %v2634, %v2633
        %v2666 = vpack.c.bf16 %v2514, %v2450
        %v2667 = vpack.c.bf16 %v2636, %v2635
        %v2668 = vpack.c.bf16 %v2515, %v2453
        %v2669 = vpack.c.bf16 %v2638, %v2637
        %v2670 = vpack.c.bf16 %v2516, %v2456
        %v2671 = vpack.c.bf16 %v2640, %v2639
        %v2672 = vpack.c.bf16 %v2517, %v2459
        %v2673 = vpack.c.bf16 %v2642, %v2641
        %v2674 = vpack.c.bf16 %v2518, %v2462
        %v2675 = vpack.c.bf16 %v2644, %v2643
        %v2676 = vpack.c.bf16 %v2519, %v2465
        %v2677 = vpack.c.bf16 %v2646, %v2645
        %v2678 = vpack.c.bf16 %v2520, %v2468
        %v2679 = vpack.c.bf16 %v2648, %v2647
        %v2680 = vpack.c.bf16 %v2521, %v2471
        %v2681 = vpack.c.bf16 %v2650, %v2649
        %v2682 = vpack.c.bf16 %v2522, %v2474
        %v2684 = vlaneseq
        %v2685 = vshrl.u32 %v2684, 7
        %v2686 = vsub.s32 0, %v2685
        %v2687 = vrot.slane %v2298, %v2686
        %v2713 = vunpack.c.l.b16 %v2273
        %v2714 = vunpack.c.l.b16 %v2274
        %v2715 = vunpack.c.l.b16 %v2275
        %v2716 = vunpack.c.l.b16 %v2276
        %v2717 = vunpack.c.l.b16 %v2277
        %v2718 = vunpack.c.l.b16 %v2278
        %v2719 = vunpack.c.l.b16 %v2279
        %v2720 = vunpack.c.l.b16 %v2280
        %v2721 = vunpack.c.l.b16 %v2281
        %v2722 = vunpack.c.l.b16 %v2282
        %v2723 = vunpack.c.l.b16 %v2283
        %v2724 = vunpack.c.l.b16 %v2284
        %v2725 = vunpack.c.l.b16 %v2285
        %v2726 = vunpack.c.l.b16 %v2286
        %v2727 = vunpack.c.l.b16 %v2287
        %v2728 = vunpack.c.l.b16 %v2288
        %v2729 = vunpack.c.l.b16 %v2289
        %v2730 = vunpack.c.l.b16 %v2290
        %v2731 = vunpack.c.l.b16 %v2291
        %v2732 = vunpack.c.l.b16 %v2292
        %v2733 = vunpack.c.l.b16 %v2293
        %v2734 = vunpack.c.l.b16 %v2294
        %v2735 = vunpack.c.l.b16 %v2295
        %v2736 = vunpack.c.l.b16 %v2296
        %v2737 = vpack.c.b16 %v2714, %v2713
        %v2738 = vpack.c.b16 %v2716, %v2715
        %v2739 = vpack.c.b16 %v2718, %v2717
        %v2740 = vpack.c.b16 %v2720, %v2719
        %v2741 = vpack.c.b16 %v2722, %v2721
        %v2742 = vpack.c.b16 %v2724, %v2723
        %v2743 = vpack.c.b16 %v2726, %v2725
        %v2744 = vpack.c.b16 %v2728, %v2727
        %v2745 = vpack.c.b16 %v2730, %v2729
        %v2746 = vpack.c.b16 %v2732, %v2731
        %v2747 = vpack.c.b16 %v2734, %v2733
        %v2748 = vpack.c.b16 %v2736, %v2735
        %v2762 = vsel %vm1190, %v2652, 0
        %v2765 = vsel %vm1190, %v2654, 0
        %v2768 = vsel %vm1190, %v2656, 0
        %v2771 = vsel %vm1190, %v2658, 0
        %v2774 = vsel %vm1190, %v2660, 0
        %v2777 = vsel %vm1190, %v2662, 0
        %v2780 = vsel %vm1190, %v2664, 0
        %v2783 = vsel %vm1190, %v2666, 0
        %v2786 = vsel %vm1190, %v2668, 0
        %v2789 = vsel %vm1190, %v2670, 0
        %v2792 = vsel %vm1190, %v2672, 0
        %v2795 = vsel %vm1190, %v2674, 0
        %v2798 = vsel %vm1190, %v2676, 0
        %v2801 = vsel %vm1190, %v2678, 0
        %v2804 = vsel %vm1190, %v2680, 0
        %v2807 = vsel %vm1190, %v2682, 0
        %2809 = vmatprep.subr.bf16.mxu0 0
        %2810 = vmatpush1.bf16.msra.mxu0 %v2737
        %2811 = vmatprep.subr.bf16.mxu0 0
        %2812 = vmatpush1.bf16.msra.mxu0 %v2738
        %2813 = vmatprep.subr.bf16.mxu0 0
        %2814 = vmatpush1.bf16.msra.mxu0 %v2739
        %2815 = vmatprep.subr.bf16.mxu0 0
        %2816 = vmatpush1.bf16.msra.mxu0 %v2740
        %2817 = vmatprep.subr.bf16.mxu0 0
        %2818 = vmatpush1.bf16.msra.mxu0 %v2741
        %2819 = vmatprep.subr.bf16.mxu0 0
        %2820 = vmatpush1.bf16.msra.mxu0 %v2742
        %2821 = vmatprep.subr.bf16.mxu0 0
        %2822 = vmatpush1.bf16.msra.mxu0 %v2743
        %2823 = vmatprep.subr.bf16.mxu0 0
        %2824 = vmatpush1.bf16.msra.mxu0 %v2744
        %2825 = vmatprep.subr.bf16.mxu0 0
        %2826 = vmatpush1.bf16.msra.mxu0 %v2745
        %2827 = vmatprep.subr.bf16.mxu0 0
        %2828 = vmatpush1.bf16.msra.mxu0 %v2746
        %2829 = vmatprep.subr.bf16.mxu0 0
        %2830 = vmatpush1.bf16.msra.mxu0 %v2747
        %2831 = vmatprep.subr.bf16.mxu0 0
        %2832 = vmatpush1.bf16.msra.mxu0 %v2748
        %2833 = vmatprep.subr.bf16.mxu0 0
        %2834 = vmatpush1.bf16.msra.mxu0 0
        %2835 = vmatprep.subr.bf16.mxu0 0
        %2836 = vmatpush1.bf16.msra.mxu0 0
        %2837 = vmatprep.subr.bf16.mxu0 0
        %2838 = vmatpush1.bf16.msra.mxu0 0
        %2839 = vmatprep.subr.bf16.mxu0 0
        %2840 = vmatpush1.bf16.msra.mxu0 0
        %2841 = vmatprep.mubr.bf16.mxu0 %v2762
        %2842 = vmatmul.mubr.bf16.gmra.mrb[0].mxu0 %v2651
        %v2843 = vpop.f32.mrb[0].mxu0
        %v2844 = vadd.f32 %v2687, %v2843
        %v2845 = vpop.f32.mrb[0].mxu0
        %v2846 = vpop.f32.mrb[0].mxu0
        %v2847 = vadd.f32 %v2687, %v2846
        %v2848 = vpop.f32.mrb[0].mxu0
        %2849 = vmatprep.mubr.bf16.mxu0 %v2765
        %2850 = vmatmul.mubr.bf16.gmra.mrb[0].mxu0 %v2653
        %v2851 = vpop.f32.mrb[0].mxu0
        %v2852 = vadd.f32 %v2687, %v2851
        %v2853 = vpop.f32.mrb[0].mxu0
        %v2854 = vpop.f32.mrb[0].mxu0
        %v2855 = vadd.f32 %v2687, %v2854
        %v2856 = vpop.f32.mrb[0].mxu0
        %2857 = vmatprep.mubr.bf16.mxu0 %v2768
        %2858 = vmatmul.mubr.bf16.gmra.mrb[0].mxu0 %v2655
        %v2859 = vpop.f32.mrb[0].mxu0
        %v2860 = vadd.f32 %v2687, %v2859
        %v2861 = vpop.f32.mrb[0].mxu0
        %v2862 = vpop.f32.mrb[0].mxu0
        %v2863 = vadd.f32 %v2687, %v2862
        %v2864 = vpop.f32.mrb[0].mxu0
        %2865 = vmatprep.mubr.bf16.mxu0 %v2771
        %2866 = vmatmul.mubr.bf16.gmra.mrb[0].mxu0 %v2657
        %v2867 = vpop.f32.mrb[0].mxu0
        %v2868 = vadd.f32 %v2687, %v2867
        %v2869 = vpop.f32.mrb[0].mxu0
        %v2870 = vpop.f32.mrb[0].mxu0
        %v2871 = vadd.f32 %v2687, %v2870
        %v2872 = vpop.f32.mrb[0].mxu0
        %2873 = vmatprep.mubr.bf16.mxu0 %v2774
        %2874 = vmatmul.mubr.bf16.gmra.mrb[0].mxu0 %v2659
        %v2875 = vpop.f32.mrb[0].mxu0
        %v2876 = vadd.f32 %v2687, %v2875
        %v2877 = vpop.f32.mrb[0].mxu0
        %v2878 = vpop.f32.mrb[0].mxu0
        %v2879 = vadd.f32 %v2687, %v2878
        %v2880 = vpop.f32.mrb[0].mxu0
        %2881 = vmatprep.mubr.bf16.mxu0 %v2777
        %2882 = vmatmul.mubr.bf16.gmra.mrb[0].mxu0 %v2661
        %v2883 = vpop.f32.mrb[0].mxu0
        %v2884 = vadd.f32 %v2687, %v2883
        %v2885 = vpop.f32.mrb[0].mxu0
        %v2886 = vpop.f32.mrb[0].mxu0
        %v2887 = vadd.f32 %v2687, %v2886
        %v2888 = vpop.f32.mrb[0].mxu0
        %2889 = vmatprep.mubr.bf16.mxu0 %v2780
        %2890 = vmatmul.mubr.bf16.gmra.mrb[0].mxu0 %v2663
        %v2891 = vpop.f32.mrb[0].mxu0
        %v2892 = vadd.f32 %v2687, %v2891
        %v2893 = vpop.f32.mrb[0].mxu0
        %v2894 = vpop.f32.mrb[0].mxu0
        %v2895 = vadd.f32 %v2687, %v2894
        %v2896 = vpop.f32.mrb[0].mxu0
        %2897 = vmatprep.mubr.bf16.mxu0 %v2783
        %2898 = vmatmul.mubr.bf16.gmra.mrb[0].mxu0 %v2665
        %v2899 = vpop.f32.mrb[0].mxu0
        %v2900 = vadd.f32 %v2687, %v2899
        %v2901 = vpop.f32.mrb[0].mxu0
        %v2902 = vpop.f32.mrb[0].mxu0
        %v2903 = vadd.f32 %v2687, %v2902
        %v2904 = vpop.f32.mrb[0].mxu0
        %2905 = vmatprep.mubr.bf16.mxu0 %v2786
        %2906 = vmatmul.mubr.bf16.gmra.mrb[0].mxu0 %v2667
        %v2907 = vpop.f32.mrb[0].mxu0
        %v2908 = vadd.f32 %v2687, %v2907
        %v2909 = vpop.f32.mrb[0].mxu0
        %v2910 = vpop.f32.mrb[0].mxu0
        %v2911 = vadd.f32 %v2687, %v2910
        %v2912 = vpop.f32.mrb[0].mxu0
        %2913 = vmatprep.mubr.bf16.mxu0 %v2789
        %2914 = vmatmul.mubr.bf16.gmra.mrb[0].mxu0 %v2669
        %v2915 = vpop.f32.mrb[0].mxu0
        %v2916 = vadd.f32 %v2687, %v2915
        %v2917 = vpop.f32.mrb[0].mxu0
        %v2918 = vpop.f32.mrb[0].mxu0
        %v2919 = vadd.f32 %v2687, %v2918
        %v2920 = vpop.f32.mrb[0].mxu0
        %2921 = vmatprep.mubr.bf16.mxu0 %v2792
        %2922 = vmatmul.mubr.bf16.gmra.mrb[0].mxu0 %v2671
        %v2923 = vpop.f32.mrb[0].mxu0
        %v2924 = vadd.f32 %v2687, %v2923
        %v2925 = vpop.f32.mrb[0].mxu0
        %v2926 = vpop.f32.mrb[0].mxu0
        %v2927 = vadd.f32 %v2687, %v2926
        %v2928 = vpop.f32.mrb[0].mxu0
        %2929 = vmatprep.mubr.bf16.mxu0 %v2795
        %2930 = vmatmul.mubr.bf16.gmra.mrb[0].mxu0 %v2673
        %v2931 = vpop.f32.mrb[0].mxu0
        %v2932 = vadd.f32 %v2687, %v2931
        %v2933 = vpop.f32.mrb[0].mxu0
        %v2934 = vpop.f32.mrb[0].mxu0
        %v2935 = vadd.f32 %v2687, %v2934
        %v2936 = vpop.f32.mrb[0].mxu0
        %2937 = vmatprep.mubr.bf16.mxu0 %v2798
        %2938 = vmatmul.mubr.bf16.gmra.mrb[0].mxu0 %v2675
        %v2939 = vpop.f32.mrb[0].mxu0
        %v2940 = vadd.f32 %v2687, %v2939
        %v2941 = vpop.f32.mrb[0].mxu0
        %v2942 = vpop.f32.mrb[0].mxu0
        %v2943 = vadd.f32 %v2687, %v2942
        %v2944 = vpop.f32.mrb[0].mxu0
        %2945 = vmatprep.mubr.bf16.mxu0 %v2801
        %2946 = vmatmul.mubr.bf16.gmra.mrb[0].mxu0 %v2677
        %v2947 = vpop.f32.mrb[0].mxu0
        %v2948 = vadd.f32 %v2687, %v2947
        %v2949 = vpop.f32.mrb[0].mxu0
        %v2950 = vpop.f32.mrb[0].mxu0
        %v2951 = vadd.f32 %v2687, %v2950
        %v2952 = vpop.f32.mrb[0].mxu0
        %2953 = vmatprep.mubr.bf16.mxu0 %v2804
        %2954 = vmatmul.mubr.bf16.gmra.mrb[0].mxu0 %v2679
        %v2955 = vpop.f32.mrb[0].mxu0
        %v2956 = vadd.f32 %v2687, %v2955
        %v2957 = vpop.f32.mrb[0].mxu0
        %v2958 = vpop.f32.mrb[0].mxu0
        %v2959 = vadd.f32 %v2687, %v2958
        %v2960 = vpop.f32.mrb[0].mxu0
        %2961 = vmatprep.mubr.bf16.mxu0 %v2807
        %2962 = vmatmul.mubr.bf16.gmra.mrb[0].mxu0 %v2681
        %v2963 = vpop.f32.mrb[0].mxu0
        %v2964 = vadd.f32 %v2687, %v2963
        %v2965 = vpop.f32.mrb[0].mxu0
        %v2966 = vpop.f32.mrb[0].mxu0
        %v2967 = vadd.f32 %v2687, %v2966
        %v2968 = vpop.f32.mrb[0].mxu0
        %2969 = vdwg.mxu0
        %v2970 = vmax.f32 %v2844, 0.0
        %v2971 = vmax.f32 %v2847, 0.0
        %v2972 = vmax.f32 %v2852, 0.0
        %v2973 = vmax.f32 %v2855, 0.0
        %v2974 = vmax.f32 %v2860, 0.0
        %v2975 = vmax.f32 %v2863, 0.0
        %v2976 = vmax.f32 %v2868, 0.0
        %v2977 = vmax.f32 %v2871, 0.0
        %v2978 = vmax.f32 %v2876, 0.0
        %v2979 = vmax.f32 %v2879, 0.0
        %v2980 = vmax.f32 %v2884, 0.0
        %v2981 = vmax.f32 %v2887, 0.0
        %v2982 = vmax.f32 %v2892, 0.0
        %v2983 = vmax.f32 %v2895, 0.0
        %v2984 = vmax.f32 %v2900, 0.0
        %v2985 = vmax.f32 %v2903, 0.0
        %v2986 = vmax.f32 %v2908, 0.0
        %v2987 = vmax.f32 %v2911, 0.0
        %v2988 = vmax.f32 %v2916, 0.0
        %v2989 = vmax.f32 %v2919, 0.0
        %v2990 = vmax.f32 %v2924, 0.0
        %v2991 = vmax.f32 %v2927, 0.0
        %v2992 = vmax.f32 %v2932, 0.0
        %v2993 = vmax.f32 %v2935, 0.0
        %v2994 = vmax.f32 %v2940, 0.0
        %v2995 = vmax.f32 %v2943, 0.0
        %v2996 = vmax.f32 %v2948, 0.0
        %v2997 = vmax.f32 %v2951, 0.0
        %v2998 = vmax.f32 %v2956, 0.0
        %v2999 = vmax.f32 %v2959, 0.0
        %v3000 = vmax.f32 %v2964, 0.0
        %v3001 = vmax.f32 %v2967, 0.0
        %s3002 = scalar_lea.vmem %s3, 288
        %v3003 = vld [vmem:[%s3002] sm:$0xf]
        %v3004 = vld [vmem:[%s3002 + $0x4] sm:$0xf]
        %v3005 = vld [vmem:[%s3002 + $0x8] sm:$0xf]
        %v3006 = vld [vmem:[%s3002 + $0xc] sm:$0xf]
        %v3007 = vld [vmem:[%s3002 + $0x10] sm:$0xf]
        %v3008 = vld [vmem:[%s3002 + $0x14] sm:$0xf]
        %v3009 = vld [vmem:[%s3002 + $0x18] sm:$0xf]
        %v3010 = vld [vmem:[%s3002 + $0x1c] sm:$0xf]
        %v3011 = vld [vmem:[%s3002 + $0x20] sm:$0xf]
        %v3012 = vld [vmem:[%s3002 + $0x24] sm:$0xf]
        %v3013 = vld [vmem:[%s3002 + $0x28] sm:$0xf]
        %v3014 = vld [vmem:[%s3002 + $0x2c] sm:$0xf]
        %v3015 = vld [vmem:[%s3002 + $0x30] sm:$0xf]
        %v3016 = vld [vmem:[%s3002 + $0x34] sm:$0xf]
        %v3017 = vld [vmem:[%s3002 + $0x38] sm:$0xf]
        %v3018 = vld [vmem:[%s3002 + $0x3c] sm:$0xf]
        %v3019 = vld [vmem:[%s3002 + $0x40] sm:$0xf]
        %v3020 = vld [vmem:[%s3002 + $0x44] sm:$0xf]
        %v3021 = vld [vmem:[%s3002 + $0x48] sm:$0xf]
        %v3022 = vld [vmem:[%s3002 + $0x4c] sm:$0xf]
        %v3023 = vld [vmem:[%s3002 + $0x50] sm:$0xf]
        %v3024 = vld [vmem:[%s3002 + $0x54] sm:$0xf]
        %v3025 = vld [vmem:[%s3002 + $0x58] sm:$0xf]
        %v3026 = vld [vmem:[%s3002 + $0x5c] sm:$0xf]
        %s3027 = scalar_lea.vmem %s4, 3
        %v3028 = vld [vmem:[%s3027] sm:$0x1]
        %3061 = vrot.lane.b32.xlu0 %v2970, 64
        %v3062 = vpop.permute.xlu0 %3061
        %3063 = vrot.lane.b32.xlu0 %v2971, 64
        %v3064 = vpop.permute.xlu0 %3063
        %3065 = vrot.lane.b32.xlu0 %v2972, 64
        %v3066 = vpop.permute.xlu0 %3065
        %3067 = vrot.lane.b32.xlu0 %v2973, 64
        %v3068 = vpop.permute.xlu0 %3067
        %3069 = vrot.lane.b32.xlu0 %v2974, 64
        %v3070 = vpop.permute.xlu0 %3069
        %3071 = vrot.lane.b32.xlu0 %v2975, 64
        %v3072 = vpop.permute.xlu0 %3071
        %3073 = vrot.lane.b32.xlu0 %v2976, 64
        %v3074 = vpop.permute.xlu0 %3073
        %3075 = vrot.lane.b32.xlu0 %v2977, 64
        %v3076 = vpop.permute.xlu0 %3075
        %3077 = vrot.lane.b32.xlu0 %v2978, 64
        %v3078 = vpop.permute.xlu0 %3077
        %3079 = vrot.lane.b32.xlu0 %v2979, 64
        %v3080 = vpop.permute.xlu0 %3079
        %3081 = vrot.lane.b32.xlu0 %v2980, 64
        %v3082 = vpop.permute.xlu0 %3081
        %3083 = vrot.lane.b32.xlu0 %v2981, 64
        %v3084 = vpop.permute.xlu0 %3083
        %3085 = vrot.lane.b32.xlu0 %v2982, 64
        %v3086 = vpop.permute.xlu0 %3085
        %3087 = vrot.lane.b32.xlu0 %v2983, 64
        %v3088 = vpop.permute.xlu0 %3087
        %3089 = vrot.lane.b32.xlu0 %v2984, 64
        %v3090 = vpop.permute.xlu0 %3089
        %3091 = vrot.lane.b32.xlu0 %v2985, 64
        %v3092 = vpop.permute.xlu0 %3091
        %3093 = vrot.lane.b32.xlu0 %v2986, 64
        %v3094 = vpop.permute.xlu0 %3093
        %3095 = vrot.lane.b32.xlu0 %v2987, 64
        %v3096 = vpop.permute.xlu0 %3095
        %3097 = vrot.lane.b32.xlu0 %v2988, 64
        %v3098 = vpop.permute.xlu0 %3097
        %3099 = vrot.lane.b32.xlu0 %v2989, 64
        %v3100 = vpop.permute.xlu0 %3099
        %3101 = vrot.lane.b32.xlu0 %v2990, 64
        %v3102 = vpop.permute.xlu0 %3101
        %3103 = vrot.lane.b32.xlu0 %v2991, 64
        %v3104 = vpop.permute.xlu0 %3103
        %3105 = vrot.lane.b32.xlu0 %v2992, 64
        %v3106 = vpop.permute.xlu0 %3105
        %3107 = vrot.lane.b32.xlu0 %v2993, 64
        %v3108 = vpop.permute.xlu0 %3107
        %3109 = vrot.lane.b32.xlu0 %v2994, 64
        %v3110 = vpop.permute.xlu0 %3109
        %3111 = vrot.lane.b32.xlu0 %v2995, 64
        %v3112 = vpop.permute.xlu0 %3111
        %3113 = vrot.lane.b32.xlu0 %v2996, 64
        %v3114 = vpop.permute.xlu0 %3113
        %3115 = vrot.lane.b32.xlu0 %v2997, 64
        %v3116 = vpop.permute.xlu0 %3115
        %3117 = vrot.lane.b32.xlu0 %v2998, 64
        %v3118 = vpop.permute.xlu0 %3117
        %3119 = vrot.lane.b32.xlu0 %v2999, 64
        %v3120 = vpop.permute.xlu0 %3119
        %3121 = vrot.lane.b32.xlu0 %v3000, 64
        %v3122 = vpop.permute.xlu0 %3121
        %3123 = vrot.lane.b32.xlu0 %v3001, 64
        %v3124 = vpop.permute.xlu0 %3123
        %v3157 = vsel %vm1190, 0.0, %v3062
        %v3158 = vsel %vm1190, 0.0, %v3064
        %v3159 = vsel %vm1190, %v2970, %v3066
        %v3160 = vsel %vm1190, %v2971, %v3068
        %v3161 = vsel %vm1190, %v2972, %v3070
        %v3162 = vsel %vm1190, %v2973, %v3072
        %v3163 = vsel %vm1190, %v2974, %v3074
        %v3164 = vsel %vm1190, %v2975, %v3076
        %v3165 = vsel %vm1190, %v2976, %v3078
        %v3166 = vsel %vm1190, %v2977, %v3080
        %v3167 = vsel %vm1190, %v2978, %v3082
        %v3168 = vsel %vm1190, %v2979, %v3084
        %v3169 = vsel %vm1190, %v2980, %v3086
        %v3170 = vsel %vm1190, %v2981, %v3088
        %v3171 = vsel %vm1190, %v2982, %v3090
        %v3172 = vsel %vm1190, %v2983, %v3092
        %v3173 = vsel %vm1190, %v2984, %v3094
        %v3174 = vsel %vm1190, %v2985, %v3096
        %v3175 = vsel %vm1190, %v2986, %v3098
        %v3176 = vsel %vm1190, %v2987, %v3100
        %v3177 = vsel %vm1190, %v2988, %v3102
        %v3178 = vsel %vm1190, %v2989, %v3104
        %v3179 = vsel %vm1190, %v2990, %v3106
        %v3180 = vsel %vm1190, %v2991, %v3108
        %v3181 = vsel %vm1190, %v2992, %v3110
        %v3182 = vsel %vm1190, %v2993, %v3112
        %v3183 = vsel %vm1190, %v2994, %v3114
        %v3184 = vsel %vm1190, %v2995, %v3116
        %v3185 = vsel %vm1190, %v2996, %v3118
        %v3186 = vsel %vm1190, %v2997, %v3120
        %v3187 = vsel %vm1190, %v2998, %v3122
        %v3188 = vsel %vm1190, %v2999, %v3124
        %v3189 = vpack.c.bf16 %v3158, %v3157
        %v3190 = vpack.c.bf16 %v2973, %v2972
        %v3191 = vpack.c.bf16 %v3160, %v3159
        %v3192 = vpack.c.bf16 %v2975, %v2974
        %v3193 = vpack.c.bf16 %v3162, %v3161
        %v3194 = vpack.c.bf16 %v2977, %v2976
        %v3195 = vpack.c.bf16 %v3164, %v3163
        %v3196 = vpack.c.bf16 %v2979, %v2978
        %v3197 = vpack.c.bf16 %v3166, %v3165
        %v3198 = vpack.c.bf16 %v2981, %v2980
        %v3199 = vpack.c.bf16 %v3168, %v3167
        %v3200 = vpack.c.bf16 %v2983, %v2982
        %v3201 = vpack.c.bf16 %v3170, %v3169
        %v3202 = vpack.c.bf16 %v2985, %v2984
        %v3203 = vpack.c.bf16 %v3172, %v3171
        %v3204 = vpack.c.bf16 %v2987, %v2986
        %v3205 = vpack.c.bf16 %v3174, %v3173
        %v3206 = vpack.c.bf16 %v2989, %v2988
        %v3207 = vpack.c.bf16 %v3176, %v3175
        %v3208 = vpack.c.bf16 %v2991, %v2990
        %v3209 = vpack.c.bf16 %v3178, %v3177
        %v3210 = vpack.c.bf16 %v2993, %v2992
        %v3211 = vpack.c.bf16 %v3180, %v3179
        %v3212 = vpack.c.bf16 %v2995, %v2994
        %v3213 = vpack.c.bf16 %v3182, %v3181
        %v3214 = vpack.c.bf16 %v2997, %v2996
        %v3215 = vpack.c.bf16 %v3184, %v3183
        %v3216 = vpack.c.bf16 %v2999, %v2998
        %v3217 = vpack.c.bf16 %v3186, %v3185
        %v3218 = vpack.c.bf16 %v3001, %v3000
        %v3219 = vpack.c.bf16 %v3188, %v3187
        %v3221 = vlaneseq
        %v3222 = vshrl.u32 %v3221, 7
        %v3223 = vsub.s32 0, %v3222
        %v3224 = vrot.slane %v3028, %v3223
        %v3250 = vunpack.c.l.b16 %v3003
        %v3251 = vunpack.c.l.b16 %v3004
        %v3252 = vunpack.c.l.b16 %v3005
        %v3253 = vunpack.c.l.b16 %v3006
        %v3254 = vunpack.c.l.b16 %v3007
        %v3255 = vunpack.c.l.b16 %v3008
        %v3256 = vunpack.c.l.b16 %v3009
        %v3257 = vunpack.c.l.b16 %v3010
        %v3258 = vunpack.c.l.b16 %v3011
        %v3259 = vunpack.c.l.b16 %v3012
        %v3260 = vunpack.c.l.b16 %v3013
        %v3261 = vunpack.c.l.b16 %v3014
        %v3262 = vunpack.c.l.b16 %v3015
        %v3263 = vunpack.c.l.b16 %v3016
        %v3264 = vunpack.c.l.b16 %v3017
        %v3265 = vunpack.c.l.b16 %v3018
        %v3266 = vunpack.c.l.b16 %v3019
        %v3267 = vunpack.c.l.b16 %v3020
        %v3268 = vunpack.c.l.b16 %v3021
        %v3269 = vunpack.c.l.b16 %v3022
        %v3270 = vunpack.c.l.b16 %v3023
        %v3271 = vunpack.c.l.b16 %v3024
        %v3272 = vunpack.c.l.b16 %v3025
        %v3273 = vunpack.c.l.b16 %v3026
        %v3274 = vpack.c.b16 %v3251, %v3250
        %v3275 = vpack.c.b16 %v3253, %v3252
        %v3276 = vpack.c.b16 %v3255, %v3254
        %v3277 = vpack.c.b16 %v3257, %v3256
        %v3278 = vpack.c.b16 %v3259, %v3258
        %v3279 = vpack.c.b16 %v3261, %v3260
        %v3280 = vpack.c.b16 %v3263, %v3262
        %v3281 = vpack.c.b16 %v3265, %v3264
        %v3282 = vpack.c.b16 %v3267, %v3266
        %v3283 = vpack.c.b16 %v3269, %v3268
        %v3284 = vpack.c.b16 %v3271, %v3270
        %v3285 = vpack.c.b16 %v3273, %v3272
        %v3299 = vsel %vm1190, %v3190, 0
        %v3302 = vsel %vm1190, %v3192, 0
        %v3305 = vsel %vm1190, %v3194, 0
        %v3308 = vsel %vm1190, %v3196, 0
        %v3311 = vsel %vm1190, %v3198, 0
        %v3314 = vsel %vm1190, %v3200, 0
        %v3317 = vsel %vm1190, %v3202, 0
        %v3320 = vsel %vm1190, %v3204, 0
        %v3323 = vsel %vm1190, %v3206, 0
        %v3326 = vsel %vm1190, %v3208, 0
        %v3329 = vsel %vm1190, %v3210, 0
        %v3332 = vsel %vm1190, %v3212, 0
        %v3335 = vsel %vm1190, %v3214, 0
        %v3338 = vsel %vm1190, %v3216, 0
        %v3341 = vsel %vm1190, %v3218, 0
        %3343 = vmatprep.subr.bf16.mxu0 0
        %3344 = vmatpush1.bf16.msra.mxu0 %v3274
        %3345 = vmatprep.subr.bf16.mxu0 0
        %3346 = vmatpush1.bf16.msra.mxu0 %v3275
        %3347 = vmatprep.subr.bf16.mxu0 0
        %3348 = vmatpush1.bf16.msra.mxu0 %v3276
        %3349 = vmatprep.subr.bf16.mxu0 0
        %3350 = vmatpush1.bf16.msra.mxu0 %v3277
        %3351 = vmatprep.subr.bf16.mxu0 0
        %3352 = vmatpush1.bf16.msra.mxu0 %v3278
        %3353 = vmatprep.subr.bf16.mxu0 0
        %3354 = vmatpush1.bf16.msra.mxu0 %v3279
        %3355 = vmatprep.subr.bf16.mxu0 0
        %3356 = vmatpush1.bf16.msra.mxu0 %v3280
        %3357 = vmatprep.subr.bf16.mxu0 0
        %3358 = vmatpush1.bf16.msra.mxu0 %v3281
        %3359 = vmatprep.subr.bf16.mxu0 0
        %3360 = vmatpush1.bf16.msra.mxu0 %v3282
        %3361 = vmatprep.subr.bf16.mxu0 0
        %3362 = vmatpush1.bf16.msra.mxu0 %v3283
        %3363 = vmatprep.subr.bf16.mxu0 0
        %3364 = vmatpush1.bf16.msra.mxu0 %v3284
        %3365 = vmatprep.subr.bf16.mxu0 0
        %3366 = vmatpush1.bf16.msra.mxu0 %v3285
        %3367 = vmatprep.subr.bf16.mxu0 0
        %3368 = vmatpush1.bf16.msra.mxu0 0
        %3369 = vmatprep.subr.bf16.mxu0 0
        %3370 = vmatpush1.bf16.msra.mxu0 0
        %3371 = vmatprep.subr.bf16.mxu0 0
        %3372 = vmatpush1.bf16.msra.mxu0 0
        %3373 = vmatprep.subr.bf16.mxu0 0
        %3374 = vmatpush1.bf16.msra.mxu0 0
        %3375 = vmatprep.mubr.bf16.mxu0 %v3299
        %3376 = vmatmul.mubr.bf16.gmra.mrb[0].mxu0 %v3189
        %v3377 = vpop.f32.mrb[0].mxu0
        %v3378 = vadd.f32 %v3224, %v3377
        %v3379 = vpop.f32.mrb[0].mxu0
        %v3380 = vpop.f32.mrb[0].mxu0
        %v3381 = vadd.f32 %v3224, %v3380
        %v3382 = vpop.f32.mrb[0].mxu0
        %3383 = vmatprep.mubr.bf16.mxu0 %v3302
        %3384 = vmatmul.mubr.bf16.gmra.mrb[0].mxu0 %v3191
        %v3385 = vpop.f32.mrb[0].mxu0
        %v3386 = vadd.f32 %v3224, %v3385
        %v3387 = vpop.f32.mrb[0].mxu0
        %v3388 = vpop.f32.mrb[0].mxu0
        %v3389 = vadd.f32 %v3224, %v3388
        %v3390 = vpop.f32.mrb[0].mxu0
        %3391 = vmatprep.mubr.bf16.mxu0 %v3305
        %3392 = vmatmul.mubr.bf16.gmra.mrb[0].mxu0 %v3193
        %v3393 = vpop.f32.mrb[0].mxu0
        %v3394 = vadd.f32 %v3224, %v3393
        %v3395 = vpop.f32.mrb[0].mxu0
        %v3396 = vpop.f32.mrb[0].mxu0
        %v3397 = vadd.f32 %v3224, %v3396
        %v3398 = vpop.f32.mrb[0].mxu0
        %3399 = vmatprep.mubr.bf16.mxu0 %v3308
        %3400 = vmatmul.mubr.bf16.gmra.mrb[0].mxu0 %v3195
        %v3401 = vpop.f32.mrb[0].mxu0
        %v3402 = vadd.f32 %v3224, %v3401
        %v3403 = vpop.f32.mrb[0].mxu0
        %v3404 = vpop.f32.mrb[0].mxu0
        %v3405 = vadd.f32 %v3224, %v3404
        %v3406 = vpop.f32.mrb[0].mxu0
        %3407 = vmatprep.mubr.bf16.mxu0 %v3311
        %3408 = vmatmul.mubr.bf16.gmra.mrb[0].mxu0 %v3197
        %v3409 = vpop.f32.mrb[0].mxu0
        %v3410 = vadd.f32 %v3224, %v3409
        %v3411 = vpop.f32.mrb[0].mxu0
        %v3412 = vpop.f32.mrb[0].mxu0
        %v3413 = vadd.f32 %v3224, %v3412
        %v3414 = vpop.f32.mrb[0].mxu0
        %3415 = vmatprep.mubr.bf16.mxu0 %v3314
        %3416 = vmatmul.mubr.bf16.gmra.mrb[0].mxu0 %v3199
        %v3417 = vpop.f32.mrb[0].mxu0
        %v3418 = vadd.f32 %v3224, %v3417
        %v3419 = vpop.f32.mrb[0].mxu0
        %v3420 = vpop.f32.mrb[0].mxu0
        %v3421 = vadd.f32 %v3224, %v3420
        %v3422 = vpop.f32.mrb[0].mxu0
        %3423 = vmatprep.mubr.bf16.mxu0 %v3317
        %3424 = vmatmul.mubr.bf16.gmra.mrb[0].mxu0 %v3201
        %v3425 = vpop.f32.mrb[0].mxu0
        %v3426 = vadd.f32 %v3224, %v3425
        %v3427 = vpop.f32.mrb[0].mxu0
        %v3428 = vpop.f32.mrb[0].mxu0
        %v3429 = vadd.f32 %v3224, %v3428
        %v3430 = vpop.f32.mrb[0].mxu0
        %3431 = vmatprep.mubr.bf16.mxu0 %v3320
        %3432 = vmatmul.mubr.bf16.gmra.mrb[0].mxu0 %v3203
        %v3433 = vpop.f32.mrb[0].mxu0
        %v3434 = vadd.f32 %v3224, %v3433
        %v3435 = vpop.f32.mrb[0].mxu0
        %v3436 = vpop.f32.mrb[0].mxu0
        %v3437 = vadd.f32 %v3224, %v3436
        %v3438 = vpop.f32.mrb[0].mxu0
        %3439 = vmatprep.mubr.bf16.mxu0 %v3323
        %3440 = vmatmul.mubr.bf16.gmra.mrb[0].mxu0 %v3205
        %v3441 = vpop.f32.mrb[0].mxu0
        %v3442 = vadd.f32 %v3224, %v3441
        %v3443 = vpop.f32.mrb[0].mxu0
        %v3444 = vpop.f32.mrb[0].mxu0
        %v3445 = vadd.f32 %v3224, %v3444
        %v3446 = vpop.f32.mrb[0].mxu0
        %3447 = vmatprep.mubr.bf16.mxu0 %v3326
        %3448 = vmatmul.mubr.bf16.gmra.mrb[0].mxu0 %v3207
        %v3449 = vpop.f32.mrb[0].mxu0
        %v3450 = vadd.f32 %v3224, %v3449
        %v3451 = vpop.f32.mrb[0].mxu0
        %v3452 = vpop.f32.mrb[0].mxu0
        %v3453 = vadd.f32 %v3224, %v3452
        %v3454 = vpop.f32.mrb[0].mxu0
        %3455 = vmatprep.mubr.bf16.mxu0 %v3329
        %3456 = vmatmul.mubr.bf16.gmra.mrb[0].mxu0 %v3209
        %v3457 = vpop.f32.mrb[0].mxu0
        %v3458 = vadd.f32 %v3224, %v3457
        %v3459 = vpop.f32.mrb[0].mxu0
        %v3460 = vpop.f32.mrb[0].mxu0
        %v3461 = vadd.f32 %v3224, %v3460
        %v3462 = vpop.f32.mrb[0].mxu0
        %3463 = vmatprep.mubr.bf16.mxu0 %v3332
        %3464 = vmatmul.mubr.bf16.gmra.mrb[0].mxu0 %v3211
        %v3465 = vpop.f32.mrb[0].mxu0
        %v3466 = vadd.f32 %v3224, %v3465
        %v3467 = vpop.f32.mrb[0].mxu0
        %v3468 = vpop.f32.mrb[0].mxu0
        %v3469 = vadd.f32 %v3224, %v3468
        %v3470 = vpop.f32.mrb[0].mxu0
        %3471 = vmatprep.mubr.bf16.mxu0 %v3335
        %3472 = vmatmul.mubr.bf16.gmra.mrb[0].mxu0 %v3213
        %v3473 = vpop.f32.mrb[0].mxu0
        %v3474 = vadd.f32 %v3224, %v3473
        %v3475 = vpop.f32.mrb[0].mxu0
        %v3476 = vpop.f32.mrb[0].mxu0
        %v3477 = vadd.f32 %v3224, %v3476
        %v3478 = vpop.f32.mrb[0].mxu0
        %3479 = vmatprep.mubr.bf16.mxu0 %v3338
        %3480 = vmatmul.mubr.bf16.gmra.mrb[0].mxu0 %v3215
        %v3481 = vpop.f32.mrb[0].mxu0
        %v3482 = vadd.f32 %v3224, %v3481
        %v3483 = vpop.f32.mrb[0].mxu0
        %v3484 = vpop.f32.mrb[0].mxu0
        %v3485 = vadd.f32 %v3224, %v3484
        %v3486 = vpop.f32.mrb[0].mxu0
        %3487 = vmatprep.mubr.bf16.mxu0 %v3341
        %3488 = vmatmul.mubr.bf16.gmra.mrb[0].mxu0 %v3217
        %v3489 = vpop.f32.mrb[0].mxu0
        %v3490 = vadd.f32 %v3224, %v3489
        %v3491 = vpop.f32.mrb[0].mxu0
        %v3492 = vpop.f32.mrb[0].mxu0
        %v3493 = vadd.f32 %v3224, %v3492
        %v3494 = vpop.f32.mrb[0].mxu0
        %3495 = vmatprep.mubr.bf16.mxu0 %v1917
        %3496 = vmatmul.mubr.bf16.gmra.mrb[0].mxu0 %v3219
        %v3497 = vpop.f32.mrb[0].mxu0
        %v3498 = vadd.f32 %v3224, %v3497
        %v3499 = vpop.f32.mrb[0].mxu0
        %v3500 = vpop.f32.mrb[0].mxu0
        %v3501 = vadd.f32 %v3224, %v3500
        %v3502 = vpop.f32.mrb[0].mxu0
        %3503 = vdwg.mxu0
        %v3504 = vmax.f32 %v3378, 0.0
        %v3505 = vmax.f32 %v3381, 0.0
        %v3506 = vmax.f32 %v3386, 0.0
        %v3507 = vmax.f32 %v3389, 0.0
        %v3508 = vmax.f32 %v3394, 0.0
        %v3509 = vmax.f32 %v3397, 0.0
        %v3510 = vmax.f32 %v3402, 0.0
        %v3511 = vmax.f32 %v3405, 0.0
        %v3512 = vmax.f32 %v3410, 0.0
        %v3513 = vmax.f32 %v3413, 0.0
        %v3514 = vmax.f32 %v3418, 0.0
        %v3515 = vmax.f32 %v3421, 0.0
        %v3516 = vmax.f32 %v3426, 0.0
        %v3517 = vmax.f32 %v3429, 0.0
        %v3518 = vmax.f32 %v3434, 0.0
        %v3519 = vmax.f32 %v3437, 0.0
        %v3520 = vmax.f32 %v3442, 0.0
        %v3521 = vmax.f32 %v3445, 0.0
        %v3522 = vmax.f32 %v3450, 0.0
        %v3523 = vmax.f32 %v3453, 0.0
        %v3524 = vmax.f32 %v3458, 0.0
        %v3525 = vmax.f32 %v3461, 0.0
        %v3526 = vmax.f32 %v3466, 0.0
        %v3527 = vmax.f32 %v3469, 0.0
        %v3528 = vmax.f32 %v3474, 0.0
        %v3529 = vmax.f32 %v3477, 0.0
        %v3530 = vmax.f32 %v3482, 0.0
        %v3531 = vmax.f32 %v3485, 0.0
        %v3532 = vmax.f32 %v3490, 0.0
        %v3533 = vmax.f32 %v3493, 0.0
        %v3534 = vmax.f32 %v3498, 0.0
        %v3535 = vmax.f32 %v3501, 0.0
        %v3536 = vadd.f32 %v3504, %v2240
        %v3537 = vadd.f32 %v3505, %v2241
        %v3538 = vadd.f32 %v3506, %v2242
        %v3539 = vadd.f32 %v3507, %v2243
        %v3540 = vadd.f32 %v3508, %v2244
        %v3541 = vadd.f32 %v3509, %v2245
        %v3542 = vadd.f32 %v3510, %v2246
        %v3543 = vadd.f32 %v3511, %v2247
        %v3544 = vadd.f32 %v3512, %v2248
        %v3545 = vadd.f32 %v3513, %v2249
        %v3546 = vadd.f32 %v3514, %v2250
        %v3547 = vadd.f32 %v3515, %v2251
        %v3548 = vadd.f32 %v3516, %v2252
        %v3549 = vadd.f32 %v3517, %v2253
        %v3550 = vadd.f32 %v3518, %v2254
        %v3551 = vadd.f32 %v3519, %v2255
        %v3552 = vadd.f32 %v3520, %v2256
        %v3553 = vadd.f32 %v3521, %v2257
        %v3554 = vadd.f32 %v3522, %v2258
        %v3555 = vadd.f32 %v3523, %v2259
        %v3556 = vadd.f32 %v3524, %v2260
        %v3557 = vadd.f32 %v3525, %v2261
        %v3558 = vadd.f32 %v3526, %v2262
        %v3559 = vadd.f32 %v3527, %v2263
        %v3560 = vadd.f32 %v3528, %v2264
        %v3561 = vadd.f32 %v3529, %v2265
        %v3562 = vadd.f32 %v3530, %v2266
        %v3563 = vadd.f32 %v3531, %v2267
        %v3564 = vadd.f32 %v3532, %v2268
        %v3565 = vadd.f32 %v3533, %v2269
        %v3566 = vadd.f32 %v3534, %v2270
        %v3567 = vadd.f32 %v3535, %v2271
        %v3568 = vmax.f32 %v3536, 0.0
        %v3569 = vmax.f32 %v3537, 0.0
        %v3570 = vmax.f32 %v3538, 0.0
        %v3571 = vmax.f32 %v3539, 0.0
        %v3572 = vmax.f32 %v3540, 0.0
        %v3573 = vmax.f32 %v3541, 0.0
        %v3574 = vmax.f32 %v3542, 0.0
        %v3575 = vmax.f32 %v3543, 0.0
        %v3576 = vmax.f32 %v3544, 0.0
        %v3577 = vmax.f32 %v3545, 0.0
        %v3578 = vmax.f32 %v3546, 0.0
        %v3579 = vmax.f32 %v3547, 0.0
        %v3580 = vmax.f32 %v3548, 0.0
        %v3581 = vmax.f32 %v3549, 0.0
        %v3582 = vmax.f32 %v3550, 0.0
        %v3583 = vmax.f32 %v3551, 0.0
        %v3584 = vmax.f32 %v3552, 0.0
        %v3585 = vmax.f32 %v3553, 0.0
        %v3586 = vmax.f32 %v3554, 0.0
        %v3587 = vmax.f32 %v3555, 0.0
        %v3588 = vmax.f32 %v3556, 0.0
        %v3589 = vmax.f32 %v3557, 0.0
        %v3590 = vmax.f32 %v3558, 0.0
        %v3591 = vmax.f32 %v3559, 0.0
        %v3592 = vmax.f32 %v3560, 0.0
        %v3593 = vmax.f32 %v3561, 0.0
        %v3594 = vmax.f32 %v3562, 0.0
        %v3595 = vmax.f32 %v3563, 0.0
        %v3596 = vmax.f32 %v3564, 0.0
        %v3597 = vmax.f32 %v3565, 0.0
        %v3598 = vmax.f32 %v3566, 0.0
        %v3599 = vmax.f32 %v3567, 0.0
        %v3600 = vld [vmem:[%s5] sm:$0xf]
        %v3601 = vld [vmem:[%s5 + $0x4] sm:$0xf]
        %v3602 = vld [vmem:[%s5 + $0x8] sm:$0xf]
        %v3603 = vld [vmem:[%s5 + $0xc] sm:$0xf]
        %v3604 = vld [vmem:[%s5 + $0x10] sm:$0xf]
        %v3605 = vld [vmem:[%s5 + $0x14] sm:$0xf]
        %v3606 = vld [vmem:[%s5 + $0x18] sm:$0xf]
        %v3607 = vld [vmem:[%s5 + $0x1c] sm:$0xf]
        %v3608 = vld [vmem:[%s5 + $0x20] sm:$0xf]
        %v3609 = vld [vmem:[%s5 + $0x24] sm:$0xf]
        %v3610 = vld [vmem:[%s5 + $0x28] sm:$0xf]
        %v3611 = vld [vmem:[%s5 + $0x2c] sm:$0xf]
        %v3612 = vld [vmem:[%s5 + $0x30] sm:$0xf]
        %v3613 = vld [vmem:[%s5 + $0x34] sm:$0xf]
        %v3614 = vld [vmem:[%s5 + $0x38] sm:$0xf]
        %v3615 = vld [vmem:[%s5 + $0x3c] sm:$0xf]
        %v3616 = vld [vmem:[%s5 + $0x40] sm:$0xf]
        %v3617 = vld [vmem:[%s5 + $0x44] sm:$0xf]
        %v3618 = vld [vmem:[%s6] sm:$0x1]
        %v3651 = vrot.slane %v716, 7
        %v3652 = vrot.slane %v718, 7
        %v3653 = vsel %vm836, %v3651, %v3652
        %v3654 = vrot.slane %v720, 7
        %v3655 = vrot.slane %v722, 7
        %v3656 = vsel %vm836, %v3654, %v3655
        %v3657 = vrot.slane %v724, 7
        %v3658 = vrot.slane %v726, 7
        %v3659 = vsel %vm836, %v3657, %v3658
        %v3660 = vrot.slane %v728, 7
        %v3661 = vrot.slane %v730, 7
        %v3662 = vsel %vm836, %v3660, %v3661
        %v3663 = vrot.slane %v732, 7
        %v3664 = vrot.slane %v734, 7
        %v3665 = vsel %vm836, %v3663, %v3664
        %v3666 = vrot.slane %v736, 7
        %v3667 = vrot.slane %v738, 7
        %v3668 = vsel %vm836, %v3666, %v3667
        %v3669 = vrot.slane %v740, 7
        %v3670 = vrot.slane %v742, 7
        %v3671 = vsel %vm836, %v3669, %v3670
        %v3672 = vrot.slane %v744, 7
        %v3673 = vrot.slane %v746, 7
        %v3674 = vsel %vm836, %v3672, %v3673
        %v3675 = vrot.slane %v748, 7
        %v3676 = vrot.slane %v750, 7
        %v3677 = vsel %vm836, %v3675, %v3676
        %v3678 = vrot.slane %v752, 7
        %v3679 = vrot.slane %v754, 7
        %v3680 = vsel %vm836, %v3678, %v3679
        %v3681 = vrot.slane %v756, 7
        %v3682 = vrot.slane %v758, 7
        %v3683 = vsel %vm836, %v3681, %v3682
        %v3684 = vrot.slane %v760, 7
        %v3685 = vrot.slane %v762, 7
        %v3686 = vsel %vm836, %v3684, %v3685
        %v3687 = vrot.slane %v764, 7
        %v3688 = vrot.slane %v766, 7
        %v3689 = vsel %vm836, %v3687, %v3688
        %v3690 = vrot.slane %v768, 7
        %v3691 = vrot.slane %v770, 7
        %v3692 = vsel %vm836, %v3690, %v3691
        %v3693 = vrot.slane %v772, 7
        %v3694 = vrot.slane %v774, 7
        %v3695 = vsel %vm836, %v3693, %v3694
        %v3696 = vrot.slane %v776, 7
        %v3697 = vrot.slane %v778, 7
        %v3698 = vsel %vm836, %v3696, %v3697
        %v3731 = vsel %vm836, 0.0, %v3651
        %v3732 = vsel %vm836, 0.0, %v3654
        %v3733 = vsel %vm836, 0.0, %v3657
        %v3734 = vsel %vm836, 0.0, %v3660
        %v3735 = vsel %vm836, 0.0, %v3663
        %v3736 = vsel %vm836, 0.0, %v3666
        %v3737 = vsel %vm836, 0.0, %v3669
        %v3738 = vsel %vm836, 0.0, %v3672
        %v3739 = vsel %vm836, 0.0, %v3675
        %v3740 = vsel %vm836, 0.0, %v3678
        %v3741 = vsel %vm836, 0.0, %v3681
        %v3742 = vsel %vm836, 0.0, %v3684
        %v3743 = vsel %vm836, 0.0, %v3687
        %v3744 = vsel %vm836, 0.0, %v3690
        %v3745 = vsel %vm836, 0.0, %v3693
        %v3746 = vsel %vm836, 0.0, %v3696
        %v3747 = vrot.slane %v716, 1
        %v3748 = vrot.slane %v718, 1
        %v3749 = vsel %vm997, %v3747, %v3748
        %v3750 = vrot.slane %v720, 1
        %v3751 = vrot.slane %v722, 1
        %v3752 = vsel %vm997, %v3750, %v3751
        %v3753 = vrot.slane %v724, 1
        %v3754 = vrot.slane %v726, 1
        %v3755 = vsel %vm997, %v3753, %v3754
        %v3756 = vrot.slane %v728, 1
        %v3757 = vrot.slane %v730, 1
        %v3758 = vsel %vm997, %v3756, %v3757
        %v3759 = vrot.slane %v732, 1
        %v3760 = vrot.slane %v734, 1
        %v3761 = vsel %vm997, %v3759, %v3760
        %v3762 = vrot.slane %v736, 1
        %v3763 = vrot.slane %v738, 1
        %v3764 = vsel %vm997, %v3762, %v3763
        %v3765 = vrot.slane %v740, 1
        %v3766 = vrot.slane %v742, 1
        %v3767 = vsel %vm997, %v3765, %v3766
        %v3768 = vrot.slane %v744, 1
        %v3769 = vrot.slane %v746, 1
        %v3770 = vsel %vm997, %v3768, %v3769
        %v3771 = vrot.slane %v748, 1
        %v3772 = vrot.slane %v750, 1
        %v3773 = vsel %vm997, %v3771, %v3772
        %v3774 = vrot.slane %v752, 1
        %v3775 = vrot.slane %v754, 1
        %v3776 = vsel %vm997, %v3774, %v3775
        %v3777 = vrot.slane %v756, 1
        %v3778 = vrot.slane %v758, 1
        %v3779 = vsel %vm997, %v3777, %v3778
        %v3780 = vrot.slane %v760, 1
        %v3781 = vrot.slane %v762, 1
        %v3782 = vsel %vm997, %v3780, %v3781
        %v3783 = vrot.slane %v764, 1
        %v3784 = vrot.slane %v766, 1
        %v3785 = vsel %vm997, %v3783, %v3784
        %v3786 = vrot.slane %v768, 1
        %v3787 = vrot.slane %v770, 1
        %v3788 = vsel %vm997, %v3786, %v3787
        %v3789 = vrot.slane %v772, 1
        %v3790 = vrot.slane %v774, 1
        %v3791 = vsel %vm997, %v3789, %v3790
        %v3792 = vrot.slane %v776, 1
        %v3793 = vrot.slane %v778, 1
        %v3794 = vsel %vm997, %v3792, %v3793
        %v3811 = vsel %vm997, %v3748, 0.0
        %v3812 = vsel %vm997, %v3751, 0.0
        %v3813 = vsel %vm997, %v3754, 0.0
        %v3814 = vsel %vm997, %v3757, 0.0
        %v3815 = vsel %vm997, %v3760, 0.0
        %v3816 = vsel %vm997, %v3763, 0.0
        %v3817 = vsel %vm997, %v3766, 0.0
        %v3818 = vsel %vm997, %v3769, 0.0
        %v3819 = vsel %vm997, %v3772, 0.0
        %v3820 = vsel %vm997, %v3775, 0.0
        %v3821 = vsel %vm997, %v3778, 0.0
        %v3822 = vsel %vm997, %v3781, 0.0
        %v3823 = vsel %vm997, %v3784, 0.0
        %v3824 = vsel %vm997, %v3787, 0.0
        %v3825 = vsel %vm997, %v3790, 0.0
        %v3826 = vsel %vm997, %v3793, 0.0
        %3827 = vrot.lane.b32.xlu0 %v716, 48
        %v3828 = vpop.permute.xlu0 %3827
        %3829 = vrot.lane.b32.xlu0 %v718, 48
        %v3830 = vpop.permute.xlu0 %3829
        %3831 = vrot.lane.b32.xlu0 %v720, 48
        %v3832 = vpop.permute.xlu0 %3831
        %3833 = vrot.lane.b32.xlu0 %v722, 48
        %v3834 = vpop.permute.xlu0 %3833
        %3835 = vrot.lane.b32.xlu0 %v724, 48
        %v3836 = vpop.permute.xlu0 %3835
        %3837 = vrot.lane.b32.xlu0 %v726, 48
        %v3838 = vpop.permute.xlu0 %3837
        %3839 = vrot.lane.b32.xlu0 %v728, 48
        %v3840 = vpop.permute.xlu0 %3839
        %3841 = vrot.lane.b32.xlu0 %v730, 48
        %v3842 = vpop.permute.xlu0 %3841
        %3843 = vrot.lane.b32.xlu0 %v732, 48
        %v3844 = vpop.permute.xlu0 %3843
        %3845 = vrot.lane.b32.xlu0 %v734, 48
        %v3846 = vpop.permute.xlu0 %3845
        %3847 = vrot.lane.b32.xlu0 %v736, 48
        %v3848 = vpop.permute.xlu0 %3847
        %3849 = vrot.lane.b32.xlu0 %v738, 48
        %v3850 = vpop.permute.xlu0 %3849
        %3851 = vrot.lane.b32.xlu0 %v740, 48
        %v3852 = vpop.permute.xlu0 %3851
        %3853 = vrot.lane.b32.xlu0 %v742, 48
        %v3854 = vpop.permute.xlu0 %3853
        %3855 = vrot.lane.b32.xlu0 %v744, 48
        %v3856 = vpop.permute.xlu0 %3855
        %3857 = vrot.lane.b32.xlu0 %v746, 48
        %v3858 = vpop.permute.xlu0 %3857
        %3859 = vrot.lane.b32.xlu0 %v748, 48
        %v3860 = vpop.permute.xlu0 %3859
        %3861 = vrot.lane.b32.xlu0 %v750, 48
        %v3862 = vpop.permute.xlu0 %3861
        %3863 = vrot.lane.b32.xlu0 %v752, 48
        %v3864 = vpop.permute.xlu0 %3863
        %3865 = vrot.lane.b32.xlu0 %v754, 48
        %v3866 = vpop.permute.xlu0 %3865
        %3867 = vrot.lane.b32.xlu0 %v756, 48
        %v3868 = vpop.permute.xlu0 %3867
        %3869 = vrot.lane.b32.xlu0 %v758, 48
        %v3870 = vpop.permute.xlu0 %3869
        %3871 = vrot.lane.b32.xlu0 %v760, 48
        %v3872 = vpop.permute.xlu0 %3871
        %3873 = vrot.lane.b32.xlu0 %v762, 48
        %v3874 = vpop.permute.xlu0 %3873
        %3875 = vrot.lane.b32.xlu0 %v764, 48
        %v3876 = vpop.permute.xlu0 %3875
        %3877 = vrot.lane.b32.xlu0 %v766, 48
        %v3878 = vpop.permute.xlu0 %3877
        %3879 = vrot.lane.b32.xlu0 %v768, 48
        %v3880 = vpop.permute.xlu0 %3879
        %3881 = vrot.lane.b32.xlu0 %v770, 48
        %v3882 = vpop.permute.xlu0 %3881
        %3883 = vrot.lane.b32.xlu0 %v772, 48
        %v3884 = vpop.permute.xlu0 %3883
        %3885 = vrot.lane.b32.xlu0 %v774, 48
        %v3886 = vpop.permute.xlu0 %3885
        %3887 = vrot.lane.b32.xlu0 %v776, 48
        %v3888 = vpop.permute.xlu0 %3887
        %3889 = vrot.lane.b32.xlu0 %v778, 48
        %v3890 = vpop.permute.xlu0 %3889
        %3939 = vrot.lane.b32.xlu0 %v3749, 96
        %v3940 = vpop.permute.xlu0 %3939
        %3941 = vrot.lane.b32.xlu0 %v3811, 96
        %v3942 = vpop.permute.xlu0 %3941
        %3943 = vrot.lane.b32.xlu0 %v3752, 96
        %v3944 = vpop.permute.xlu0 %3943
        %3945 = vrot.lane.b32.xlu0 %v3812, 96
        %v3946 = vpop.permute.xlu0 %3945
        %3947 = vrot.lane.b32.xlu0 %v3755, 96
        %v3948 = vpop.permute.xlu0 %3947
        %3949 = vrot.lane.b32.xlu0 %v3813, 96
        %v3950 = vpop.permute.xlu0 %3949
        %3951 = vrot.lane.b32.xlu0 %v3758, 96
        %v3952 = vpop.permute.xlu0 %3951
        %3953 = vrot.lane.b32.xlu0 %v3814, 96
        %v3954 = vpop.permute.xlu0 %3953
        %3955 = vrot.lane.b32.xlu0 %v3761, 96
        %v3956 = vpop.permute.xlu0 %3955
        %3957 = vrot.lane.b32.xlu0 %v3815, 96
        %v3958 = vpop.permute.xlu0 %3957
        %3959 = vrot.lane.b32.xlu0 %v3764, 96
        %v3960 = vpop.permute.xlu0 %3959
        %3961 = vrot.lane.b32.xlu0 %v3816, 96
        %v3962 = vpop.permute.xlu0 %3961
        %3963 = vrot.lane.b32.xlu0 %v3767, 96
        %v3964 = vpop.permute.xlu0 %3963
        %3965 = vrot.lane.b32.xlu0 %v3817, 96
        %v3966 = vpop.permute.xlu0 %3965
        %3967 = vrot.lane.b32.xlu0 %v3770, 96
        %v3968 = vpop.permute.xlu0 %3967
        %3969 = vrot.lane.b32.xlu0 %v3818, 96
        %v3970 = vpop.permute.xlu0 %3969
        %3971 = vrot.lane.b32.xlu0 %v3773, 96
        %v3972 = vpop.permute.xlu0 %3971
        %3973 = vrot.lane.b32.xlu0 %v3819, 96
        %v3974 = vpop.permute.xlu0 %3973
        %3975 = vrot.lane.b32.xlu0 %v3776, 96
        %v3976 = vpop.permute.xlu0 %3975
        %3977 = vrot.lane.b32.xlu0 %v3820, 96
        %v3978 = vpop.permute.xlu0 %3977
        %3979 = vrot.lane.b32.xlu0 %v3779, 96
        %v3980 = vpop.permute.xlu0 %3979
        %3981 = vrot.lane.b32.xlu0 %v3821, 96
        %v3982 = vpop.permute.xlu0 %3981
        %3983 = vrot.lane.b32.xlu0 %v3782, 96
        %v3984 = vpop.permute.xlu0 %3983
        %3985 = vrot.lane.b32.xlu0 %v3822, 96
        %v3986 = vpop.permute.xlu0 %3985
        %3987 = vrot.lane.b32.xlu0 %v3785, 96
        %v3988 = vpop.permute.xlu0 %3987
        %3989 = vrot.lane.b32.xlu0 %v3823, 96
        %v3990 = vpop.permute.xlu0 %3989
        %3991 = vrot.lane.b32.xlu0 %v3788, 96
        %v3992 = vpop.permute.xlu0 %3991
        %3993 = vrot.lane.b32.xlu0 %v3824, 96
        %v3994 = vpop.permute.xlu0 %3993
        %3995 = vrot.lane.b32.xlu0 %v3791, 96
        %v3996 = vpop.permute.xlu0 %3995
        %3997 = vrot.lane.b32.xlu0 %v3825, 96
        %v3998 = vpop.permute.xlu0 %3997
        %3999 = vrot.lane.b32.xlu0 %v3794, 96
        %v4000 = vpop.permute.xlu0 %3999
        %4001 = vrot.lane.b32.xlu0 %v3826, 96
        %v4002 = vpop.permute.xlu0 %4001
        %vm4035 = vcmask 392192
        %v4036 = vsel %vm4035, %v3731, %v3828
        %v4037 = vsel %vm4035, %v3653, %v3830
        %v4038 = vsel %vm4035, %v3732, %v3832
        %v4039 = vsel %vm4035, %v3656, %v3834
        %v4040 = vsel %vm4035, %v3733, %v3836
        %v4041 = vsel %vm4035, %v3659, %v3838
        %v4042 = vsel %vm4035, %v3734, %v3840
        %v4043 = vsel %vm4035, %v3662, %v3842
        %v4044 = vsel %vm4035, %v3735, %v3844
        %v4045 = vsel %vm4035, %v3665, %v3846
        %v4046 = vsel %vm4035, %v3736, %v3848
        %v4047 = vsel %vm4035, %v3668, %v3850
        %v4048 = vsel %vm4035, %v3737, %v3852
        %v4049 = vsel %vm4035, %v3671, %v3854
        %v4050 = vsel %vm4035, %v3738, %v3856
        %v4051 = vsel %vm4035, %v3674, %v3858
        %v4052 = vsel %vm4035, %v3739, %v3860
        %v4053 = vsel %vm4035, %v3677, %v3862
        %v4054 = vsel %vm4035, %v3740, %v3864
        %v4055 = vsel %vm4035, %v3680, %v3866
        %v4056 = vsel %vm4035, %v3741, %v3868
        %v4057 = vsel %vm4035, %v3683, %v3870
        %v4058 = vsel %vm4035, %v3742, %v3872
        %v4059 = vsel %vm4035, %v3686, %v3874
        %v4060 = vsel %vm4035, %v3743, %v3876
        %v4061 = vsel %vm4035, %v3689, %v3878
        %v4062 = vsel %vm4035, %v3744, %v3880
        %v4063 = vsel %vm4035, %v3692, %v3882
        %v4064 = vsel %vm4035, %v3745, %v3884
        %v4065 = vsel %vm4035, %v3695, %v3886
        %v4066 = vsel %vm4035, %v3746, %v3888
        %v4067 = vsel %vm4035, %v3698, %v3890
        %vm4068 = vcmask 785408
        %v4069 = vsel %vm4068, %v4036, %v3940
        %v4070 = vsel %vm4068, %v4037, %v3942
        %v4071 = vsel %vm4068, %v4038, %v3944
        %v4072 = vsel %vm4068, %v4039, %v3946
        %v4073 = vsel %vm4068, %v4040, %v3948
        %v4074 = vsel %vm4068, %v4041, %v3950
        %v4075 = vsel %vm4068, %v4042, %v3952
        %v4076 = vsel %vm4068, %v4043, %v3954
        %v4077 = vsel %vm4068, %v4044, %v3956
        %v4078 = vsel %vm4068, %v4045, %v3958
        %v4079 = vsel %vm4068, %v4046, %v3960
        %v4080 = vsel %vm4068, %v4047, %v3962
        %v4081 = vsel %vm4068, %v4048, %v3964
        %v4082 = vsel %vm4068, %v4049, %v3966
        %v4083 = vsel %vm4068, %v4050, %v3968
        %v4084 = vsel %vm4068, %v4051, %v3970
        %v4085 = vsel %vm4068, %v4052, %v3972
        %v4086 = vsel %vm4068, %v4053, %v3974
        %v4087 = vsel %vm4068, %v4054, %v3976
        %v4088 = vsel %vm4068, %v4055, %v3978
        %v4089 = vsel %vm4068, %v4056, %v3980
        %v4090 = vsel %vm4068, %v4057, %v3982
        %v4091 = vsel %vm4068, %v4058, %v3984
        %v4092 = vsel %vm4068, %v4059, %v3986
        %v4093 = vsel %vm4068, %v4060, %v3988
        %v4094 = vsel %vm4068, %v4061, %v3990
        %v4095 = vsel %vm4068, %v4062, %v3992
        %v4096 = vsel %vm4068, %v4063, %v3994
        %v4097 = vsel %vm4068, %v4064, %v3996
        %v4098 = vsel %vm4068, %v4065, %v3998
        %v4099 = vsel %vm4068, %v4066, %v4000
        %v4100 = vsel %vm4068, %v4067, %v4002
        %v4101 = vpack.c.bf16 %v4070, %v4069
        %v4102 = vpack.c.bf16 %v3942, %v3940
        %v4103 = vpack.c.bf16 %v4072, %v4071
        %v4104 = vpack.c.bf16 %v3946, %v3944
        %v4105 = vpack.c.bf16 %v4074, %v4073
        %v4106 = vpack.c.bf16 %v3950, %v3948
        %v4107 = vpack.c.bf16 %v4076, %v4075
        %v4108 = vpack.c.bf16 %v3954, %v3952
        %v4109 = vpack.c.bf16 %v4078, %v4077
        %v4110 = vpack.c.bf16 %v3958, %v3956
        %v4111 = vpack.c.bf16 %v4080, %v4079
        %v4112 = vpack.c.bf16 %v3962, %v3960
        %v4113 = vpack.c.bf16 %v4082, %v4081
        %v4114 = vpack.c.bf16 %v3966, %v3964
        %v4115 = vpack.c.bf16 %v4084, %v4083
        %v4116 = vpack.c.bf16 %v3970, %v3968
        %v4117 = vpack.c.bf16 %v4086, %v4085
        %v4118 = vpack.c.bf16 %v3974, %v3972
        %v4119 = vpack.c.bf16 %v4088, %v4087
        %v4120 = vpack.c.bf16 %v3978, %v3976
        %v4121 = vpack.c.bf16 %v4090, %v4089
        %v4122 = vpack.c.bf16 %v3982, %v3980
        %v4123 = vpack.c.bf16 %v4092, %v4091
        %v4124 = vpack.c.bf16 %v3986, %v3984
        %v4125 = vpack.c.bf16 %v4094, %v4093
        %v4126 = vpack.c.bf16 %v3990, %v3988
        %v4127 = vpack.c.bf16 %v4096, %v4095
        %v4128 = vpack.c.bf16 %v3994, %v3992
        %v4129 = vpack.c.bf16 %v4098, %v4097
        %v4130 = vpack.c.bf16 %v3998, %v3996
        %v4131 = vpack.c.bf16 %v4100, %v4099
        %v4132 = vpack.c.bf16 %v4002, %v4000
        %v4134 = vlaneseq
        %v4135 = vshrl.u32 %v4134, 7
        %v4136 = vsub.s32 0, %v4135
        %v4137 = vrot.slane %v3618, %v4136
        %v4157 = vunpack.c.l.b16 %v3600
        %v4158 = vunpack.c.l.b16 %v3601
        %v4159 = vunpack.c.l.b16 %v3602
        %v4160 = vunpack.c.l.b16 %v3603
        %v4161 = vunpack.c.l.b16 %v3604
        %v4162 = vunpack.c.l.b16 %v3605
        %v4163 = vunpack.c.l.b16 %v3606
        %v4164 = vunpack.c.l.b16 %v3607
        %v4165 = vunpack.c.l.b16 %v3608
        %v4166 = vunpack.c.l.b16 %v3609
        %v4167 = vunpack.c.l.b16 %v3610
        %v4168 = vunpack.c.l.b16 %v3611
        %v4169 = vunpack.c.l.b16 %v3612
        %v4170 = vunpack.c.l.b16 %v3613
        %v4171 = vunpack.c.l.b16 %v3614
        %v4172 = vunpack.c.l.b16 %v3615
        %v4173 = vunpack.c.l.b16 %v3616
        %v4174 = vunpack.c.l.b16 %v3617
        %v4175 = vpack.c.b16 %v4158, %v4157
        %v4176 = vpack.c.b16 %v4160, %v4159
        %v4177 = vpack.c.b16 %v4162, %v4161
        %v4178 = vpack.c.b16 %v4164, %v4163
        %v4179 = vpack.c.b16 %v4166, %v4165
        %v4180 = vpack.c.b16 %v4168, %v4167
        %v4181 = vpack.c.b16 %v4170, %v4169
        %v4182 = vpack.c.b16 %v4172, %v4171
        %v4183 = vpack.c.b16 %v4174, %v4173
        %vm4193 = vcmask 130048
        %v4195 = vsel %vm4193, %v4102, 0
        %v4198 = vsel %vm4193, %v4104, 0
        %v4201 = vsel %vm4193, %v4106, 0
        %v4204 = vsel %vm4193, %v4108, 0
        %v4207 = vsel %vm4193, %v4110, 0
        %v4210 = vsel %vm4193, %v4112, 0
        %v4213 = vsel %vm4193, %v4114, 0
        %v4216 = vsel %vm4193, %v4116, 0
        %v4219 = vsel %vm4193, %v4118, 0
        %v4222 = vsel %vm4193, %v4120, 0
        %v4225 = vsel %vm4193, %v4122, 0
        %v4228 = vsel %vm4193, %v4124, 0
        %v4231 = vsel %vm4193, %v4126, 0
        %v4234 = vsel %vm4193, %v4128, 0
        %v4237 = vsel %vm4193, %v4130, 0
        %v4240 = vsel %vm4193, %v4132, 0
        %4242 = vmatprep.subr.bf16.mxu0 0
        %4243 = vmatpush1.bf16.msra.mxu0 %v4175
        %4244 = vmatprep.subr.bf16.mxu0 0
        %4245 = vmatpush1.bf16.msra.mxu0 %v4176
        %4246 = vmatprep.subr.bf16.mxu0 0
        %4247 = vmatpush1.bf16.msra.mxu0 %v4177
        %4248 = vmatprep.subr.bf16.mxu0 0
        %4249 = vmatpush1.bf16.msra.mxu0 %v4178
        %4250 = vmatprep.subr.bf16.mxu0 0
        %4251 = vmatpush1.bf16.msra.mxu0 %v4179
        %4252 = vmatprep.subr.bf16.mxu0 0
        %4253 = vmatpush1.bf16.msra.mxu0 %v4180
        %4254 = vmatprep.subr.bf16.mxu0 0
        %4255 = vmatpush1.bf16.msra.mxu0 %v4181
        %4256 = vmatprep.subr.bf16.mxu0 0
        %4257 = vmatpush1.bf16.msra.mxu0 %v4182
        %4258 = vmatprep.subr.bf16.mxu0 0
        %4259 = vmatpush1.bf16.msra.mxu0 %v4183
        %4260 = vmatprep.subr.bf16.mxu0 0
        %4261 = vmatpush1.bf16.msra.mxu0 0
        %4262 = vmatprep.subr.bf16.mxu0 0
        %4263 = vmatpush1.bf16.msra.mxu0 0
        %4264 = vmatprep.subr.bf16.mxu0 0
        %4265 = vmatpush1.bf16.msra.mxu0 0
        %4266 = vmatprep.subr.bf16.mxu0 0
        %4267 = vmatpush1.bf16.msra.mxu0 0
        %4268 = vmatprep.subr.bf16.mxu0 0
        %4269 = vmatpush1.bf16.msra.mxu0 0
        %4270 = vmatprep.subr.bf16.mxu0 0
        %4271 = vmatpush1.bf16.msra.mxu0 0
        %4272 = vmatprep.subr.bf16.mxu0 0
        %4273 = vmatpush1.bf16.msra.mxu0 0
        %4274 = vmatprep.mubr.bf16.mxu0 %v4195
        %4275 = vmatmul.mubr.bf16.gmra.mrb[0].mxu0 %v4101
        %v4276 = vpop.f32.mrb[0].mxu0
        %v4277 = vadd.f32 %v4137, %v4276
        %v4278 = vpop.f32.mrb[0].mxu0
        %v4279 = vpop.f32.mrb[0].mxu0
        %v4280 = vadd.f32 %v4137, %v4279
        %v4281 = vpop.f32.mrb[0].mxu0
        %4282 = vmatprep.mubr.bf16.mxu0 %v4198
        %4283 = vmatmul.mubr.bf16.gmra.mrb[0].mxu0 %v4103
        %v4284 = vpop.f32.mrb[0].mxu0
        %v4285 = vadd.f32 %v4137, %v4284
        %v4286 = vpop.f32.mrb[0].mxu0
        %v4287 = vpop.f32.mrb[0].mxu0
        %v4288 = vadd.f32 %v4137, %v4287
        %v4289 = vpop.f32.mrb[0].mxu0
        %4290 = vmatprep.mubr.bf16.mxu0 %v4201
        %4291 = vmatmul.mubr.bf16.gmra.mrb[0].mxu0 %v4105
        %v4292 = vpop.f32.mrb[0].mxu0
        %v4293 = vadd.f32 %v4137, %v4292
        %v4294 = vpop.f32.mrb[0].mxu0
        %v4295 = vpop.f32.mrb[0].mxu0
        %v4296 = vadd.f32 %v4137, %v4295
        %v4297 = vpop.f32.mrb[0].mxu0
        %4298 = vmatprep.mubr.bf16.mxu0 %v4204
        %4299 = vmatmul.mubr.bf16.gmra.mrb[0].mxu0 %v4107
        %v4300 = vpop.f32.mrb[0].mxu0
        %v4301 = vadd.f32 %v4137, %v4300
        %v4302 = vpop.f32.mrb[0].mxu0
        %v4303 = vpop.f32.mrb[0].mxu0
        %v4304 = vadd.f32 %v4137, %v4303
        %v4305 = vpop.f32.mrb[0].mxu0
        %4306 = vmatprep.mubr.bf16.mxu0 %v4207
        %4307 = vmatmul.mubr.bf16.gmra.mrb[0].mxu0 %v4109
        %v4308 = vpop.f32.mrb[0].mxu0
        %v4309 = vadd.f32 %v4137, %v4308
        %v4310 = vpop.f32.mrb[0].mxu0
        %v4311 = vpop.f32.mrb[0].mxu0
        %v4312 = vadd.f32 %v4137, %v4311
        %v4313 = vpop.f32.mrb[0].mxu0
        %4314 = vmatprep.mubr.bf16.mxu0 %v4210
        %4315 = vmatmul.mubr.bf16.gmra.mrb[0].mxu0 %v4111
        %v4316 = vpop.f32.mrb[0].mxu0
        %v4317 = vadd.f32 %v4137, %v4316
        %v4318 = vpop.f32.mrb[0].mxu0
        %v4319 = vpop.f32.mrb[0].mxu0
        %v4320 = vadd.f32 %v4137, %v4319
        %v4321 = vpop.f32.mrb[0].mxu0
        %4322 = vmatprep.mubr.bf16.mxu0 %v4213
        %4323 = vmatmul.mubr.bf16.gmra.mrb[0].mxu0 %v4113
        %v4324 = vpop.f32.mrb[0].mxu0
        %v4325 = vadd.f32 %v4137, %v4324
        %v4326 = vpop.f32.mrb[0].mxu0
        %v4327 = vpop.f32.mrb[0].mxu0
        %v4328 = vadd.f32 %v4137, %v4327
        %v4329 = vpop.f32.mrb[0].mxu0
        %4330 = vmatprep.mubr.bf16.mxu0 %v4216
        %4331 = vmatmul.mubr.bf16.gmra.mrb[0].mxu0 %v4115
        %v4332 = vpop.f32.mrb[0].mxu0
        %v4333 = vadd.f32 %v4137, %v4332
        %v4334 = vpop.f32.mrb[0].mxu0
        %v4335 = vpop.f32.mrb[0].mxu0
        %v4336 = vadd.f32 %v4137, %v4335
        %v4337 = vpop.f32.mrb[0].mxu0
        %4338 = vmatprep.mubr.bf16.mxu0 %v4219
        %4339 = vmatmul.mubr.bf16.gmra.mrb[0].mxu0 %v4117
        %v4340 = vpop.f32.mrb[0].mxu0
        %v4341 = vadd.f32 %v4137, %v4340
        %v4342 = vpop.f32.mrb[0].mxu0
        %v4343 = vpop.f32.mrb[0].mxu0
        %v4344 = vadd.f32 %v4137, %v4343
        %v4345 = vpop.f32.mrb[0].mxu0
        %4346 = vmatprep.mubr.bf16.mxu0 %v4222
        %4347 = vmatmul.mubr.bf16.gmra.mrb[0].mxu0 %v4119
        %v4348 = vpop.f32.mrb[0].mxu0
        %v4349 = vadd.f32 %v4137, %v4348
        %v4350 = vpop.f32.mrb[0].mxu0
        %v4351 = vpop.f32.mrb[0].mxu0
        %v4352 = vadd.f32 %v4137, %v4351
        %v4353 = vpop.f32.mrb[0].mxu0
        %4354 = vmatprep.mubr.bf16.mxu0 %v4225
        %4355 = vmatmul.mubr.bf16.gmra.mrb[0].mxu0 %v4121
        %v4356 = vpop.f32.mrb[0].mxu0
        %v4357 = vadd.f32 %v4137, %v4356
        %v4358 = vpop.f32.mrb[0].mxu0
        %v4359 = vpop.f32.mrb[0].mxu0
        %v4360 = vadd.f32 %v4137, %v4359
        %v4361 = vpop.f32.mrb[0].mxu0
        %4362 = vmatprep.mubr.bf16.mxu0 %v4228
        %4363 = vmatmul.mubr.bf16.gmra.mrb[0].mxu0 %v4123
        %v4364 = vpop.f32.mrb[0].mxu0
        %v4365 = vadd.f32 %v4137, %v4364
        %v4366 = vpop.f32.mrb[0].mxu0
        %v4367 = vpop.f32.mrb[0].mxu0
        %v4368 = vadd.f32 %v4137, %v4367
        %v4369 = vpop.f32.mrb[0].mxu0
        %4370 = vmatprep.mubr.bf16.mxu0 %v4231
        %4371 = vmatmul.mubr.bf16.gmra.mrb[0].mxu0 %v4125
        %v4372 = vpop.f32.mrb[0].mxu0
        %v4373 = vadd.f32 %v4137, %v4372
        %v4374 = vpop.f32.mrb[0].mxu0
        %v4375 = vpop.f32.mrb[0].mxu0
        %v4376 = vadd.f32 %v4137, %v4375
        %v4377 = vpop.f32.mrb[0].mxu0
        %4378 = vmatprep.mubr.bf16.mxu0 %v4234
        %4379 = vmatmul.mubr.bf16.gmra.mrb[0].mxu0 %v4127
        %v4380 = vpop.f32.mrb[0].mxu0
        %v4381 = vadd.f32 %v4137, %v4380
        %v4382 = vpop.f32.mrb[0].mxu0
        %v4383 = vpop.f32.mrb[0].mxu0
        %v4384 = vadd.f32 %v4137, %v4383
        %v4385 = vpop.f32.mrb[0].mxu0
        %4386 = vmatprep.mubr.bf16.mxu0 %v4237
        %4387 = vmatmul.mubr.bf16.gmra.mrb[0].mxu0 %v4129
        %v4388 = vpop.f32.mrb[0].mxu0
        %v4389 = vadd.f32 %v4137, %v4388
        %v4390 = vpop.f32.mrb[0].mxu0
        %v4391 = vpop.f32.mrb[0].mxu0
        %v4392 = vadd.f32 %v4137, %v4391
        %v4393 = vpop.f32.mrb[0].mxu0
        %4394 = vmatprep.mubr.bf16.mxu0 %v4240
        %4395 = vmatmul.mubr.bf16.gmra.mrb[0].mxu0 %v4131
        %v4396 = vpop.f32.mrb[0].mxu0
        %v4397 = vadd.f32 %v4137, %v4396
        %v4398 = vpop.f32.mrb[0].mxu0
        %v4399 = vpop.f32.mrb[0].mxu0
        %v4400 = vadd.f32 %v4137, %v4399
        %v4401 = vpop.f32.mrb[0].mxu0
        %4402 = vdwg.mxu0
        %v4403 = vmax.f32 %v4277, 0.0
        %v4404 = vmax.f32 %v4280, 0.0
        %v4405 = vmax.f32 %v4285, 0.0
        %v4406 = vmax.f32 %v4288, 0.0
        %v4407 = vmax.f32 %v4293, 0.0
        %v4408 = vmax.f32 %v4296, 0.0
        %v4409 = vmax.f32 %v4301, 0.0
        %v4410 = vmax.f32 %v4304, 0.0
        %v4411 = vmax.f32 %v4309, 0.0
        %v4412 = vmax.f32 %v4312, 0.0
        %v4413 = vmax.f32 %v4317, 0.0
        %v4414 = vmax.f32 %v4320, 0.0
        %v4415 = vmax.f32 %v4325, 0.0
        %v4416 = vmax.f32 %v4328, 0.0
        %v4417 = vmax.f32 %v4333, 0.0
        %v4418 = vmax.f32 %v4336, 0.0
        %v4419 = vmax.f32 %v4341, 0.0
        %v4420 = vmax.f32 %v4344, 0.0
        %v4421 = vmax.f32 %v4349, 0.0
        %v4422 = vmax.f32 %v4352, 0.0
        %v4423 = vmax.f32 %v4357, 0.0
        %v4424 = vmax.f32 %v4360, 0.0
        %v4425 = vmax.f32 %v4365, 0.0
        %v4426 = vmax.f32 %v4368, 0.0
        %v4427 = vmax.f32 %v4373, 0.0
        %v4428 = vmax.f32 %v4376, 0.0
        %v4429 = vmax.f32 %v4381, 0.0
        %v4430 = vmax.f32 %v4384, 0.0
        %v4431 = vmax.f32 %v4389, 0.0
        %v4432 = vmax.f32 %v4392, 0.0
        %v4433 = vmax.f32 %v4397, 0.0
        %v4434 = vmax.f32 %v4400, 0.0
        %v4435 = vld [vmem:[%s7] sm:$0xf]
        %v4436 = vld [vmem:[%s7 + $0x4] sm:$0xf]
        %v4437 = vld [vmem:[%s7 + $0x8] sm:$0xf]
        %v4438 = vld [vmem:[%s7 + $0xc] sm:$0xf]
        %v4439 = vld [vmem:[%s7 + $0x10] sm:$0xf]
        %v4440 = vld [vmem:[%s7 + $0x14] sm:$0xf]
        %v4441 = vld [vmem:[%s7 + $0x18] sm:$0xf]
        %v4442 = vld [vmem:[%s7 + $0x1c] sm:$0xf]
        %v4443 = vld [vmem:[%s7 + $0x20] sm:$0xf]
        %v4444 = vld [vmem:[%s7 + $0x24] sm:$0xf]
        %v4445 = vld [vmem:[%s7 + $0x28] sm:$0xf]
        %v4446 = vld [vmem:[%s7 + $0x2c] sm:$0xf]
        %v4447 = vld [vmem:[%s7 + $0x30] sm:$0xf]
        %v4448 = vld [vmem:[%s7 + $0x34] sm:$0xf]
        %v4449 = vld [vmem:[%s7 + $0x38] sm:$0xf]
        %v4450 = vld [vmem:[%s7 + $0x3c] sm:$0xf]
        %v4451 = vld [vmem:[%s7 + $0x40] sm:$0xf]
        %v4452 = vld [vmem:[%s7 + $0x44] sm:$0xf]
        %v4453 = vld [vmem:[%s7 + $0x48] sm:$0xf]
        %v4454 = vld [vmem:[%s7 + $0x4c] sm:$0xf]
        %v4455 = vld [vmem:[%s7 + $0x50] sm:$0xf]
        %v4456 = vld [vmem:[%s7 + $0x54] sm:$0xf]
        %v4457 = vld [vmem:[%s7 + $0x58] sm:$0xf]
        %v4458 = vld [vmem:[%s7 + $0x5c] sm:$0xf]
        %v4459 = vld [vmem:[%s7 + $0x60] sm:$0xf]
        %v4460 = vld [vmem:[%s7 + $0x64] sm:$0xf]
        %v4461 = vld [vmem:[%s7 + $0x68] sm:$0xf]
        %v4462 = vld [vmem:[%s7 + $0x6c] sm:$0xf]
        %v4463 = vld [vmem:[%s7 + $0x70] sm:$0xf]
        %v4464 = vld [vmem:[%s7 + $0x74] sm:$0xf]
        %v4465 = vld [vmem:[%s7 + $0x78] sm:$0xf]
        %v4466 = vld [vmem:[%s7 + $0x7c] sm:$0xf]
        %v4467 = vld [vmem:[%s7 + $0x80] sm:$0xf]
        %v4468 = vld [vmem:[%s7 + $0x84] sm:$0xf]
        %v4469 = vld [vmem:[%s7 + $0x88] sm:$0xf]
        %v4470 = vld [vmem:[%s7 + $0x8c] sm:$0xf]
        %v4471 = vld [vmem:[%s8] sm:$0x1]
        %4504 = vrot.lane.b32.xlu0 %v4403, 96
        %v4505 = vpop.permute.xlu0 %4504
        %4506 = vrot.lane.b32.xlu0 %v4404, 96
        %v4507 = vpop.permute.xlu0 %4506
        %4508 = vrot.lane.b32.xlu0 %v4405, 96
        %v4509 = vpop.permute.xlu0 %4508
        %4510 = vrot.lane.b32.xlu0 %v4406, 96
        %v4511 = vpop.permute.xlu0 %4510
        %4512 = vrot.lane.b32.xlu0 %v4407, 96
        %v4513 = vpop.permute.xlu0 %4512
        %4514 = vrot.lane.b32.xlu0 %v4408, 96
        %v4515 = vpop.permute.xlu0 %4514
        %4516 = vrot.lane.b32.xlu0 %v4409, 96
        %v4517 = vpop.permute.xlu0 %4516
        %4518 = vrot.lane.b32.xlu0 %v4410, 96
        %v4519 = vpop.permute.xlu0 %4518
        %4520 = vrot.lane.b32.xlu0 %v4411, 96
        %v4521 = vpop.permute.xlu0 %4520
        %4522 = vrot.lane.b32.xlu0 %v4412, 96
        %v4523 = vpop.permute.xlu0 %4522
        %4524 = vrot.lane.b32.xlu0 %v4413, 96
        %v4525 = vpop.permute.xlu0 %4524
        %4526 = vrot.lane.b32.xlu0 %v4414, 96
        %v4527 = vpop.permute.xlu0 %4526
        %4528 = vrot.lane.b32.xlu0 %v4415, 96
        %v4529 = vpop.permute.xlu0 %4528
        %4530 = vrot.lane.b32.xlu0 %v4416, 96
        %v4531 = vpop.permute.xlu0 %4530
        %4532 = vrot.lane.b32.xlu0 %v4417, 96
        %v4533 = vpop.permute.xlu0 %4532
        %4534 = vrot.lane.b32.xlu0 %v4418, 96
        %v4535 = vpop.permute.xlu0 %4534
        %4536 = vrot.lane.b32.xlu0 %v4419, 96
        %v4537 = vpop.permute.xlu0 %4536
        %4538 = vrot.lane.b32.xlu0 %v4420, 96
        %v4539 = vpop.permute.xlu0 %4538
        %4540 = vrot.lane.b32.xlu0 %v4421, 96
        %v4541 = vpop.permute.xlu0 %4540
        %4542 = vrot.lane.b32.xlu0 %v4422, 96
        %v4543 = vpop.permute.xlu0 %4542
        %4544 = vrot.lane.b32.xlu0 %v4423, 96
        %v4545 = vpop.permute.xlu0 %4544
        %4546 = vrot.lane.b32.xlu0 %v4424, 96
        %v4547 = vpop.permute.xlu0 %4546
        %4548 = vrot.lane.b32.xlu0 %v4425, 96
        %v4549 = vpop.permute.xlu0 %4548
        %4550 = vrot.lane.b32.xlu0 %v4426, 96
        %v4551 = vpop.permute.xlu0 %4550
        %4552 = vrot.lane.b32.xlu0 %v4427, 96
        %v4553 = vpop.permute.xlu0 %4552
        %4554 = vrot.lane.b32.xlu0 %v4428, 96
        %v4555 = vpop.permute.xlu0 %4554
        %4556 = vrot.lane.b32.xlu0 %v4429, 96
        %v4557 = vpop.permute.xlu0 %4556
        %4558 = vrot.lane.b32.xlu0 %v4430, 96
        %v4559 = vpop.permute.xlu0 %4558
        %4560 = vrot.lane.b32.xlu0 %v4431, 96
        %v4561 = vpop.permute.xlu0 %4560
        %4562 = vrot.lane.b32.xlu0 %v4432, 96
        %v4563 = vpop.permute.xlu0 %4562
        %4564 = vrot.lane.b32.xlu0 %v4433, 96
        %v4565 = vpop.permute.xlu0 %4564
        %4566 = vrot.lane.b32.xlu0 %v4434, 96
        %v4567 = vpop.permute.xlu0 %4566
        %4601 = vrot.lane.b32.xlu0 %v4405, 64
        %v4602 = vpop.permute.xlu0 %4601
        %4603 = vrot.lane.b32.xlu0 %v4406, 64
        %v4604 = vpop.permute.xlu0 %4603
        %4605 = vrot.lane.b32.xlu0 %v4407, 64
        %v4606 = vpop.permute.xlu0 %4605
        %4607 = vrot.lane.b32.xlu0 %v4408, 64
        %v4608 = vpop.permute.xlu0 %4607
        %4609 = vrot.lane.b32.xlu0 %v4409, 64
        %v4610 = vpop.permute.xlu0 %4609
        %4611 = vrot.lane.b32.xlu0 %v4410, 64
        %v4612 = vpop.permute.xlu0 %4611
        %4613 = vrot.lane.b32.xlu0 %v4411, 64
        %v4614 = vpop.permute.xlu0 %4613
        %4615 = vrot.lane.b32.xlu0 %v4412, 64
        %v4616 = vpop.permute.xlu0 %4615
        %4617 = vrot.lane.b32.xlu0 %v4413, 64
        %v4618 = vpop.permute.xlu0 %4617
        %4619 = vrot.lane.b32.xlu0 %v4414, 64
        %v4620 = vpop.permute.xlu0 %4619
        %4621 = vrot.lane.b32.xlu0 %v4415, 64
        %v4622 = vpop.permute.xlu0 %4621
        %4623 = vrot.lane.b32.xlu0 %v4416, 64
        %v4624 = vpop.permute.xlu0 %4623
        %4625 = vrot.lane.b32.xlu0 %v4417, 64
        %v4626 = vpop.permute.xlu0 %4625
        %4627 = vrot.lane.b32.xlu0 %v4418, 64
        %v4628 = vpop.permute.xlu0 %4627
        %4629 = vrot.lane.b32.xlu0 %v4419, 64
        %v4630 = vpop.permute.xlu0 %4629
        %4631 = vrot.lane.b32.xlu0 %v4420, 64
        %v4632 = vpop.permute.xlu0 %4631
        %4633 = vrot.lane.b32.xlu0 %v4421, 64
        %v4634 = vpop.permute.xlu0 %4633
        %4635 = vrot.lane.b32.xlu0 %v4422, 64
        %v4636 = vpop.permute.xlu0 %4635
        %4637 = vrot.lane.b32.xlu0 %v4423, 64
        %v4638 = vpop.permute.xlu0 %4637
        %4639 = vrot.lane.b32.xlu0 %v4424, 64
        %v4640 = vpop.permute.xlu0 %4639
        %4641 = vrot.lane.b32.xlu0 %v4425, 64
        %v4642 = vpop.permute.xlu0 %4641
        %4643 = vrot.lane.b32.xlu0 %v4426, 64
        %v4644 = vpop.permute.xlu0 %4643
        %4645 = vrot.lane.b32.xlu0 %v4427, 64
        %v4646 = vpop.permute.xlu0 %4645
        %4647 = vrot.lane.b32.xlu0 %v4428, 64
        %v4648 = vpop.permute.xlu0 %4647
        %4649 = vrot.lane.b32.xlu0 %v4429, 64
        %v4650 = vpop.permute.xlu0 %4649
        %4651 = vrot.lane.b32.xlu0 %v4430, 64
        %v4652 = vpop.permute.xlu0 %4651
        %4653 = vrot.lane.b32.xlu0 %v4431, 64
        %v4654 = vpop.permute.xlu0 %4653
        %4655 = vrot.lane.b32.xlu0 %v4432, 64
        %v4656 = vpop.permute.xlu0 %4655
        %4657 = vrot.lane.b32.xlu0 %v4433, 64
        %v4658 = vpop.permute.xlu0 %4657
        %4659 = vrot.lane.b32.xlu0 %v4434, 64
        %v4660 = vpop.permute.xlu0 %4659
        %4661 = vrot.lane.b32.xlu0 0.0, 64
        %v4662 = vpop.permute.xlu0 %4661
        %v4694 = vsel %vm4068, 0.0, %v4505
        %v4695 = vsel %vm4068, 0.0, %v4507
        %v4696 = vsel %vm4068, %v4403, %v4509
        %v4697 = vsel %vm4068, %v4404, %v4511
        %v4698 = vsel %vm4068, %v4405, %v4513
        %v4699 = vsel %vm4068, %v4406, %v4515
        %v4700 = vsel %vm4068, %v4407, %v4517
        %v4701 = vsel %vm4068, %v4408, %v4519
        %v4702 = vsel %vm4068, %v4409, %v4521
        %v4703 = vsel %vm4068, %v4410, %v4523
        %v4704 = vsel %vm4068, %v4411, %v4525
        %v4705 = vsel %vm4068, %v4412, %v4527
        %v4706 = vsel %vm4068, %v4413, %v4529
        %v4707 = vsel %vm4068, %v4414, %v4531
        %v4708 = vsel %vm4068, %v4415, %v4533
        %v4709 = vsel %vm4068, %v4416, %v4535
        %v4710 = vsel %vm4068, %v4417, %v4537
        %v4711 = vsel %vm4068, %v4418, %v4539
        %v4712 = vsel %vm4068, %v4419, %v4541
        %v4713 = vsel %vm4068, %v4420, %v4543
        %v4714 = vsel %vm4068, %v4421, %v4545
        %v4715 = vsel %vm4068, %v4422, %v4547
        %v4716 = vsel %vm4068, %v4423, %v4549
        %v4717 = vsel %vm4068, %v4424, %v4551
        %v4718 = vsel %vm4068, %v4425, %v4553
        %v4719 = vsel %vm4068, %v4426, %v4555
        %v4720 = vsel %vm4068, %v4427, %v4557
        %v4721 = vsel %vm4068, %v4428, %v4559
        %v4722 = vsel %vm4068, %v4429, %v4561
        %v4723 = vsel %vm4068, %v4430, %v4563
        %v4724 = vsel %vm4068, %v4431, %v4565
        %v4725 = vsel %vm4068, %v4432, %v4567
        %v4726 = vsel %vm1190, %v4505, %v4602
        %v4727 = vsel %vm1190, %v4507, %v4604
        %v4728 = vsel %vm1190, %v4509, %v4606
        %v4729 = vsel %vm1190, %v4511, %v4608
        %v4730 = vsel %vm1190, %v4513, %v4610
        %v4731 = vsel %vm1190, %v4515, %v4612
        %v4732 = vsel %vm1190, %v4517, %v4614
        %v4733 = vsel %vm1190, %v4519, %v4616
        %v4734 = vsel %vm1190, %v4521, %v4618
        %v4735 = vsel %vm1190, %v4523, %v4620
        %v4736 = vsel %vm1190, %v4525, %v4622
        %v4737 = vsel %vm1190, %v4527, %v4624
        %v4738 = vsel %vm1190, %v4529, %v4626
        %v4739 = vsel %vm1190, %v4531, %v4628
        %v4740 = vsel %vm1190, %v4533, %v4630
        %v4741 = vsel %vm1190, %v4535, %v4632
        %v4742 = vsel %vm1190, %v4537, %v4634
        %v4743 = vsel %vm1190, %v4539, %v4636
        %v4744 = vsel %vm1190, %v4541, %v4638
        %v4745 = vsel %vm1190, %v4543, %v4640
        %v4746 = vsel %vm1190, %v4545, %v4642
        %v4747 = vsel %vm1190, %v4547, %v4644
        %v4748 = vsel %vm1190, %v4549, %v4646
        %v4749 = vsel %vm1190, %v4551, %v4648
        %v4750 = vsel %vm1190, %v4553, %v4650
        %v4751 = vsel %vm1190, %v4555, %v4652
        %v4752 = vsel %vm1190, %v4557, %v4654
        %v4753 = vsel %vm1190, %v4559, %v4656
        %v4754 = vsel %vm1190, %v4561, %v4658
        %v4755 = vsel %vm1190, %v4563, %v4660
        %v4756 = vsel %vm1190, %v4565, %v4662
        %v4757 = vsel %vm1190, %v4567, %v4662
        %v4758 = vpack.c.bf16 %v4695, %v4694
        %v4759 = vpack.c.bf16 %v4727, %v4726
        %v4760 = vpack.c.bf16 %v4604, %v4602
        %v4761 = vpack.c.bf16 %v4697, %v4696
        %v4762 = vpack.c.bf16 %v4729, %v4728
        %v4763 = vpack.c.bf16 %v4608, %v4606
        %v4764 = vpack.c.bf16 %v4699, %v4698
        %v4765 = vpack.c.bf16 %v4731, %v4730
        %v4766 = vpack.c.bf16 %v4612, %v4610
        %v4767 = vpack.c.bf16 %v4701, %v4700
        %v4768 = vpack.c.bf16 %v4733, %v4732
        %v4769 = vpack.c.bf16 %v4616, %v4614
        %v4770 = vpack.c.bf16 %v4703, %v4702
        %v4771 = vpack.c.bf16 %v4735, %v4734
        %v4772 = vpack.c.bf16 %v4620, %v4618
        %v4773 = vpack.c.bf16 %v4705, %v4704
        %v4774 = vpack.c.bf16 %v4737, %v4736
        %v4775 = vpack.c.bf16 %v4624, %v4622
        %v4776 = vpack.c.bf16 %v4707, %v4706
        %v4777 = vpack.c.bf16 %v4739, %v4738
        %v4778 = vpack.c.bf16 %v4628, %v4626
        %v4779 = vpack.c.bf16 %v4709, %v4708
        %v4780 = vpack.c.bf16 %v4741, %v4740
        %v4781 = vpack.c.bf16 %v4632, %v4630
        %v4782 = vpack.c.bf16 %v4711, %v4710
        %v4783 = vpack.c.bf16 %v4743, %v4742
        %v4784 = vpack.c.bf16 %v4636, %v4634
        %v4785 = vpack.c.bf16 %v4713, %v4712
        %v4786 = vpack.c.bf16 %v4745, %v4744
        %v4787 = vpack.c.bf16 %v4640, %v4638
        %v4788 = vpack.c.bf16 %v4715, %v4714
        %v4789 = vpack.c.bf16 %v4747, %v4746
        %v4790 = vpack.c.bf16 %v4644, %v4642
        %v4791 = vpack.c.bf16 %v4717, %v4716
        %v4792 = vpack.c.bf16 %v4749, %v4748
        %v4793 = vpack.c.bf16 %v4648, %v4646
        %v4794 = vpack.c.bf16 %v4719, %v4718
        %v4795 = vpack.c.bf16 %v4751, %v4750
        %v4796 = vpack.c.bf16 %v4652, %v4650
        %v4797 = vpack.c.bf16 %v4721, %v4720
        %v4798 = vpack.c.bf16 %v4753, %v4752
        %v4799 = vpack.c.bf16 %v4656, %v4654
        %v4800 = vpack.c.bf16 %v4723, %v4722
        %v4801 = vpack.c.bf16 %v4755, %v4754
        %v4802 = vpack.c.bf16 %v4660, %v4658
        %v4803 = vpack.c.bf16 %v4725, %v4724
        %v4804 = vpack.c.bf16 %v4757, %v4756
        %v4805 = vpack.c.bf16 %v4662, %v4662
        %v4807 = vlaneseq
        %v4808 = vshrl.u32 %v4807, 7
        %v4809 = vsub.s32 0, %v4808
        %v4810 = vrot.slane %v4471, %v4809
        %v4848 = vunpack.c.l.b16 %v4435
        %v4849 = vunpack.c.l.b16 %v4436
        %v4850 = vunpack.c.l.b16 %v4437
        %v4851 = vunpack.c.l.b16 %v4438
        %v4852 = vunpack.c.l.b16 %v4439
        %v4853 = vunpack.c.l.b16 %v4440
        %v4854 = vunpack.c.l.b16 %v4441
        %v4855 = vunpack.c.l.b16 %v4442
        %v4856 = vunpack.c.l.b16 %v4443
        %v4857 = vunpack.c.l.b16 %v4444
        %v4858 = vunpack.c.l.b16 %v4445
        %v4859 = vunpack.c.l.b16 %v4446
        %v4860 = vunpack.c.l.b16 %v4447
        %v4861 = vunpack.c.l.b16 %v4448
        %v4862 = vunpack.c.l.b16 %v4449
        %v4863 = vunpack.c.l.b16 %v4450
        %v4864 = vunpack.c.l.b16 %v4451
        %v4865 = vunpack.c.l.b16 %v4452
        %v4866 = vunpack.c.l.b16 %v4453
        %v4867 = vunpack.c.l.b16 %v4454
        %v4868 = vunpack.c.l.b16 %v4455
        %v4869 = vunpack.c.l.b16 %v4456
        %v4870 = vunpack.c.l.b16 %v4457
        %v4871 = vunpack.c.l.b16 %v4458
        %v4872 = vunpack.c.l.b16 %v4459
        %v4873 = vunpack.c.l.b16 %v4460
        %v4874 = vunpack.c.l.b16 %v4461
        %v4875 = vunpack.c.l.b16 %v4462
        %v4876 = vunpack.c.l.b16 %v4463
        %v4877 = vunpack.c.l.b16 %v4464
        %v4878 = vunpack.c.l.b16 %v4465
        %v4879 = vunpack.c.l.b16 %v4466
        %v4880 = vunpack.c.l.b16 %v4467
        %v4881 = vunpack.c.l.b16 %v4468
        %v4882 = vunpack.c.l.b16 %v4469
        %v4883 = vunpack.c.l.b16 %v4470
        %v4884 = vpack.c.b16 %v4849, %v4848
        %v4885 = vpack.c.b16 %v4851, %v4850
        %v4886 = vpack.c.b16 %v4853, %v4852
        %v4887 = vpack.c.b16 %v4855, %v4854
        %v4888 = vpack.c.b16 %v4857, %v4856
        %v4889 = vpack.c.b16 %v4859, %v4858
        %v4890 = vpack.c.b16 %v4861, %v4860
        %v4891 = vpack.c.b16 %v4863, %v4862
        %v4892 = vpack.c.b16 %v4865, %v4864
        %v4893 = vpack.c.b16 %v4867, %v4866
        %v4894 = vpack.c.b16 %v4869, %v4868
        %v4895 = vpack.c.b16 %v4871, %v4870
        %v4896 = vpack.c.b16 %v4873, %v4872
        %v4897 = vpack.c.b16 %v4875, %v4874
        %v4898 = vpack.c.b16 %v4877, %v4876
        %v4899 = vpack.c.b16 %v4879, %v4878
        %v4900 = vpack.c.b16 %v4881, %v4880
        %v4901 = vpack.c.b16 %v4883, %v4882
        %vm4920 = vcmask 261120
        %v4922 = vsel %vm4920, %v4760, 0
        %v4925 = vsel %vm4920, %v4763, 0
        %v4928 = vsel %vm4920, %v4766, 0
        %v4931 = vsel %vm4920, %v4769, 0
        %v4934 = vsel %vm4920, %v4772, 0
        %v4937 = vsel %vm4920, %v4775, 0
        %v4940 = vsel %vm4920, %v4778, 0
        %v4943 = vsel %vm4920, %v4781, 0
        %v4946 = vsel %vm4920, %v4784, 0
        %v4949 = vsel %vm4920, %v4787, 0
        %v4952 = vsel %vm4920, %v4790, 0
        %v4955 = vsel %vm4920, %v4793, 0
        %v4958 = vsel %vm4920, %v4796, 0
        %v4961 = vsel %vm4920, %v4799, 0
        %v4964 = vsel %vm4920, %v4802, 0
        %v4967 = vsel %vm4920, %v4805, 0
        %4969 = vmatprep.subr.bf16.mxu0 0
        %4970 = vmatpush1.bf16.msra.mxu0 %v4884
        %4971 = vmatprep.subr.bf16.mxu0 0
        %4972 = vmatpush1.bf16.msra.mxu0 %v4885
        %4973 = vmatprep.subr.bf16.mxu0 0
        %4974 = vmatpush1.bf16.msra.mxu0 %v4886
        %4975 = vmatprep.subr.bf16.mxu0 0
        %4976 = vmatpush1.bf16.msra.mxu0 %v4887
        %4977 = vmatprep.subr.bf16.mxu0 0
        %4978 = vmatpush1.bf16.msra.mxu0 %v4888
        %4979 = vmatprep.subr.bf16.mxu0 0
        %4980 = vmatpush1.bf16.msra.mxu0 %v4889
        %4981 = vmatprep.subr.bf16.mxu0 0
        %4982 = vmatpush1.bf16.msra.mxu0 %v4890
        %4983 = vmatprep.subr.bf16.mxu0 0
        %4984 = vmatpush1.bf16.msra.mxu0 %v4891
        %4985 = vmatprep.subr.bf16.mxu0 0
        %4986 = vmatpush1.bf16.msra.mxu0 %v4892
        %4987 = vmatprep.subr.bf16.mxu0 0
        %4988 = vmatpush1.bf16.msra.mxu0 %v4893
        %4989 = vmatprep.subr.bf16.mxu0 0
        %4990 = vmatpush1.bf16.msra.mxu0 %v4894
        %4991 = vmatprep.subr.bf16.mxu0 0
        %4992 = vmatpush1.bf16.msra.mxu0 %v4895
        %4993 = vmatprep.subr.bf16.mxu0 0
        %4994 = vmatpush1.bf16.msra.mxu0 %v4896
        %4995 = vmatprep.subr.bf16.mxu0 0
        %4996 = vmatpush1.bf16.msra.mxu0 %v4897
        %4997 = vmatprep.subr.bf16.mxu0 0
        %4998 = vmatpush1.bf16.msra.mxu0 %v4898
        %4999 = vmatprep.subr.bf16.mxu0 0
        %5000 = vmatpush1.bf16.msra.mxu0 %v4899
        %5001 = vmatprep.mubr.bf16.mxu0 %v4759
        %5002 = vmatmul.mubr.bf16.gmra.mrb[0].mxu0 %v4758
        %v5003 = vpop.f32.mrb[0].mxu0
        %v5004 = vadd.f32 %v4810, %v5003
        %v5005 = vpop.f32.mrb[0].mxu0
        %v5006 = vpop.f32.mrb[0].mxu0
        %v5007 = vadd.f32 %v4810, %v5006
        %v5008 = vpop.f32.mrb[0].mxu0
        %5009 = vmatprep.mubr.bf16.mxu0 %v4762
        %5010 = vmatmul.mubr.bf16.gmra.mrb[0].mxu0 %v4761
        %v5011 = vpop.f32.mrb[0].mxu0
        %v5012 = vadd.f32 %v4810, %v5011
        %v5013 = vpop.f32.mrb[0].mxu0
        %v5014 = vpop.f32.mrb[0].mxu0
        %v5015 = vadd.f32 %v4810, %v5014
        %v5016 = vpop.f32.mrb[0].mxu0
        %5017 = vmatprep.mubr.bf16.mxu0 %v4765
        %5018 = vmatmul.mubr.bf16.gmra.mrb[0].mxu0 %v4764
        %v5019 = vpop.f32.mrb[0].mxu0
        %v5020 = vadd.f32 %v4810, %v5019
        %v5021 = vpop.f32.mrb[0].mxu0
        %v5022 = vpop.f32.mrb[0].mxu0
        %v5023 = vadd.f32 %v4810, %v5022
        %v5024 = vpop.f32.mrb[0].mxu0
        %5025 = vmatprep.mubr.bf16.mxu0 %v4768
        %5026 = vmatmul.mubr.bf16.gmra.mrb[0].mxu0 %v4767
        %v5027 = vpop.f32.mrb[0].mxu0
        %v5028 = vadd.f32 %v4810, %v5027
        %v5029 = vpop.f32.mrb[0].mxu0
        %v5030 = vpop.f32.mrb[0].mxu0
        %v5031 = vadd.f32 %v4810, %v5030
        %v5032 = vpop.f32.mrb[0].mxu0
        %5033 = vmatprep.mubr.bf16.mxu0 %v4771
        %5034 = vmatmul.mubr.bf16.gmra.mrb[0].mxu0 %v4770
        %v5035 = vpop.f32.mrb[0].mxu0
        %v5036 = vadd.f32 %v4810, %v5035
        %v5037 = vpop.f32.mrb[0].mxu0
        %v5038 = vpop.f32.mrb[0].mxu0
        %v5039 = vadd.f32 %v4810, %v5038
        %v5040 = vpop.f32.mrb[0].mxu0
        %5041 = vmatprep.mubr.bf16.mxu0 %v4774
        %5042 = vmatmul.mubr.bf16.gmra.mrb[0].mxu0 %v4773
        %v5043 = vpop.f32.mrb[0].mxu0
        %v5044 = vadd.f32 %v4810, %v5043
        %v5045 = vpop.f32.mrb[0].mxu0
        %v5046 = vpop.f32.mrb[0].mxu0
        %v5047 = vadd.f32 %v4810, %v5046
        %v5048 = vpop.f32.mrb[0].mxu0
        %5049 = vmatprep.mubr.bf16.mxu0 %v4777
        %5050 = vmatmul.mubr.bf16.gmra.mrb[0].mxu0 %v4776
        %v5051 = vpop.f32.mrb[0].mxu0
        %v5052 = vadd.f32 %v4810, %v5051
        %v5053 = vpop.f32.mrb[0].mxu0
        %v5054 = vpop.f32.mrb[0].mxu0
        %v5055 = vadd.f32 %v4810, %v5054
        %v5056 = vpop.f32.mrb[0].mxu0
        %5057 = vmatprep.mubr.bf16.mxu0 %v4780
        %5058 = vmatmul.mubr.bf16.gmra.mrb[0].mxu0 %v4779
        %v5059 = vpop.f32.mrb[0].mxu0
        %v5060 = vadd.f32 %v4810, %v5059
        %v5061 = vpop.f32.mrb[0].mxu0
        %v5062 = vpop.f32.mrb[0].mxu0
        %v5063 = vadd.f32 %v4810, %v5062
        %v5064 = vpop.f32.mrb[0].mxu0
        %5065 = vmatprep.mubr.bf16.mxu0 %v4783
        %5066 = vmatmul.mubr.bf16.gmra.mrb[0].mxu0 %v4782
        %v5067 = vpop.f32.mrb[0].mxu0
        %v5068 = vadd.f32 %v4810, %v5067
        %v5069 = vpop.f32.mrb[0].mxu0
        %v5070 = vpop.f32.mrb[0].mxu0
        %v5071 = vadd.f32 %v4810, %v5070
        %v5072 = vpop.f32.mrb[0].mxu0
        %5073 = vmatprep.mubr.bf16.mxu0 %v4786
        %5074 = vmatmul.mubr.bf16.gmra.mrb[0].mxu0 %v4785
        %v5075 = vpop.f32.mrb[0].mxu0
        %v5076 = vadd.f32 %v4810, %v5075
        %v5077 = vpop.f32.mrb[0].mxu0
        %v5078 = vpop.f32.mrb[0].mxu0
        %v5079 = vadd.f32 %v4810, %v5078
        %v5080 = vpop.f32.mrb[0].mxu0
        %5081 = vmatprep.mubr.bf16.mxu0 %v4789
        %5082 = vmatmul.mubr.bf16.gmra.mrb[0].mxu0 %v4788
        %v5083 = vpop.f32.mrb[0].mxu0
        %v5084 = vadd.f32 %v4810, %v5083
        %v5085 = vpop.f32.mrb[0].mxu0
        %v5086 = vpop.f32.mrb[0].mxu0
        %v5087 = vadd.f32 %v4810, %v5086
        %v5088 = vpop.f32.mrb[0].mxu0
        %5089 = vmatprep.mubr.bf16.mxu0 %v4792
        %5090 = vmatmul.mubr.bf16.gmra.mrb[0].mxu0 %v4791
        %v5091 = vpop.f32.mrb[0].mxu0
        %v5092 = vadd.f32 %v4810, %v5091
        %v5093 = vpop.f32.mrb[0].mxu0
        %v5094 = vpop.f32.mrb[0].mxu0
        %v5095 = vadd.f32 %v4810, %v5094
        %v5096 = vpop.f32.mrb[0].mxu0
        %5097 = vmatprep.mubr.bf16.mxu0 %v4795
        %5098 = vmatmul.mubr.bf16.gmra.mrb[0].mxu0 %v4794
        %v5099 = vpop.f32.mrb[0].mxu0
        %v5100 = vadd.f32 %v4810, %v5099
        %v5101 = vpop.f32.mrb[0].mxu0
        %v5102 = vpop.f32.mrb[0].mxu0
        %v5103 = vadd.f32 %v4810, %v5102
        %v5104 = vpop.f32.mrb[0].mxu0
        %5105 = vmatprep.mubr.bf16.mxu0 %v4798
        %5106 = vmatmul.mubr.bf16.gmra.mrb[0].mxu0 %v4797
        %v5107 = vpop.f32.mrb[0].mxu0
        %v5108 = vadd.f32 %v4810, %v5107
        %v5109 = vpop.f32.mrb[0].mxu0
        %v5110 = vpop.f32.mrb[0].mxu0
        %v5111 = vadd.f32 %v4810, %v5110
        %v5112 = vpop.f32.mrb[0].mxu0
        %5113 = vmatprep.mubr.bf16.mxu0 %v4801
        %5114 = vmatmul.mubr.bf16.gmra.mrb[0].mxu0 %v4800
        %v5115 = vpop.f32.mrb[0].mxu0
        %v5116 = vadd.f32 %v4810, %v5115
        %v5117 = vpop.f32.mrb[0].mxu0
        %v5118 = vpop.f32.mrb[0].mxu0
        %v5119 = vadd.f32 %v4810, %v5118
        %v5120 = vpop.f32.mrb[0].mxu0
        %5121 = vmatprep.mubr.bf16.mxu0 %v4804
        %5122 = vmatmul.mubr.bf16.gmra.mrb[0].mxu0 %v4803
        %v5123 = vpop.f32.mrb[0].mxu0
        %v5124 = vadd.f32 %v4810, %v5123
        %v5125 = vpop.f32.mrb[0].mxu0
        %v5126 = vpop.f32.mrb[0].mxu0
        %v5127 = vadd.f32 %v4810, %v5126
        %v5128 = vpop.f32.mrb[0].mxu0
        %5129 = vdwg.mxu0
        %5130 = vmatprep.subr.bf16.mxu0 0
        %5131 = vmatpush1.bf16.msra.mxu0 %v4900
        %5132 = vmatprep.subr.bf16.mxu0 0
        %5133 = vmatpush1.bf16.msra.mxu0 %v4901
        %5134 = vmatprep.subr.bf16.mxu0 0
        %5135 = vmatpush1.bf16.msra.mxu0 0
        %5136 = vmatprep.subr.bf16.mxu0 0
        %5137 = vmatpush1.bf16.msra.mxu0 0
        %5138 = vmatprep.subr.bf16.mxu0 0
        %5139 = vmatpush1.bf16.msra.mxu0 0
        %5140 = vmatprep.subr.bf16.mxu0 0
        %5141 = vmatpush1.bf16.msra.mxu0 0
        %5142 = vmatprep.subr.bf16.mxu0 0
        %5143 = vmatpush1.bf16.msra.mxu0 0
        %5144 = vmatprep.subr.bf16.mxu0 0
        %5145 = vmatpush1.bf16.msra.mxu0 0
        %5146 = vmatprep.subr.bf16.mxu0 0
        %5147 = vmatpush1.bf16.msra.mxu0 0
        %5148 = vmatprep.subr.bf16.mxu0 0
        %5149 = vmatpush1.bf16.msra.mxu0 0
        %5150 = vmatprep.subr.bf16.mxu0 0
        %5151 = vmatpush1.bf16.msra.mxu0 0
        %5152 = vmatprep.subr.bf16.mxu0 0
        %5153 = vmatpush1.bf16.msra.mxu0 0
        %5154 = vmatprep.subr.bf16.mxu0 0
        %5155 = vmatpush1.bf16.msra.mxu0 0
        %5156 = vmatprep.subr.bf16.mxu0 0
        %5157 = vmatpush1.bf16.msra.mxu0 0
        %5158 = vmatprep.subr.bf16.mxu0 0
        %5159 = vmatpush1.bf16.msra.mxu0 0
        %5160 = vmatprep.subr.bf16.mxu0 0
        %5161 = vmatpush1.bf16.msra.mxu0 0
        %5162 = vmatprep.mubr.bf16.mxu0 0
        %5163 = vmatmul.mubr.bf16.gmra.mrb[0].mxu0 %v4922
        %v5164 = vpop.f32.mrb[0].mxu0
        %v5165 = vadd.f32 %v5004, %v5164
        %v5166 = vpop.f32.mrb[0].mxu0
        %v5167 = vpop.f32.mrb[0].mxu0
        %v5168 = vadd.f32 %v5007, %v5167
        %v5169 = vpop.f32.mrb[0].mxu0
        %5170 = vmatprep.mubr.bf16.mxu0 0
        %5171 = vmatmul.mubr.bf16.gmra.mrb[0].mxu0 %v4925
        %v5172 = vpop.f32.mrb[0].mxu0
        %v5173 = vadd.f32 %v5012, %v5172
        %v5174 = vpop.f32.mrb[0].mxu0
        %v5175 = vpop.f32.mrb[0].mxu0
        %v5176 = vadd.f32 %v5015, %v5175
        %v5177 = vpop.f32.mrb[0].mxu0
        %5178 = vmatprep.mubr.bf16.mxu0 0
        %5179 = vmatmul.mubr.bf16.gmra.mrb[0].mxu0 %v4928
        %v5180 = vpop.f32.mrb[0].mxu0
        %v5181 = vadd.f32 %v5020, %v5180
        %v5182 = vpop.f32.mrb[0].mxu0
        %v5183 = vpop.f32.mrb[0].mxu0
        %v5184 = vadd.f32 %v5023, %v5183
        %v5185 = vpop.f32.mrb[0].mxu0
        %5186 = vmatprep.mubr.bf16.mxu0 0
        %5187 = vmatmul.mubr.bf16.gmra.mrb[0].mxu0 %v4931
        %v5188 = vpop.f32.mrb[0].mxu0
        %v5189 = vadd.f32 %v5028, %v5188
        %v5190 = vpop.f32.mrb[0].mxu0
        %v5191 = vpop.f32.mrb[0].mxu0
        %v5192 = vadd.f32 %v5031, %v5191
        %v5193 = vpop.f32.mrb[0].mxu0
        %5194 = vmatprep.mubr.bf16.mxu0 0
        %5195 = vmatmul.mubr.bf16.gmra.mrb[0].mxu0 %v4934
        %v5196 = vpop.f32.mrb[0].mxu0
        %v5197 = vadd.f32 %v5036, %v5196
        %v5198 = vpop.f32.mrb[0].mxu0
        %v5199 = vpop.f32.mrb[0].mxu0
        %v5200 = vadd.f32 %v5039, %v5199
        %v5201 = vpop.f32.mrb[0].mxu0
        %5202 = vmatprep.mubr.bf16.mxu0 0
        %5203 = vmatmul.mubr.bf16.gmra.mrb[0].mxu0 %v4937
        %v5204 = vpop.f32.mrb[0].mxu0
        %v5205 = vadd.f32 %v5044, %v5204
        %v5206 = vpop.f32.mrb[0].mxu0
        %v5207 = vpop.f32.mrb[0].mxu0
        %v5208 = vadd.f32 %v5047, %v5207
        %v5209 = vpop.f32.mrb[0].mxu0
        %5210 = vmatprep.mubr.bf16.mxu0 0
        %5211 = vmatmul.mubr.bf16.gmra.mrb[0].mxu0 %v4940
        %v5212 = vpop.f32.mrb[0].mxu0
        %v5213 = vadd.f32 %v5052, %v5212
        %v5214 = vpop.f32.mrb[0].mxu0
        %v5215 = vpop.f32.mrb[0].mxu0
        %v5216 = vadd.f32 %v5055, %v5215
        %v5217 = vpop.f32.mrb[0].mxu0
        %5218 = vmatprep.mubr.bf16.mxu0 0
        %5219 = vmatmul.mubr.bf16.gmra.mrb[0].mxu0 %v4943
        %v5220 = vpop.f32.mrb[0].mxu0
        %v5221 = vadd.f32 %v5060, %v5220
        %v5222 = vpop.f32.mrb[0].mxu0
        %v5223 = vpop.f32.mrb[0].mxu0
        %v5224 = vadd.f32 %v5063, %v5223
        %v5225 = vpop.f32.mrb[0].mxu0
        %5226 = vmatprep.mubr.bf16.mxu0 0
        %5227 = vmatmul.mubr.bf16.gmra.mrb[0].mxu0 %v4946
        %v5228 = vpop.f32.mrb[0].mxu0
        %v5229 = vadd.f32 %v5068, %v5228
        %v5230 = vpop.f32.mrb[0].mxu0
        %v5231 = vpop.f32.mrb[0].mxu0
        %v5232 = vadd.f32 %v5071, %v5231
        %v5233 = vpop.f32.mrb[0].mxu0
        %5234 = vmatprep.mubr.bf16.mxu0 0
        %5235 = vmatmul.mubr.bf16.gmra.mrb[0].mxu0 %v4949
        %v5236 = vpop.f32.mrb[0].mxu0
        %v5237 = vadd.f32 %v5076, %v5236
        %v5238 = vpop.f32.mrb[0].mxu0
        %v5239 = vpop.f32.mrb[0].mxu0
        %v5240 = vadd.f32 %v5079, %v5239
        %v5241 = vpop.f32.mrb[0].mxu0
        %5242 = vmatprep.mubr.bf16.mxu0 0
        %5243 = vmatmul.mubr.bf16.gmra.mrb[0].mxu0 %v4952
        %v5244 = vpop.f32.mrb[0].mxu0
        %v5245 = vadd.f32 %v5084, %v5244
        %v5246 = vpop.f32.mrb[0].mxu0
        %v5247 = vpop.f32.mrb[0].mxu0
        %v5248 = vadd.f32 %v5087, %v5247
        %v5249 = vpop.f32.mrb[0].mxu0
        %5250 = vmatprep.mubr.bf16.mxu0 0
        %5251 = vmatmul.mubr.bf16.gmra.mrb[0].mxu0 %v4955
        %v5252 = vpop.f32.mrb[0].mxu0
        %v5253 = vadd.f32 %v5092, %v5252
        %v5254 = vpop.f32.mrb[0].mxu0
        %v5255 = vpop.f32.mrb[0].mxu0
        %v5256 = vadd.f32 %v5095, %v5255
        %v5257 = vpop.f32.mrb[0].mxu0
        %5258 = vmatprep.mubr.bf16.mxu0 0
        %5259 = vmatmul.mubr.bf16.gmra.mrb[0].mxu0 %v4958
        %v5260 = vpop.f32.mrb[0].mxu0
        %v5261 = vadd.f32 %v5100, %v5260
        %v5262 = vpop.f32.mrb[0].mxu0
        %v5263 = vpop.f32.mrb[0].mxu0
        %v5264 = vadd.f32 %v5103, %v5263
        %v5265 = vpop.f32.mrb[0].mxu0
        %5266 = vmatprep.mubr.bf16.mxu0 0
        %5267 = vmatmul.mubr.bf16.gmra.mrb[0].mxu0 %v4961
        %v5268 = vpop.f32.mrb[0].mxu0
        %v5269 = vadd.f32 %v5108, %v5268
        %v5270 = vpop.f32.mrb[0].mxu0
        %v5271 = vpop.f32.mrb[0].mxu0
        %v5272 = vadd.f32 %v5111, %v5271
        %v5273 = vpop.f32.mrb[0].mxu0
        %5274 = vmatprep.mubr.bf16.mxu0 0
        %5275 = vmatmul.mubr.bf16.gmra.mrb[0].mxu0 %v4964
        %v5276 = vpop.f32.mrb[0].mxu0
        %v5277 = vadd.f32 %v5116, %v5276
        %v5278 = vpop.f32.mrb[0].mxu0
        %v5279 = vpop.f32.mrb[0].mxu0
        %v5280 = vadd.f32 %v5119, %v5279
        %v5281 = vpop.f32.mrb[0].mxu0
        %5282 = vmatprep.mubr.bf16.mxu0 0
        %5283 = vmatmul.mubr.bf16.gmra.mrb[0].mxu0 %v4967
        %v5284 = vpop.f32.mrb[0].mxu0
        %v5285 = vadd.f32 %v5124, %v5284
        %v5286 = vpop.f32.mrb[0].mxu0
        %v5287 = vpop.f32.mrb[0].mxu0
        %v5288 = vadd.f32 %v5127, %v5287
        %v5289 = vpop.f32.mrb[0].mxu0
        %5290 = vdwg.mxu0
        %v5291 = vmax.f32 %v5165, 0.0
        %v5292 = vmax.f32 %v5168, 0.0
        %v5293 = vmax.f32 %v5173, 0.0
        %v5294 = vmax.f32 %v5176, 0.0
        %v5295 = vmax.f32 %v5181, 0.0
        %v5296 = vmax.f32 %v5184, 0.0
        %v5297 = vmax.f32 %v5189, 0.0
        %v5298 = vmax.f32 %v5192, 0.0
        %v5299 = vmax.f32 %v5197, 0.0
        %v5300 = vmax.f32 %v5200, 0.0
        %v5301 = vmax.f32 %v5205, 0.0
        %v5302 = vmax.f32 %v5208, 0.0
        %v5303 = vmax.f32 %v5213, 0.0
        %v5304 = vmax.f32 %v5216, 0.0
        %v5305 = vmax.f32 %v5221, 0.0
        %v5306 = vmax.f32 %v5224, 0.0
        %v5307 = vmax.f32 %v5229, 0.0
        %v5308 = vmax.f32 %v5232, 0.0
        %v5309 = vmax.f32 %v5237, 0.0
        %v5310 = vmax.f32 %v5240, 0.0
        %v5311 = vmax.f32 %v5245, 0.0
        %v5312 = vmax.f32 %v5248, 0.0
        %v5313 = vmax.f32 %v5253, 0.0
        %v5314 = vmax.f32 %v5256, 0.0
        %v5315 = vmax.f32 %v5261, 0.0
        %v5316 = vmax.f32 %v5264, 0.0
        %v5317 = vmax.f32 %v5269, 0.0
        %v5318 = vmax.f32 %v5272, 0.0
        %v5319 = vmax.f32 %v5277, 0.0
        %v5320 = vmax.f32 %v5280, 0.0
        %v5321 = vmax.f32 %v5285, 0.0
        %v5322 = vmax.f32 %v5288, 0.0
        %v5355 = vrot.slane %v483, 7
        %v5356 = vrot.slane %v487, 7
        %v5357 = vsel %vm836, %v5355, %v5356
        %v5358 = vrot.slane %v493, 7
        %v5359 = vrot.slane %v497, 7
        %v5360 = vsel %vm836, %v5358, %v5359
        %v5361 = vrot.slane %v503, 7
        %v5362 = vrot.slane %v507, 7
        %v5363 = vsel %vm836, %v5361, %v5362
        %v5364 = vrot.slane %v513, 7
        %v5365 = vrot.slane %v517, 7
        %v5366 = vsel %vm836, %v5364, %v5365
        %v5367 = vrot.slane %v523, 7
        %v5368 = vrot.slane %v527, 7
        %v5369 = vsel %vm836, %v5367, %v5368
        %v5370 = vrot.slane %v533, 7
        %v5371 = vrot.slane %v537, 7
        %v5372 = vsel %vm836, %v5370, %v5371
        %v5373 = vrot.slane %v543, 7
        %v5374 = vrot.slane %v547, 7
        %v5375 = vsel %vm836, %v5373, %v5374
        %v5376 = vrot.slane %v553, 7
        %v5377 = vrot.slane %v557, 7
        %v5378 = vsel %vm836, %v5376, %v5377
        %v5379 = vrot.slane %v563, 7
        %v5380 = vrot.slane %v567, 7
        %v5381 = vsel %vm836, %v5379, %v5380
        %v5382 = vrot.slane %v573, 7
        %v5383 = vrot.slane %v577, 7
        %v5384 = vsel %vm836, %v5382, %v5383
        %v5385 = vrot.slane %v583, 7
        %v5386 = vrot.slane %v587, 7
        %v5387 = vsel %vm836, %v5385, %v5386
        %v5388 = vrot.slane %v593, 7
        %v5389 = vrot.slane %v597, 7
        %v5390 = vsel %vm836, %v5388, %v5389
        %v5391 = vrot.slane %v603, 7
        %v5392 = vrot.slane %v607, 7
        %v5393 = vsel %vm836, %v5391, %v5392
        %v5394 = vrot.slane %v613, 7
        %v5395 = vrot.slane %v617, 7
        %v5396 = vsel %vm836, %v5394, %v5395
        %v5397 = vrot.slane %v623, 7
        %v5398 = vrot.slane %v627, 7
        %v5399 = vsel %vm836, %v5397, %v5398
        %v5400 = vrot.slane %v633, 7
        %v5401 = vrot.slane %v637, 7
        %v5402 = vsel %vm836, %v5400, %v5401
        %5403 = vrot.lane.b32.xlu0 %v5355, 80
        %v5404 = vpop.permute.xlu0 %5403
        %5405 = vrot.lane.b32.xlu0 %v5357, 80
        %v5406 = vpop.permute.xlu0 %5405
        %5407 = vrot.lane.b32.xlu0 %v5358, 80
        %v5408 = vpop.permute.xlu0 %5407
        %5409 = vrot.lane.b32.xlu0 %v5360, 80
        %v5410 = vpop.permute.xlu0 %5409
        %5411 = vrot.lane.b32.xlu0 %v5361, 80
        %v5412 = vpop.permute.xlu0 %5411
        %5413 = vrot.lane.b32.xlu0 %v5363, 80
        %v5414 = vpop.permute.xlu0 %5413
        %5415 = vrot.lane.b32.xlu0 %v5364, 80
        %v5416 = vpop.permute.xlu0 %5415
        %5417 = vrot.lane.b32.xlu0 %v5366, 80
        %v5418 = vpop.permute.xlu0 %5417
        %5419 = vrot.lane.b32.xlu0 %v5367, 80
        %v5420 = vpop.permute.xlu0 %5419
        %5421 = vrot.lane.b32.xlu0 %v5369, 80
        %v5422 = vpop.permute.xlu0 %5421
        %5423 = vrot.lane.b32.xlu0 %v5370, 80
        %v5424 = vpop.permute.xlu0 %5423
        %5425 = vrot.lane.b32.xlu0 %v5372, 80
        %v5426 = vpop.permute.xlu0 %5425
        %5427 = vrot.lane.b32.xlu0 %v5373, 80
        %v5428 = vpop.permute.xlu0 %5427
        %5429 = vrot.lane.b32.xlu0 %v5375, 80
        %v5430 = vpop.permute.xlu0 %5429
        %5431 = vrot.lane.b32.xlu0 %v5376, 80
        %v5432 = vpop.permute.xlu0 %5431
        %5433 = vrot.lane.b32.xlu0 %v5378, 80
        %v5434 = vpop.permute.xlu0 %5433
        %5435 = vrot.lane.b32.xlu0 %v5379, 80
        %v5436 = vpop.permute.xlu0 %5435
        %5437 = vrot.lane.b32.xlu0 %v5381, 80
        %v5438 = vpop.permute.xlu0 %5437
        %5439 = vrot.lane.b32.xlu0 %v5382, 80
        %v5440 = vpop.permute.xlu0 %5439
        %5441 = vrot.lane.b32.xlu0 %v5384, 80
        %v5442 = vpop.permute.xlu0 %5441
        %5443 = vrot.lane.b32.xlu0 %v5385, 80
        %v5444 = vpop.permute.xlu0 %5443
        %5445 = vrot.lane.b32.xlu0 %v5387, 80
        %v5446 = vpop.permute.xlu0 %5445
        %5447 = vrot.lane.b32.xlu0 %v5388, 80
        %v5448 = vpop.permute.xlu0 %5447
        %5449 = vrot.lane.b32.xlu0 %v5390, 80
        %v5450 = vpop.permute.xlu0 %5449
        %5451 = vrot.lane.b32.xlu0 %v5391, 80
        %v5452 = vpop.permute.xlu0 %5451
        %5453 = vrot.lane.b32.xlu0 %v5393, 80
        %v5454 = vpop.permute.xlu0 %5453
        %5455 = vrot.lane.b32.xlu0 %v5394, 80
        %v5456 = vpop.permute.xlu0 %5455
        %5457 = vrot.lane.b32.xlu0 %v5396, 80
        %v5458 = vpop.permute.xlu0 %5457
        %5459 = vrot.lane.b32.xlu0 %v5397, 80
        %v5460 = vpop.permute.xlu0 %5459
        %5461 = vrot.lane.b32.xlu0 %v5399, 80
        %v5462 = vpop.permute.xlu0 %5461
        %5463 = vrot.lane.b32.xlu0 %v5400, 80
        %v5464 = vpop.permute.xlu0 %5463
        %5465 = vrot.lane.b32.xlu0 %v5402, 80
        %v5466 = vpop.permute.xlu0 %5465
        %v5499 = vsel %vm836, 0.0, %v5404
        %v5500 = vsel %vm836, 0.0, %v5408
        %v5501 = vsel %vm836, 0.0, %v5412
        %v5502 = vsel %vm836, 0.0, %v5416
        %v5503 = vsel %vm836, 0.0, %v5420
        %v5504 = vsel %vm836, 0.0, %v5424
        %v5505 = vsel %vm836, 0.0, %v5428
        %v5506 = vsel %vm836, 0.0, %v5432
        %v5507 = vsel %vm836, 0.0, %v5436
        %v5508 = vsel %vm836, 0.0, %v5440
        %v5509 = vsel %vm836, 0.0, %v5444
        %v5510 = vsel %vm836, 0.0, %v5448
        %v5511 = vsel %vm836, 0.0, %v5452
        %v5512 = vsel %vm836, 0.0, %v5456
        %v5513 = vsel %vm836, 0.0, %v5460
        %v5514 = vsel %vm836, 0.0, %v5464
        %5515 = vrot.lane.b32.xlu0 %v483, 80
        %v5516 = vpop.permute.xlu0 %5515
        %5517 = vrot.lane.b32.xlu0 %v487, 80
        %v5518 = vpop.permute.xlu0 %5517
        %5519 = vrot.lane.b32.xlu0 %v493, 80
        %v5520 = vpop.permute.xlu0 %5519
        %5521 = vrot.lane.b32.xlu0 %v497, 80
        %v5522 = vpop.permute.xlu0 %5521
        %5523 = vrot.lane.b32.xlu0 %v503, 80
        %v5524 = vpop.permute.xlu0 %5523
        %5525 = vrot.lane.b32.xlu0 %v507, 80
        %v5526 = vpop.permute.xlu0 %5525
        %5527 = vrot.lane.b32.xlu0 %v513, 80
        %v5528 = vpop.permute.xlu0 %5527
        %5529 = vrot.lane.b32.xlu0 %v517, 80
        %v5530 = vpop.permute.xlu0 %5529
        %5531 = vrot.lane.b32.xlu0 %v523, 80
        %v5532 = vpop.permute.xlu0 %5531
        %5533 = vrot.lane.b32.xlu0 %v527, 80
        %v5534 = vpop.permute.xlu0 %5533
        %5535 = vrot.lane.b32.xlu0 %v533, 80
        %v5536 = vpop.permute.xlu0 %5535
        %5537 = vrot.lane.b32.xlu0 %v537, 80
        %v5538 = vpop.permute.xlu0 %5537
        %5539 = vrot.lane.b32.xlu0 %v543, 80
        %v5540 = vpop.permute.xlu0 %5539
        %5541 = vrot.lane.b32.xlu0 %v547, 80
        %v5542 = vpop.permute.xlu0 %5541
        %5543 = vrot.lane.b32.xlu0 %v553, 80
        %v5544 = vpop.permute.xlu0 %5543
        %5545 = vrot.lane.b32.xlu0 %v557, 80
        %v5546 = vpop.permute.xlu0 %5545
        %5547 = vrot.lane.b32.xlu0 %v563, 80
        %v5548 = vpop.permute.xlu0 %5547
        %5549 = vrot.lane.b32.xlu0 %v567, 80
        %v5550 = vpop.permute.xlu0 %5549
        %5551 = vrot.lane.b32.xlu0 %v573, 80
        %v5552 = vpop.permute.xlu0 %5551
        %5553 = vrot.lane.b32.xlu0 %v577, 80
        %v5554 = vpop.permute.xlu0 %5553
        %5555 = vrot.lane.b32.xlu0 %v583, 80
        %v5556 = vpop.permute.xlu0 %5555
        %5557 = vrot.lane.b32.xlu0 %v587, 80
        %v5558 = vpop.permute.xlu0 %5557
        %5559 = vrot.lane.b32.xlu0 %v593, 80
        %v5560 = vpop.permute.xlu0 %5559
        %5561 = vrot.lane.b32.xlu0 %v597, 80
        %v5562 = vpop.permute.xlu0 %5561
        %5563 = vrot.lane.b32.xlu0 %v603, 80
        %v5564 = vpop.permute.xlu0 %5563
        %5565 = vrot.lane.b32.xlu0 %v607, 80
        %v5566 = vpop.permute.xlu0 %5565
        %5567 = vrot.lane.b32.xlu0 %v613, 80
        %v5568 = vpop.permute.xlu0 %5567
        %5569 = vrot.lane.b32.xlu0 %v617, 80
        %v5570 = vpop.permute.xlu0 %5569
        %5571 = vrot.lane.b32.xlu0 %v623, 80
        %v5572 = vpop.permute.xlu0 %5571
        %5573 = vrot.lane.b32.xlu0 %v627, 80
        %v5574 = vpop.permute.xlu0 %5573
        %5575 = vrot.lane.b32.xlu0 %v633, 80
        %v5576 = vpop.permute.xlu0 %5575
        %5577 = vrot.lane.b32.xlu0 %v637, 80
        %v5578 = vpop.permute.xlu0 %5577
        %v5611 = vadd.f32 %v5499, %v5516
        %v5612 = vadd.f32 %v5406, %v5518
        %v5613 = vadd.f32 %v5500, %v5520
        %v5614 = vadd.f32 %v5410, %v5522
        %v5615 = vadd.f32 %v5501, %v5524
        %v5616 = vadd.f32 %v5414, %v5526
        %v5617 = vadd.f32 %v5502, %v5528
        %v5618 = vadd.f32 %v5418, %v5530
        %v5619 = vadd.f32 %v5503, %v5532
        %v5620 = vadd.f32 %v5422, %v5534
        %v5621 = vadd.f32 %v5504, %v5536
        %v5622 = vadd.f32 %v5426, %v5538
        %v5623 = vadd.f32 %v5505, %v5540
        %v5624 = vadd.f32 %v5430, %v5542
        %v5625 = vadd.f32 %v5506, %v5544
        %v5626 = vadd.f32 %v5434, %v5546
        %v5627 = vadd.f32 %v5507, %v5548
        %v5628 = vadd.f32 %v5438, %v5550
        %v5629 = vadd.f32 %v5508, %v5552
        %v5630 = vadd.f32 %v5442, %v5554
        %v5631 = vadd.f32 %v5509, %v5556
        %v5632 = vadd.f32 %v5446, %v5558
        %v5633 = vadd.f32 %v5510, %v5560
        %v5634 = vadd.f32 %v5450, %v5562
        %v5635 = vadd.f32 %v5511, %v5564
        %v5636 = vadd.f32 %v5454, %v5566
        %v5637 = vadd.f32 %v5512, %v5568
        %v5638 = vadd.f32 %v5458, %v5570
        %v5639 = vadd.f32 %v5513, %v5572
        %v5640 = vadd.f32 %v5462, %v5574
        %v5641 = vadd.f32 %v5514, %v5576
        %v5642 = vadd.f32 %v5466, %v5578
        %v5643 = vrot.slane %v483, 1
        %v5644 = vrot.slane %v487, 1
        %v5645 = vsel %vm997, %v5643, %v5644
        %v5646 = vrot.slane %v493, 1
        %v5647 = vrot.slane %v497, 1
        %v5648 = vsel %vm997, %v5646, %v5647
        %v5649 = vrot.slane %v503, 1
        %v5650 = vrot.slane %v507, 1
        %v5651 = vsel %vm997, %v5649, %v5650
        %v5652 = vrot.slane %v513, 1
        %v5653 = vrot.slane %v517, 1
        %v5654 = vsel %vm997, %v5652, %v5653
        %v5655 = vrot.slane %v523, 1
        %v5656 = vrot.slane %v527, 1
        %v5657 = vsel %vm997, %v5655, %v5656
        %v5658 = vrot.slane %v533, 1
        %v5659 = vrot.slane %v537, 1
        %v5660 = vsel %vm997, %v5658, %v5659
        %v5661 = vrot.slane %v543, 1
        %v5662 = vrot.slane %v547, 1
        %v5663 = vsel %vm997, %v5661, %v5662
        %v5664 = vrot.slane %v553, 1
        %v5665 = vrot.slane %v557, 1
        %v5666 = vsel %vm997, %v5664, %v5665
        %v5667 = vrot.slane %v563, 1
        %v5668 = vrot.slane %v567, 1
        %v5669 = vsel %vm997, %v5667, %v5668
        %v5670 = vrot.slane %v573, 1
        %v5671 = vrot.slane %v577, 1
        %v5672 = vsel %vm997, %v5670, %v5671
        %v5673 = vrot.slane %v583, 1
        %v5674 = vrot.slane %v587, 1
        %v5675 = vsel %vm997, %v5673, %v5674
        %v5676 = vrot.slane %v593, 1
        %v5677 = vrot.slane %v597, 1
        %v5678 = vsel %vm997, %v5676, %v5677
        %v5679 = vrot.slane %v603, 1
        %v5680 = vrot.slane %v607, 1
        %v5681 = vsel %vm997, %v5679, %v5680
        %v5682 = vrot.slane %v613, 1
        %v5683 = vrot.slane %v617, 1
        %v5684 = vsel %vm997, %v5682, %v5683
        %v5685 = vrot.slane %v623, 1
        %v5686 = vrot.slane %v627, 1
        %v5687 = vsel %vm997, %v5685, %v5686
        %v5688 = vrot.slane %v633, 1
        %v5689 = vrot.slane %v637, 1
        %v5690 = vsel %vm997, %v5688, %v5689
        %v5707 = vsel %vm997, %v5644, 0.0
        %v5708 = vsel %vm997, %v5647, 0.0
        %v5709 = vsel %vm997, %v5650, 0.0
        %v5710 = vsel %vm997, %v5653, 0.0
        %v5711 = vsel %vm997, %v5656, 0.0
        %v5712 = vsel %vm997, %v5659, 0.0
        %v5713 = vsel %vm997, %v5662, 0.0
        %v5714 = vsel %vm997, %v5665, 0.0
        %v5715 = vsel %vm997, %v5668, 0.0
        %v5716 = vsel %vm997, %v5671, 0.0
        %v5717 = vsel %vm997, %v5674, 0.0
        %v5718 = vsel %vm997, %v5677, 0.0
        %v5719 = vsel %vm997, %v5680, 0.0
        %v5720 = vsel %vm997, %v5683, 0.0
        %v5721 = vsel %vm997, %v5686, 0.0
        %v5722 = vsel %vm997, %v5689, 0.0
        %5739 = vrot.lane.b32.xlu0 %v5645, 80
        %v5740 = vpop.permute.xlu0 %5739
        %5741 = vrot.lane.b32.xlu0 %v5707, 80
        %v5742 = vpop.permute.xlu0 %5741
        %5743 = vrot.lane.b32.xlu0 %v5648, 80
        %v5744 = vpop.permute.xlu0 %5743
        %5745 = vrot.lane.b32.xlu0 %v5708, 80
        %v5746 = vpop.permute.xlu0 %5745
        %5747 = vrot.lane.b32.xlu0 %v5651, 80
        %v5748 = vpop.permute.xlu0 %5747
        %5749 = vrot.lane.b32.xlu0 %v5709, 80
        %v5750 = vpop.permute.xlu0 %5749
        %5751 = vrot.lane.b32.xlu0 %v5654, 80
        %v5752 = vpop.permute.xlu0 %5751
        %5753 = vrot.lane.b32.xlu0 %v5710, 80
        %v5754 = vpop.permute.xlu0 %5753
        %5755 = vrot.lane.b32.xlu0 %v5657, 80
        %v5756 = vpop.permute.xlu0 %5755
        %5757 = vrot.lane.b32.xlu0 %v5711, 80
        %v5758 = vpop.permute.xlu0 %5757
        %5759 = vrot.lane.b32.xlu0 %v5660, 80
        %v5760 = vpop.permute.xlu0 %5759
        %5761 = vrot.lane.b32.xlu0 %v5712, 80
        %v5762 = vpop.permute.xlu0 %5761
        %5763 = vrot.lane.b32.xlu0 %v5663, 80
        %v5764 = vpop.permute.xlu0 %5763
        %5765 = vrot.lane.b32.xlu0 %v5713, 80
        %v5766 = vpop.permute.xlu0 %5765
        %5767 = vrot.lane.b32.xlu0 %v5666, 80
        %v5768 = vpop.permute.xlu0 %5767
        %5769 = vrot.lane.b32.xlu0 %v5714, 80
        %v5770 = vpop.permute.xlu0 %5769
        %5771 = vrot.lane.b32.xlu0 %v5669, 80
        %v5772 = vpop.permute.xlu0 %5771
        %5773 = vrot.lane.b32.xlu0 %v5715, 80
        %v5774 = vpop.permute.xlu0 %5773
        %5775 = vrot.lane.b32.xlu0 %v5672, 80
        %v5776 = vpop.permute.xlu0 %5775
        %5777 = vrot.lane.b32.xlu0 %v5716, 80
        %v5778 = vpop.permute.xlu0 %5777
        %5779 = vrot.lane.b32.xlu0 %v5675, 80
        %v5780 = vpop.permute.xlu0 %5779
        %5781 = vrot.lane.b32.xlu0 %v5717, 80
        %v5782 = vpop.permute.xlu0 %5781
        %5783 = vrot.lane.b32.xlu0 %v5678, 80
        %v5784 = vpop.permute.xlu0 %5783
        %5785 = vrot.lane.b32.xlu0 %v5718, 80
        %v5786 = vpop.permute.xlu0 %5785
        %5787 = vrot.lane.b32.xlu0 %v5681, 80
        %v5788 = vpop.permute.xlu0 %5787
        %5789 = vrot.lane.b32.xlu0 %v5719, 80
        %v5790 = vpop.permute.xlu0 %5789
        %5791 = vrot.lane.b32.xlu0 %v5684, 80
        %v5792 = vpop.permute.xlu0 %5791
        %5793 = vrot.lane.b32.xlu0 %v5720, 80
        %v5794 = vpop.permute.xlu0 %5793
        %5795 = vrot.lane.b32.xlu0 %v5687, 80
        %v5796 = vpop.permute.xlu0 %5795
        %5797 = vrot.lane.b32.xlu0 %v5721, 80
        %v5798 = vpop.permute.xlu0 %5797
        %5799 = vrot.lane.b32.xlu0 %v5690, 80
        %v5800 = vpop.permute.xlu0 %5799
        %5801 = vrot.lane.b32.xlu0 %v5722, 80
        %v5802 = vpop.permute.xlu0 %5801
        %v5835 = vadd.f32 %v5611, %v5740
        %v5836 = vadd.f32 %v5612, %v5742
        %v5837 = vadd.f32 %v5613, %v5744
        %v5838 = vadd.f32 %v5614, %v5746
        %v5839 = vadd.f32 %v5615, %v5748
        %v5840 = vadd.f32 %v5616, %v5750
        %v5841 = vadd.f32 %v5617, %v5752
        %v5842 = vadd.f32 %v5618, %v5754
        %v5843 = vadd.f32 %v5619, %v5756
        %v5844 = vadd.f32 %v5620, %v5758
        %v5845 = vadd.f32 %v5621, %v5760
        %v5846 = vadd.f32 %v5622, %v5762
        %v5847 = vadd.f32 %v5623, %v5764
        %v5848 = vadd.f32 %v5624, %v5766
        %v5849 = vadd.f32 %v5625, %v5768
        %v5850 = vadd.f32 %v5626, %v5770
        %v5851 = vadd.f32 %v5627, %v5772
        %v5852 = vadd.f32 %v5628, %v5774
        %v5853 = vadd.f32 %v5629, %v5776
        %v5854 = vadd.f32 %v5630, %v5778
        %v5855 = vadd.f32 %v5631, %v5780
        %v5856 = vadd.f32 %v5632, %v5782
        %v5857 = vadd.f32 %v5633, %v5784
        %v5858 = vadd.f32 %v5634, %v5786
        %v5859 = vadd.f32 %v5635, %v5788
        %v5860 = vadd.f32 %v5636, %v5790
        %v5861 = vadd.f32 %v5637, %v5792
        %v5862 = vadd.f32 %v5638, %v5794
        %v5863 = vadd.f32 %v5639, %v5796
        %v5864 = vadd.f32 %v5640, %v5798
        %v5865 = vadd.f32 %v5641, %v5800
        %v5866 = vadd.f32 %v5642, %v5802
        %v5867 = vadd.f32 %v5835, 0.0
        %v5868 = vadd.f32 %v5836, 0.0
        %v5869 = vadd.f32 %v5835, %v5837
        %v5870 = vadd.f32 %v5836, %v5838
        %v5871 = vadd.f32 %v5837, %v5839
        %v5872 = vadd.f32 %v5838, %v5840
        %v5873 = vadd.f32 %v5839, %v5841
        %v5874 = vadd.f32 %v5840, %v5842
        %v5875 = vadd.f32 %v5841, %v5843
        %v5876 = vadd.f32 %v5842, %v5844
        %v5877 = vadd.f32 %v5843, %v5845
        %v5878 = vadd.f32 %v5844, %v5846
        %v5879 = vadd.f32 %v5845, %v5847
        %v5880 = vadd.f32 %v5846, %v5848
        %v5881 = vadd.f32 %v5847, %v5849
        %v5882 = vadd.f32 %v5848, %v5850
        %v5883 = vadd.f32 %v5849, %v5851
        %v5884 = vadd.f32 %v5850, %v5852
        %v5885 = vadd.f32 %v5851, %v5853
        %v5886 = vadd.f32 %v5852, %v5854
        %v5887 = vadd.f32 %v5853, %v5855
        %v5888 = vadd.f32 %v5854, %v5856
        %v5889 = vadd.f32 %v5855, %v5857
        %v5890 = vadd.f32 %v5856, %v5858
        %v5891 = vadd.f32 %v5857, %v5859
        %v5892 = vadd.f32 %v5858, %v5860
        %v5893 = vadd.f32 %v5859, %v5861
        %v5894 = vadd.f32 %v5860, %v5862
        %v5895 = vadd.f32 %v5861, %v5863
        %v5896 = vadd.f32 %v5862, %v5864
        %v5897 = vadd.f32 %v5863, %v5865
        %v5898 = vadd.f32 %v5864, %v5866
        %v5899 = vadd.f32 %v5867, %v5837
        %v5900 = vadd.f32 %v5868, %v5838
        %v5901 = vadd.f32 %v5869, %v5839
        %v5902 = vadd.f32 %v5870, %v5840
        %v5903 = vadd.f32 %v5871, %v5841
        %v5904 = vadd.f32 %v5872, %v5842
        %v5905 = vadd.f32 %v5873, %v5843
        %v5906 = vadd.f32 %v5874, %v5844
        %v5907 = vadd.f32 %v5875, %v5845
        %v5908 = vadd.f32 %v5876, %v5846
        %v5909 = vadd.f32 %v5877, %v5847
        %v5910 = vadd.f32 %v5878, %v5848
        %v5911 = vadd.f32 %v5879, %v5849
        %v5912 = vadd.f32 %v5880, %v5850
        %v5913 = vadd.f32 %v5881, %v5851
        %v5914 = vadd.f32 %v5882, %v5852
        %v5915 = vadd.f32 %v5883, %v5853
        %v5916 = vadd.f32 %v5884, %v5854
        %v5917 = vadd.f32 %v5885, %v5855
        %v5918 = vadd.f32 %v5886, %v5856
        %v5919 = vadd.f32 %v5887, %v5857
        %v5920 = vadd.f32 %v5888, %v5858
        %v5921 = vadd.f32 %v5889, %v5859
        %v5922 = vadd.f32 %v5890, %v5860
        %v5923 = vadd.f32 %v5891, %v5861
        %v5924 = vadd.f32 %v5892, %v5862
        %v5925 = vadd.f32 %v5893, %v5863
        %v5926 = vadd.f32 %v5894, %v5864
        %v5927 = vadd.f32 %v5895, %v5865
        %v5928 = vadd.f32 %v5896, %v5866
        %v5929 = vadd.f32 %v5897, 0.0
        %v5930 = vadd.f32 %v5898, 0.0
        %5931 = vrot.lane.b32.xlu0 %v639, 80
        %v5932 = vpop.permute.xlu0 %5931
        %v5933 = vrot.slane %v5932, 1
        %v5934 = vlaneseq
        %v5935 = vshrl.u32 %v5934, 7
        %v5936 = vsub.s32 0, %v5935
        %v5937 = vrot.slane %v5933, %v5936
        %v5939 = vadd.f32 %v5899, %v5937
        %v5940 = vadd.f32 %v5900, %v5937
        %v5941 = vadd.f32 %v5901, %v5937
        %v5942 = vadd.f32 %v5902, %v5937
        %v5943 = vadd.f32 %v5903, %v5937
        %v5944 = vadd.f32 %v5904, %v5937
        %v5945 = vadd.f32 %v5905, %v5937
        %v5946 = vadd.f32 %v5906, %v5937
        %v5947 = vadd.f32 %v5907, %v5937
        %v5948 = vadd.f32 %v5908, %v5937
        %v5949 = vadd.f32 %v5909, %v5937
        %v5950 = vadd.f32 %v5910, %v5937
        %v5951 = vadd.f32 %v5911, %v5937
        %v5952 = vadd.f32 %v5912, %v5937
        %v5953 = vadd.f32 %v5913, %v5937
        %v5954 = vadd.f32 %v5914, %v5937
        %v5955 = vadd.f32 %v5915, %v5937
        %v5956 = vadd.f32 %v5916, %v5937
        %v5957 = vadd.f32 %v5917, %v5937
        %v5958 = vadd.f32 %v5918, %v5937
        %v5959 = vadd.f32 %v5919, %v5937
        %v5960 = vadd.f32 %v5920, %v5937
        %v5961 = vadd.f32 %v5921, %v5937
        %v5962 = vadd.f32 %v5922, %v5937
        %v5963 = vadd.f32 %v5923, %v5937
        %v5964 = vadd.f32 %v5924, %v5937
        %v5965 = vadd.f32 %v5925, %v5937
        %v5966 = vadd.f32 %v5926, %v5937
        %v5967 = vadd.f32 %v5927, %v5937
        %v5968 = vadd.f32 %v5928, %v5937
        %v5969 = vadd.f32 %v5929, %v5937
        %v5970 = vadd.f32 %v5930, %v5937
        %v5971 = vmax.f32 %v5939, 0.0
        %v5972 = vmax.f32 %v5940, 0.0
        %v5973 = vmax.f32 %v5941, 0.0
        %v5974 = vmax.f32 %v5942, 0.0
        %v5975 = vmax.f32 %v5943, 0.0
        %v5976 = vmax.f32 %v5944, 0.0
        %v5977 = vmax.f32 %v5945, 0.0
        %v5978 = vmax.f32 %v5946, 0.0
        %v5979 = vmax.f32 %v5947, 0.0
        %v5980 = vmax.f32 %v5948, 0.0
        %v5981 = vmax.f32 %v5949, 0.0
        %v5982 = vmax.f32 %v5950, 0.0
        %v5983 = vmax.f32 %v5951, 0.0
        %v5984 = vmax.f32 %v5952, 0.0
        %v5985 = vmax.f32 %v5953, 0.0
        %v5986 = vmax.f32 %v5954, 0.0
        %v5987 = vmax.f32 %v5955, 0.0
        %v5988 = vmax.f32 %v5956, 0.0
        %v5989 = vmax.f32 %v5957, 0.0
        %v5990 = vmax.f32 %v5958, 0.0
        %v5991 = vmax.f32 %v5959, 0.0
        %v5992 = vmax.f32 %v5960, 0.0
        %v5993 = vmax.f32 %v5961, 0.0
        %v5994 = vmax.f32 %v5962, 0.0
        %v5995 = vmax.f32 %v5963, 0.0
        %v5996 = vmax.f32 %v5964, 0.0
        %v5997 = vmax.f32 %v5965, 0.0
        %v5998 = vmax.f32 %v5966, 0.0
        %v5999 = vmax.f32 %v5967, 0.0
        %v6000 = vmax.f32 %v5968, 0.0
        %v6001 = vmax.f32 %v5969, 0.0
        %v6002 = vmax.f32 %v5970, 0.0
        %6035 = vrot.lane.b32.xlu0 %v3568, 64
        %v6036 = vpop.permute.xlu0 %6035
        %6037 = vrot.lane.b32.xlu0 %v3569, 64
        %v6038 = vpop.permute.xlu0 %6037
        %6039 = vrot.lane.b32.xlu0 %v3570, 64
        %v6040 = vpop.permute.xlu0 %6039
        %6041 = vrot.lane.b32.xlu0 %v3571, 64
        %v6042 = vpop.permute.xlu0 %6041
        %6043 = vrot.lane.b32.xlu0 %v3572, 64
        %v6044 = vpop.permute.xlu0 %6043
        %6045 = vrot.lane.b32.xlu0 %v3573, 64
        %v6046 = vpop.permute.xlu0 %6045
        %6047 = vrot.lane.b32.xlu0 %v3574, 64
        %v6048 = vpop.permute.xlu0 %6047
        %6049 = vrot.lane.b32.xlu0 %v3575, 64
        %v6050 = vpop.permute.xlu0 %6049
        %6051 = vrot.lane.b32.xlu0 %v3576, 64
        %v6052 = vpop.permute.xlu0 %6051
        %6053 = vrot.lane.b32.xlu0 %v3577, 64
        %v6054 = vpop.permute.xlu0 %6053
        %6055 = vrot.lane.b32.xlu0 %v3578, 64
        %v6056 = vpop.permute.xlu0 %6055
        %6057 = vrot.lane.b32.xlu0 %v3579, 64
        %v6058 = vpop.permute.xlu0 %6057
        %6059 = vrot.lane.b32.xlu0 %v3580, 64
        %v6060 = vpop.permute.xlu0 %6059
        %6061 = vrot.lane.b32.xlu0 %v3581, 64
        %v6062 = vpop.permute.xlu0 %6061
        %6063 = vrot.lane.b32.xlu0 %v3582, 64
        %v6064 = vpop.permute.xlu0 %6063
        %6065 = vrot.lane.b32.xlu0 %v3583, 64
        %v6066 = vpop.permute.xlu0 %6065
        %6067 = vrot.lane.b32.xlu0 %v3584, 64
        %v6068 = vpop.permute.xlu0 %6067
        %6069 = vrot.lane.b32.xlu0 %v3585, 64
        %v6070 = vpop.permute.xlu0 %6069
        %6071 = vrot.lane.b32.xlu0 %v3586, 64
        %v6072 = vpop.permute.xlu0 %6071
        %6073 = vrot.lane.b32.xlu0 %v3587, 64
        %v6074 = vpop.permute.xlu0 %6073
        %6075 = vrot.lane.b32.xlu0 %v3588, 64
        %v6076 = vpop.permute.xlu0 %6075
        %6077 = vrot.lane.b32.xlu0 %v3589, 64
        %v6078 = vpop.permute.xlu0 %6077
        %6079 = vrot.lane.b32.xlu0 %v3590, 64
        %v6080 = vpop.permute.xlu0 %6079
        %6081 = vrot.lane.b32.xlu0 %v3591, 64
        %v6082 = vpop.permute.xlu0 %6081
        %6083 = vrot.lane.b32.xlu0 %v3592, 64
        %v6084 = vpop.permute.xlu0 %6083
        %6085 = vrot.lane.b32.xlu0 %v3593, 64
        %v6086 = vpop.permute.xlu0 %6085
        %6087 = vrot.lane.b32.xlu0 %v3594, 64
        %v6088 = vpop.permute.xlu0 %6087
        %6089 = vrot.lane.b32.xlu0 %v3595, 64
        %v6090 = vpop.permute.xlu0 %6089
        %6091 = vrot.lane.b32.xlu0 %v3596, 64
        %v6092 = vpop.permute.xlu0 %6091
        %6093 = vrot.lane.b32.xlu0 %v3597, 64
        %v6094 = vpop.permute.xlu0 %6093
        %6095 = vrot.lane.b32.xlu0 %v3598, 64
        %v6096 = vpop.permute.xlu0 %6095
        %6097 = vrot.lane.b32.xlu0 %v3599, 64
        %v6098 = vpop.permute.xlu0 %6097
        %6163 = vrot.lane.b32.xlu0 %v5971, 96
        %v6164 = vpop.permute.xlu0 %6163
        %6165 = vrot.lane.b32.xlu0 %v5972, 96
        %v6166 = vpop.permute.xlu0 %6165
        %6167 = vrot.lane.b32.xlu0 %v5973, 96
        %v6168 = vpop.permute.xlu0 %6167
        %6169 = vrot.lane.b32.xlu0 %v5974, 96
        %v6170 = vpop.permute.xlu0 %6169
        %6171 = vrot.lane.b32.xlu0 %v5975, 96
        %v6172 = vpop.permute.xlu0 %6171
        %6173 = vrot.lane.b32.xlu0 %v5976, 96
        %v6174 = vpop.permute.xlu0 %6173
        %6175 = vrot.lane.b32.xlu0 %v5977, 96
        %v6176 = vpop.permute.xlu0 %6175
        %6177 = vrot.lane.b32.xlu0 %v5978, 96
        %v6178 = vpop.permute.xlu0 %6177
        %6179 = vrot.lane.b32.xlu0 %v5979, 96
        %v6180 = vpop.permute.xlu0 %6179
        %6181 = vrot.lane.b32.xlu0 %v5980, 96
        %v6182 = vpop.permute.xlu0 %6181
        %6183 = vrot.lane.b32.xlu0 %v5981, 96
        %v6184 = vpop.permute.xlu0 %6183
        %6185 = vrot.lane.b32.xlu0 %v5982, 96
        %v6186 = vpop.permute.xlu0 %6185
        %6187 = vrot.lane.b32.xlu0 %v5983, 96
        %v6188 = vpop.permute.xlu0 %6187
        %6189 = vrot.lane.b32.xlu0 %v5984, 96
        %v6190 = vpop.permute.xlu0 %6189
        %6191 = vrot.lane.b32.xlu0 %v5985, 96
        %v6192 = vpop.permute.xlu0 %6191
        %6193 = vrot.lane.b32.xlu0 %v5986, 96
        %v6194 = vpop.permute.xlu0 %6193
        %6195 = vrot.lane.b32.xlu0 %v5987, 96
        %v6196 = vpop.permute.xlu0 %6195
        %6197 = vrot.lane.b32.xlu0 %v5988, 96
        %v6198 = vpop.permute.xlu0 %6197
        %6199 = vrot.lane.b32.xlu0 %v5989, 96
        %v6200 = vpop.permute.xlu0 %6199
        %6201 = vrot.lane.b32.xlu0 %v5990, 96
        %v6202 = vpop.permute.xlu0 %6201
        %6203 = vrot.lane.b32.xlu0 %v5991, 96
        %v6204 = vpop.permute.xlu0 %6203
        %6205 = vrot.lane.b32.xlu0 %v5992, 96
        %v6206 = vpop.permute.xlu0 %6205
        %6207 = vrot.lane.b32.xlu0 %v5993, 96
        %v6208 = vpop.permute.xlu0 %6207
        %6209 = vrot.lane.b32.xlu0 %v5994, 96
        %v6210 = vpop.permute.xlu0 %6209
        %6211 = vrot.lane.b32.xlu0 %v5995, 96
        %v6212 = vpop.permute.xlu0 %6211
        %6213 = vrot.lane.b32.xlu0 %v5996, 96
        %v6214 = vpop.permute.xlu0 %6213
        %6215 = vrot.lane.b32.xlu0 %v5997, 96
        %v6216 = vpop.permute.xlu0 %6215
        %6217 = vrot.lane.b32.xlu0 %v5998, 96
        %v6218 = vpop.permute.xlu0 %6217
        %6219 = vrot.lane.b32.xlu0 %v5999, 96
        %v6220 = vpop.permute.xlu0 %6219
        %6221 = vrot.lane.b32.xlu0 %v6000, 96
        %v6222 = vpop.permute.xlu0 %6221
        %6223 = vrot.lane.b32.xlu0 %v6001, 96
        %v6224 = vpop.permute.xlu0 %6223
        %6225 = vrot.lane.b32.xlu0 %v6002, 96
        %v6226 = vpop.permute.xlu0 %6225
        %v6259 = vsel %vm1190, %v715, %v6036
        %v6260 = vsel %vm1190, %v717, %v6038
        %v6261 = vsel %vm1190, %v719, %v6040
        %v6262 = vsel %vm1190, %v721, %v6042
        %v6263 = vsel %vm1190, %v723, %v6044
        %v6264 = vsel %vm1190, %v725, %v6046
        %v6265 = vsel %vm1190, %v727, %v6048
        %v6266 = vsel %vm1190, %v729, %v6050
        %v6267 = vsel %vm1190, %v731, %v6052
        %v6268 = vsel %vm1190, %v733, %v6054
        %v6269 = vsel %vm1190, %v735, %v6056
        %v6270 = vsel %vm1190, %v737, %v6058
        %v6271 = vsel %vm1190, %v739, %v6060
        %v6272 = vsel %vm1190, %v741, %v6062
        %v6273 = vsel %vm1190, %v743, %v6064
        %v6274 = vsel %vm1190, %v745, %v6066
        %v6275 = vsel %vm1190, %v747, %v6068
        %v6276 = vsel %vm1190, %v749, %v6070
        %v6277 = vsel %vm1190, %v751, %v6072
        %v6278 = vsel %vm1190, %v753, %v6074
        %v6279 = vsel %vm1190, %v755, %v6076
        %v6280 = vsel %vm1190, %v757, %v6078
        %v6281 = vsel %vm1190, %v759, %v6080
        %v6282 = vsel %vm1190, %v761, %v6082
        %v6283 = vsel %vm1190, %v763, %v6084
        %v6284 = vsel %vm1190, %v765, %v6086
        %v6285 = vsel %vm1190, %v767, %v6088
        %v6286 = vsel %vm1190, %v769, %v6090
        %v6287 = vsel %vm1190, %v771, %v6092
        %v6288 = vsel %vm1190, %v773, %v6094
        %v6289 = vsel %vm1190, %v775, %v6096
        %v6290 = vsel %vm1190, %v777, %v6098
        %v6291 = vsel %vm4068, %v5291, %v6164
        %v6292 = vsel %vm4068, %v5292, %v6166
        %v6293 = vsel %vm4068, %v5293, %v6168
        %v6294 = vsel %vm4068, %v5294, %v6170
        %v6295 = vsel %vm4068, %v5295, %v6172
        %v6296 = vsel %vm4068, %v5296, %v6174
        %v6297 = vsel %vm4068, %v5297, %v6176
        %v6298 = vsel %vm4068, %v5298, %v6178
        %v6299 = vsel %vm4068, %v5299, %v6180
        %v6300 = vsel %vm4068, %v5300, %v6182
        %v6301 = vsel %vm4068, %v5301, %v6184
        %v6302 = vsel %vm4068, %v5302, %v6186
        %v6303 = vsel %vm4068, %v5303, %v6188
        %v6304 = vsel %vm4068, %v5304, %v6190
        %v6305 = vsel %vm4068, %v5305, %v6192
        %v6306 = vsel %vm4068, %v5306, %v6194
        %v6307 = vsel %vm4068, %v5307, %v6196
        %v6308 = vsel %vm4068, %v5308, %v6198
        %v6309 = vsel %vm4068, %v5309, %v6200
        %v6310 = vsel %vm4068, %v5310, %v6202
        %v6311 = vsel %vm4068, %v5311, %v6204
        %v6312 = vsel %vm4068, %v5312, %v6206
        %v6313 = vsel %vm4068, %v5313, %v6208
        %v6314 = vsel %vm4068, %v5314, %v6210
        %v6315 = vsel %vm4068, %v5315, %v6212
        %v6316 = vsel %vm4068, %v5316, %v6214
        %v6317 = vsel %vm4068, %v5317, %v6216
        %v6318 = vsel %vm4068, %v5318, %v6218
        %v6319 = vsel %vm4068, %v5319, %v6220
        %v6320 = vsel %vm4068, %v5320, %v6222
        %v6321 = vsel %vm4068, %v5321, %v6224
        %v6322 = vsel %vm4068, %v5322, %v6226
        %6323 = vst [vmem:[%s325] sm:$0xff] %v6259
        %6324 = vst [vmem:[%s325 + $0x8] sm:$0xff] %v6291
        %6325 = vst [vmem:[%s325 + $0x10] sm:$0xff] %v6260
        %6326 = vst [vmem:[%s325 + $0x18] sm:$0xff] %v6292
        %6327 = vst [vmem:[%s325 + $0x20] sm:$0xff] %v6261
        %6328 = vst [vmem:[%s325 + $0x28] sm:$0xff] %v6293
        %6329 = vst [vmem:[%s325 + $0x30] sm:$0xff] %v6262
        %6330 = vst [vmem:[%s325 + $0x38] sm:$0xff] %v6294
        %6331 = vst [vmem:[%s325 + $0x40] sm:$0xff] %v6263
        %6332 = vst [vmem:[%s325 + $0x48] sm:$0xff] %v6295
        %6333 = vst [vmem:[%s325 + $0x50] sm:$0xff] %v6264
        %6334 = vst [vmem:[%s325 + $0x58] sm:$0xff] %v6296
        %6335 = vst [vmem:[%s325 + $0x60] sm:$0xff] %v6265
        %6336 = vst [vmem:[%s325 + $0x68] sm:$0xff] %v6297
        %6337 = vst [vmem:[%s325 + $0x70] sm:$0xff] %v6266
        %6338 = vst [vmem:[%s325 + $0x78] sm:$0xff] %v6298
        %6339 = vst [vmem:[%s325 + $0x80] sm:$0xff] %v6267
        %6340 = vst [vmem:[%s325 + $0x88] sm:$0xff] %v6299
        %6341 = vst [vmem:[%s325 + $0x90] sm:$0xff] %v6268
        %6342 = vst [vmem:[%s325 + $0x98] sm:$0xff] %v6300
        %6343 = vst [vmem:[%s325 + $0xa0] sm:$0xff] %v6269
        %6344 = vst [vmem:[%s325 + $0xa8] sm:$0xff] %v6301
        %6345 = vst [vmem:[%s325 + $0xb0] sm:$0xff] %v6270
        %6346 = vst [vmem:[%s325 + $0xb8] sm:$0xff] %v6302
        %6347 = vst [vmem:[%s325 + $0xc0] sm:$0xff] %v6271
        %6348 = vst [vmem:[%s325 + $0xc8] sm:$0xff] %v6303
        %6349 = vst [vmem:[%s325 + $0xd0] sm:$0xff] %v6272
        %6350 = vst [vmem:[%s325 + $0xd8] sm:$0xff] %v6304
        %6351 = vst [vmem:[%s325 + $0xe0] sm:$0xff] %v6273
        %6352 = vst [vmem:[%s325 + $0xe8] sm:$0xff] %v6305
        %6353 = vst [vmem:[%s325 + $0xf0] sm:$0xff] %v6274
        %6354 = vst [vmem:[%s325 + $0xf8] sm:$0xff] %v6306
        %6355 = vst [vmem:[%s325 + $0x100] sm:$0xff] %v6275
        %6356 = vst [vmem:[%s325 + $0x108] sm:$0xff] %v6307
        %6357 = vst [vmem:[%s325 + $0x110] sm:$0xff] %v6276
        %6358 = vst [vmem:[%s325 + $0x118] sm:$0xff] %v6308
        %6359 = vst [vmem:[%s325 + $0x120] sm:$0xff] %v6277
        %6360 = vst [vmem:[%s325 + $0x128] sm:$0xff] %v6309
        %6361 = vst [vmem:[%s325 + $0x130] sm:$0xff] %v6278
        %6362 = vst [vmem:[%s325 + $0x138] sm:$0xff] %v6310
        %6363 = vst [vmem:[%s325 + $0x140] sm:$0xff] %v6279
        %6364 = vst [vmem:[%s325 + $0x148] sm:$0xff] %v6311
        %6365 = vst [vmem:[%s325 + $0x150] sm:$0xff] %v6280
        %6366 = vst [vmem:[%s325 + $0x158] sm:$0xff] %v6312
        %6367 = vst [vmem:[%s325 + $0x160] sm:$0xff] %v6281
        %6368 = vst [vmem:[%s325 + $0x168] sm:$0xff] %v6313
        %6369 = vst [vmem:[%s325 + $0x170] sm:$0xff] %v6282
        %6370 = vst [vmem:[%s325 + $0x178] sm:$0xff] %v6314
        %6371 = vst [vmem:[%s325 + $0x180] sm:$0xff] %v6283
        %6372 = vst [vmem:[%s325 + $0x188] sm:$0xff] %v6315
        %6373 = vst [vmem:[%s325 + $0x190] sm:$0xff] %v6284
        %6374 = vst [vmem:[%s325 + $0x198] sm:$0xff] %v6316
        %6375 = vst [vmem:[%s325 + $0x1a0] sm:$0xff] %v6285
        %6376 = vst [vmem:[%s325 + $0x1a8] sm:$0xff] %v6317
        %6377 = vst [vmem:[%s325 + $0x1b0] sm:$0xff] %v6286
        %6378 = vst [vmem:[%s325 + $0x1b8] sm:$0xff] %v6318
        %6379 = vst [vmem:[%s325 + $0x1c0] sm:$0xff] %v6287
        %6380 = vst [vmem:[%s325 + $0x1c8] sm:$0xff] %v6319
        %6381 = vst [vmem:[%s325 + $0x1d0] sm:$0xff] %v6288
        %6382 = vst [vmem:[%s325 + $0x1d8] sm:$0xff] %v6320
        %6383 = vst [vmem:[%s325 + $0x1e0] sm:$0xff] %v6289
        %6384 = vst [vmem:[%s325 + $0x1e8] sm:$0xff] %v6321
        %6385 = vst [vmem:[%s325 + $0x1f0] sm:$0xff] %v6290
        %6386 = vst [vmem:[%s325 + $0x1f8] sm:$0xff] %v6322
        %s6387 = sand.u32 %s225, 1
        %s6388 = scalar_lea.sflag [#allocation3], %s6387
        %s6389 = sand.u32 %s225, 1
        %s6390 = smul.addr %s6389, 512
        %s6391 = scalar_lea.vmem [#allocation2], %s6390
        // Predicated region
        $region57: #{inception_aplus_forward.1} parent=55 // pred_check
          %p6392 = pneg %p235
        $region58: #{inception_aplus_forward.1} parent=55 // pred_check_branch
          %6394 = sbr.rel (%p6392) target = $region60
        $region59: #{inception_aplus_forward.1} parent=55 // pred_region
          %s6396 = ssub.s32 8192, 8192
          %6397 = vsyncadd %s6388, %s6396
          %s6398 = smul.addr %s23, 64
          %s6399 = smul.addr %s6398, 128
          %s6400 = scalar_lea.hbm %s9, %s6399
          %s6401 = sshll.u32 %s6391, 4
          %s6402 = int_to_ptr.vmem [resolvable:$true] %s6401
          %6407 = dma.vmem_to_hbm [thread:$0]  %s6402, 8192, %s6400, %s6388, 256, 256, 16
        $region60: #{inception_aplus_forward.1} parent=55 // pred_fallthru
          _
      $region56: #{inception_aplus_forward.1} parent=5 // pred_fallthru
        _
      %p6408 = scmp.le.s32.totalorder 2, %s18
      // Predicated region
      $region61: #{inception_aplus_forward.1} parent=5 // pred_check
        %p6409 = pneg %p6408
      $region62: #{inception_aplus_forward.1} parent=5 // pred_check_branch
        %6411 = sbr.rel (%p6409) target = $region64
      $region63: #{inception_aplus_forward.1} parent=5 // pred_region
        %s6412 = ssub.s32 %s18, 2
        // Predicated region
        $region65: #{inception_aplus_forward.1} parent=63 // pred_check
          %p6413 = pneg %p241
        $region66: #{inception_aplus_forward.1} parent=63 // pred_check_branch
          %6415 = sbr.rel (%p6413) target = $region68
        $region67: #{inception_aplus_forward.1} parent=63 // pred_region
          %s6416 = sand.u32 %s226, 1
          %s6417 = scalar_lea.sflag [#allocation3], %s6416
          %s6418 = sand.u32 %s226, 1
          %s6419 = smul.addr %s6418, 512
          %s6420 = scalar_lea.vmem [#allocation2], %s6419
          %6421 = dma.done %s6417, 8192
        $region68: #{inception_aplus_forward.1} parent=63 // pred_fallthru
          _
      $region64: #{inception_aplus_forward.1} parent=5 // pred_fallthru
        _
    $region6: #{inception_aplus_forward.1} parent=1 // loop_footer
      %s22 = sadd.s32 1, %s18
    $region7: #{inception_aplus_forward.1} parent=1 // loop_footer_branch
      %17 = sbr.rel target = $region3
    $region8: #{inception_aplus_forward.1} parent=1 // loop_exit
      _
    %6422 = vsyncpa [#allocation3], 1
    %s6423 = scalar_lea.sflag [#allocation3], 1
    %6424 = vsyncpa %s6423, 1

</llo_original>
